<compile_context>
chip_gen: v7x
topology: tpu7x:2x2x1
jax: 0.10.0
libtpu: 0.0.40
codegen_flags: <defaults>
</compile_context>

<pallas_src>
import math

import numpy as np
import jax
import jax.numpy as jnp
from jax.experimental import pallas as pl
from jax.experimental.pallas import tpu as pltpu

# ----------------------------- small config ---------------------------------
B, Hs, Ws, C = 2, 8, 8, 32          # batch, spatial H, spatial W, dim
N = Hs * Ws                         # number of tokens
NUM_HEADS = 4
HEAD_DIM = C // NUM_HEADS
M = 8                               # num clusters
HM = NUM_HEADS * M                  # packed-head score width
K = 7                               # depthwise conv kernel size
PAD = (K - 1) // 2
LN_EPS = 1e-5


# ----------------------------- math helpers ---------------------------------
def _erf(x):
    # TODO(synk): lax.erf lowering inside Mosaic is not guaranteed; use the
    # Abramowitz&Stegun 7.1.26 rational approximation (max abs err ~1.5e-7),
    # built only from exp/abs/where which are Mosaic-safe.
    a1, a2, a3, a4, a5 = (0.254829592, -0.284496736, 1.421413741,
                          -1.453152027, 1.061405429)
    p = 0.3275911
    s = jnp.where(x >= 0.0, 1.0, -1.0)
    ax = jnp.abs(x)
    t = 1.0 / (1.0 + p * ax)
    poly = t * (a1 + t * (a2 + t * (a3 + t * (a4 + t * a5))))
    return s * (1.0 - poly * jnp.exp(-ax * ax))


def _gelu_exact(x):
    # matches torch.nn.GELU() (exact erf form)
    return 0.5 * x * (1.0 + _erf(x * (1.0 / math.sqrt(2.0))))


# ----------------------------- fused Pallas kernel ---------------------------
def _paca_fused_kernel(
    taps_ref, x_ref,                                  # per-batch data
    wmap_ref, dwb_ref,                                # depthwise conv (pre-broadcast)
    w1_ref, b1_ref, w2_ref,                           # 1x1 convs of the P2C head
    pos_ref, lng_ref, lnb_ref,                        # cluster pos-embed + LayerNorm
    wq_ref, bq_ref, wk_ref, bk_ref, wv_ref, bv_ref,   # attention projections
    wo_ref, bo_ref,
    rep_ref, vmask_ref, seg_ref,                      # head-packing constants
    out_ref, z_ref):
    """Whole PaCaLayer forward for one batch element; everything stays in VMEM."""
    x = x_ref[...]                                                # (N, C) tokens

    # hoist small shared tensors once (broadcast_in_dim is not CSE'd by JAX)
    dwb = dwb_ref[...]
    b1 = b1_ref[...]
    pos = pos_ref[...]
    lng = lng_ref[...]
    lnb = lnb_ref[...]
    bq = bq_ref[...]
    bk = bk_ref[...]
    bv = bv_ref[...]
    bo = bo_ref[...]
    rep = rep_ref[...]
    vmask = vmask_ref[...]
    seg = seg_ref[...]

    # ---- depthwise 7x7 conv + bias + exact GELU (49 aligned tap FMAs) -------
    acc = taps_ref[0] * wmap_ref[0]
    for t in range(1, K * K):
        acc = acc + taps_ref[t] * wmap_ref[t]                     # (N, C) VPU FMAs
    y = _gelu_exact(acc + dwb)

    # ---- 1x1 conv + GELU -----------------------------------------------------
    h = _gelu_exact(
        jnp.dot(y, w1_ref[...], preferred_element_type=jnp.float32) + b1
    )                                                             # (N, C)

    # ---- clustering scores + softmax over N ----------------------------------
    # s[m, n] = sum_c w2[m, c] * h[n, c]   (conv 1x1, no bias)
    s = jax.lax.dot_general(w2_ref[...], h, (((1,), (1,)), ((), ())),
                            preferred_element_type=jnp.float32)   # (M, N)
    s = s - jnp.max(s, axis=-1, keepdims=True)
    e = jnp.exp(s)
    # exact divide here: z is an exported output and feeds the whole downstream path
    z = e / jnp.sum(e, axis=-1, keepdims=True)                    # softmax over N
    z_ref[...] = z

    # ---- cluster features + pos embed + LayerNorm -----------------------------
    c = jnp.dot(z, x, preferred_element_type=jnp.float32) + pos   # (M, C)
    mu = jnp.mean(c, axis=-1, keepdims=True)
    d = c - mu
    var = jnp.mean(d * d, axis=-1, keepdims=True)
    c = d * jax.lax.rsqrt(var + LN_EPS) * lng + lnb

    # ---- patch-to-cluster multi-head attention (heads packed, no head loop) ---
    q = (jnp.dot(x, wq_ref[...], preferred_element_type=jnp.float32) + bq) \
        * (1.0 / math.sqrt(HEAD_DIM))                             # (N, C)
    k = jnp.dot(c, wk_ref[...], preferred_element_type=jnp.float32) + bk   # (M, C)
    v = jnp.dot(c, wv_ref[...], preferred_element_type=jnp.float32) + bv   # (M, C)

    # block-diagonal packed rows: k_rows[h*M+m, c] = k[m, c] * [c // HEAD_DIM == h]
    k_rows = jnp.dot(rep, k, preferred_element_type=jnp.float32) * vmask   # (HM, C)
    v_rows = jnp.dot(rep, v, preferred_element_type=jnp.float32) * vmask   # (HM, C)

    # s_all[n, h*M+m] = q_h[n] . k_h[m]  — one full-width MXU op
    s_all = jax.lax.dot_general(q, k_rows, (((1,), (1,)), ((), ())),
                                preferred_element_type=jnp.float32)        # (N, HM)
    # subtracting the per-row global max is valid per head (same constant per head)
    s_all = s_all - jnp.max(s_all, axis=-1, keepdims=True)
    p = jnp.exp(s_all)
    # segmented per-head sums via one matmul with the block-diagonal ones matrix
    denom = jnp.dot(p, seg, preferred_element_type=jnp.float32)            # (N, HM)
    p = p * pl.reciprocal(denom, approx=True)                              # per-head softmax
    o = jnp.dot(p, v_rows, preferred_element_type=jnp.float32)             # (N, C), heads in blocks
    # TODO(synk): per-head attention weights (need_weights) and dropout (p=0.0)
    # are discarded / no-ops in the torch module; not materialized here.
    out_ref[...] = jnp.dot(o, wo_ref[...],
                           preferred_element_type=jnp.float32) + bo


# ----------------------------- BlockSpec helpers ----------------------------
def _batch_spec(shape):
    zeros = (0,) * len(shape)
    return pl.BlockSpec((None,) + tuple(shape), lambda b: (b,) + zeros)


def _shared_spec(shape):
    zeros = (0,) * len(shape)
    return pl.BlockSpec(tuple(shape), lambda b: zeros)


_CPARAMS = pltpu.CompilerParams(dimension_semantics=("parallel",))


# ----------------------------- wrapper ---------------------------------------
def paca_layer_forward(x, params):
    """x: (B, N, C) float32 tokens. Returns (out (B,N,C), z (B,M,N))."""
    Bb, Nn, Cc = x.shape

    # im2col glue (review option (b)): pre-stack the 49 zero-padded shifted taps
    # so the kernel only does aligned full-tile reads. Cheap XLA at this size.
    x_img = x.reshape(Bb, Hs, Ws, Cc)
    x_pad = jnp.pad(x_img, ((0, 0), (PAD, PAD), (PAD, PAD), (0, 0)))
    taps = jnp.stack(
        [x_pad[:, kh:kh + Hs, kw:kw + Ws, :].reshape(Bb, Nn, Cc)
         for kh in range(K) for kw in range(K)], axis=1)                   # (B, 49, N, C)

    # pre-broadcast per-tap channel weights -> (49, N, C) so no in-kernel broadcasts
    wmap = jnp.broadcast_to(params["dw_w"].reshape(K * K, 1, Cc), (K * K, Nn, Cc))
    dwb = params["dw_b"].reshape(1, Cc)

    # attention head-packing constants (constant-folded by XLA)
    j_idx = jnp.arange(HM)
    rep = (j_idx[:, None] % M == jnp.arange(M)[None, :]).astype(jnp.float32)        # (HM, M)
    vmask = ((j_idx[:, None] // M)
             == (jnp.arange(Cc)[None, :] // HEAD_DIM)).astype(jnp.float32)          # (HM, C)
    seg = ((j_idx[:, None] // M) == (j_idx[None, :] // M)).astype(jnp.float32)      # (HM, HM)

    out, z = pl.pallas_call(
        _paca_fused_kernel,
        out_shape=(jax.ShapeDtypeStruct((Bb, Nn, Cc), jnp.float32),
                   jax.ShapeDtypeStruct((Bb, M, Nn), jnp.float32)),
        grid=(Bb,),
        in_specs=[
            _batch_spec((K * K, Nn, Cc)),      # taps        (per batch)
            _batch_spec((Nn, Cc)),             # x tokens    (per batch)
            _shared_spec((K * K, Nn, Cc)),     # wmap
            _shared_spec((1, Cc)),             # dw bias
            _shared_spec((Cc, Cc)),            # w1_t
            _shared_spec((1, Cc)),             # b1
            _shared_spec((M, Cc)),             # w2
            _shared_spec((M, Cc)),             # pos
            _shared_spec((1, Cc)),             # ln_g
            _shared_spec((1, Cc)),             # ln_b
            _shared_spec((Cc, Cc)), _shared_spec((1, Cc)),   # wq_t, bq
            _shared_spec((Cc, Cc)), _shared_spec((1, Cc)),   # wk_t, bk
            _shared_spec((Cc, Cc)), _shared_spec((1, Cc)),   # wv_t, bv
            _shared_spec((Cc, Cc)), _shared_spec((1, Cc)),   # wo_t, bo
            _shared_spec((HM, M)),             # rep
            _shared_spec((HM, Cc)),            # vmask
            _shared_spec((HM, HM)),            # seg
        ],
        out_specs=(_batch_spec((Nn, Cc)), _batch_spec((M, Nn))),
        compiler_params=_CPARAMS,
    )(taps, x, wmap, dwb,
      params["w1_t"], params["b1"], params["w2"],
      params["pos"], params["ln_g"], params["ln_b"],
      params["wq_t"], params["bq"], params["wk_t"], params["bk"],
      params["wv_t"], params["bv"], params["wo_t"], params["bo"],
      rep, vmask, seg)

    return out, z


# ----------------------------- params / reference ---------------------------
def init_params(key):
    ks = jax.random.split(key, 16)

    def nrm(k, shape, scale):
        return scale * jax.random.normal(k, shape, dtype=jnp.float32)

    return {
        # depthwise conv: torch weight (C,1,K,K) stored as (K,K,C): dw_w[kh,kw,c]
        "dw_w": nrm(ks[0], (K, K, C), 0.05),
        "dw_b": nrm(ks[1], (1, 1, C), 0.05),
        # conv1x1 #1: torch (C,C,1,1) -> stored transposed (Cin,Cout)
        "w1_t": nrm(ks[2], (C, C), 0.05),
        "b1":   nrm(ks[3], (1, C), 0.05),
        # conv1x1 #2 (no bias): torch (M,C,1,1) -> stored (M,C)
        "w2":   nrm(ks[4], (M, C), 0.05),
        # cluster pos embedding (1,M,C) -> stored (M,C); trunc_normal std=0.02 ~ normal
        "pos":  nrm(ks[5], (M, C), 0.02),
        # cluster LayerNorm
        "ln_g": jnp.ones((1, C), jnp.float32),
        "ln_b": jnp.zeros((1, C), jnp.float32),
        # q/k/v/out linear layers: torch weight (C,C) stored transposed
        "wq_t": nrm(ks[6], (C, C), 0.05), "bq": nrm(ks[7], (1, C), 0.05),
        "wk_t": nrm(ks[8], (C, C), 0.05), "bk": nrm(ks[9], (1, C), 0.05),
        "wv_t": nrm(ks[10], (C, C), 0.05), "bv": nrm(ks[11], (1, C), 0.05),
        "wo_t": nrm(ks[12], (C, C), 0.05), "bo": nrm(ks[13], (1, C), 0.05),
    }


def reference_forward(x, p):
    """Pure-JAX re-implementation of PaCaLayer.forward (eval mode) for checking."""
    Bb, Nn, Cc = x.shape
    x_img = x.reshape(Bb, Hs, Ws, Cc)
    xp = jnp.pad(x_img, ((0, 0), (PAD, PAD), (PAD, PAD), (0, 0)))
    acc = jnp.zeros((Bb, Hs, Ws, Cc), jnp.float32)
    for kh in range(K):
        for kw in range(K):
            acc = acc + xp[:, kh:kh + Hs, kw:kw + Ws, :] * p["dw_w"][kh, kw]
    acc = acc + p["dw_b"]
    y = jax.nn.gelu(acc, approximate=False).reshape(Bb, Nn, Cc)
    h = jax.nn.gelu(jnp.einsum('bnc,cd->bnd', y, p["w1_t"]) + p["b1"],
                    approximate=False)
    s = jnp.einsum('bnc,mc->bmn', h, p["w2"])
    z = jax.nn.softmax(s, axis=-1)
    c = jnp.einsum('bmn,bnc->bmc', z, x) + p["pos"]
    mu = c.mean(-1, keepdims=True)
    var = ((c - mu) ** 2).mean(-1, keepdims=True)
    c = (c - mu) / jnp.sqrt(var + LN_EPS) * p["ln_g"] + p["ln_b"]

    q = (jnp.einsum('bnc,cd->bnd', x, p["wq_t"]) + p["bq"]) * (HEAD_DIM ** -0.5)
    k = jnp.einsum('bmc,cd->bmd', c, p["wk_t"]) + p["bk"]
    v = jnp.einsum('bmc,cd->bmd', c, p["wv_t"]) + p["bv"]
    qh = q.reshape(Bb, Nn, NUM_HEADS, HEAD_DIM)
    kh = k.reshape(Bb, M, NUM_HEADS, HEAD_DIM)
    vh = v.reshape(Bb, M, NUM_HEADS, HEAD_DIM)
    att = jax.nn.softmax(jnp.einsum('bnhd,bmhd->bhnm', qh, kh), axis=-1)
    o = jnp.einsum('bhnm,bmhd->bnhd', att, vh).reshape(Bb, Nn, Cc)
    o = jnp.einsum('bnc,cd->bnd', o, p["wo_t"]) + p["bo"]
    return o, z


# ----------------------------- main ------------------------------------------
if __name__ == "__main__":
    key = jax.random.PRNGKey(0)
    kx, kp = jax.random.split(key)
    x = jax.random.normal(kx, (B, N, C), dtype=jnp.float32)
    params = init_params(kp)

    out, z = jax.jit(paca_layer_forward)(x, params)
    jax.block_until_ready((out, z))

    assert out.shape == (B, N, C) and z.shape == (B, M, N)

    ref_out, ref_z = reference_forward(x, params)
    np.testing.assert_allclose(np.asarray(z), np.asarray(ref_z),
                               rtol=2e-3, atol=2e-3)
    np.testing.assert_allclose(np.asarray(out), np.asarray(ref_out),
                               rtol=2e-3, atol=2e-3)

    print("KERNEL_OK")
</pallas_src>

<mosaic_0001>
module attributes {stable_mosaic.version = 11 : i64} {
  func.func @_paca_fused_kernel(%arg0: i32, %arg1: memref<1x49x64x32xf32, #tpu.memory_space<vmem>>, %arg2: memref<1x64x32xf32, #tpu.memory_space<vmem>>, %arg3: memref<49x64x32xf32, #tpu.memory_space<vmem>>, %arg4: memref<1x32xf32, #tpu.memory_space<vmem>>, %arg5: memref<32x32xf32, #tpu.memory_space<vmem>>, %arg6: memref<1x32xf32, #tpu.memory_space<vmem>>, %arg7: memref<8x32xf32, #tpu.memory_space<vmem>>, %arg8: memref<8x32xf32, #tpu.memory_space<vmem>>, %arg9: memref<1x32xf32, #tpu.memory_space<vmem>>, %arg10: memref<1x32xf32, #tpu.memory_space<vmem>>, %arg11: memref<32x32xf32, #tpu.memory_space<vmem>>, %arg12: memref<1x32xf32, #tpu.memory_space<vmem>>, %arg13: memref<32x32xf32, #tpu.memory_space<vmem>>, %arg14: memref<1x32xf32, #tpu.memory_space<vmem>>, %arg15: memref<32x32xf32, #tpu.memory_space<vmem>>, %arg16: memref<1x32xf32, #tpu.memory_space<vmem>>, %arg17: memref<32x32xf32, #tpu.memory_space<vmem>>, %arg18: memref<1x32xf32, #tpu.memory_space<vmem>>, %arg19: memref<32x8xf32, #tpu.memory_space<vmem>>, %arg20: memref<32x32xf32, #tpu.memory_space<vmem>>, %arg21: memref<32x32xf32, #tpu.memory_space<vmem>>, %arg22: memref<1x64x32xf32, #tpu.memory_space<vmem>>, %arg23: memref<1x8x64xf32, #tpu.memory_space<vmem>>) attributes {dimension_semantics = [#tpu.dimension_semantics<parallel>], iteration_bounds = array<i64: 2>, scalar_prefetch = 0 : i64, scratch_operands = 0 : i64, tpu.core_type = #tpu.core_type<tc>, window_params = [{transform_indices = @transform_0, window_bounds = array<i64: 1, 49, 64, 32>}, {transform_indices = @transform_1, window_bounds = array<i64: 1, 64, 32>}, {pipeline_mode = #tpu.pipeline_mode<synchronous>, transform_indices = @transform_2, window_bounds = array<i64: 49, 64, 32>}, {pipeline_mode = #tpu.pipeline_mode<synchronous>, transform_indices = @transform_3, window_bounds = array<i64: 1, 32>}, {pipeline_mode = #tpu.pipeline_mode<synchronous>, transform_indices = @transform_4, window_bounds = array<i64: 32, 32>}, {pipeline_mode = #tpu.pipeline_mode<synchronous>, transform_indices = @transform_5, window_bounds = array<i64: 1, 32>}, {pipeline_mode = #tpu.pipeline_mode<synchronous>, transform_indices = @transform_6, window_bounds = array<i64: 8, 32>}, {pipeline_mode = #tpu.pipeline_mode<synchronous>, transform_indices = @transform_7, window_bounds = array<i64: 8, 32>}, {pipeline_mode = #tpu.pipeline_mode<synchronous>, transform_indices = @transform_8, window_bounds = array<i64: 1, 32>}, {pipeline_mode = #tpu.pipeline_mode<synchronous>, transform_indices = @transform_9, window_bounds = array<i64: 1, 32>}, {pipeline_mode = #tpu.pipeline_mode<synchronous>, transform_indices = @transform_10, window_bounds = array<i64: 32, 32>}, {pipeline_mode = #tpu.pipeline_mode<synchronous>, transform_indices = @transform_11, window_bounds = array<i64: 1, 32>}, {pipeline_mode = #tpu.pipeline_mode<synchronous>, transform_indices = @transform_12, window_bounds = array<i64: 32, 32>}, {pipeline_mode = #tpu.pipeline_mode<synchronous>, transform_indices = @transform_13, window_bounds = array<i64: 1, 32>}, {pipeline_mode = #tpu.pipeline_mode<synchronous>, transform_indices = @transform_14, window_bounds = array<i64: 32, 32>}, {pipeline_mode = #tpu.pipeline_mode<synchronous>, transform_indices = @transform_15, window_bounds = array<i64: 1, 32>}, {pipeline_mode = #tpu.pipeline_mode<synchronous>, transform_indices = @transform_16, window_bounds = array<i64: 32, 32>}, {pipeline_mode = #tpu.pipeline_mode<synchronous>, transform_indices = @transform_17, window_bounds = array<i64: 1, 32>}, {pipeline_mode = #tpu.pipeline_mode<synchronous>, transform_indices = @transform_18, window_bounds = array<i64: 32, 8>}, {pipeline_mode = #tpu.pipeline_mode<synchronous>, transform_indices = @transform_19, window_bounds = array<i64: 32, 32>}, {pipeline_mode = #tpu.pipeline_mode<synchronous>, transform_indices = @transform_20, window_bounds = array<i64: 32, 32>}, {transform_indices = @transform_21, window_bounds = array<i64: 1, 64, 32>}, {transform_indices = @transform_22, window_bounds = array<i64: 1, 8, 64>}]} {
    %c0 = arith.constant 0 : index
    %c0_0 = arith.constant 0 : index
    %c0_1 = arith.constant 0 : index
    %0 = vector.load %arg2[%c0, %c0_0, %c0_1] : memref<1x64x32xf32, #tpu.memory_space<vmem>>, vector<1x64x32xf32>
    %1 = vector.shape_cast %0 : vector<1x64x32xf32> to vector<64x32xf32>
    %c0_2 = arith.constant 0 : index
    %c0_3 = arith.constant 0 : index
    %2 = vector.load %arg4[%c0_2, %c0_3] : memref<1x32xf32, #tpu.memory_space<vmem>>, vector<1x32xf32>
    %c0_4 = arith.constant 0 : index
    %c0_5 = arith.constant 0 : index
    %3 = vector.load %arg6[%c0_4, %c0_5] : memref<1x32xf32, #tpu.memory_space<vmem>>, vector<1x32xf32>
    %c0_6 = arith.constant 0 : index
    %c0_7 = arith.constant 0 : index
    %4 = vector.load %arg8[%c0_6, %c0_7] : memref<8x32xf32, #tpu.memory_space<vmem>>, vector<8x32xf32>
    %c0_8 = arith.constant 0 : index
    %c0_9 = arith.constant 0 : index
    %5 = vector.load %arg9[%c0_8, %c0_9] : memref<1x32xf32, #tpu.memory_space<vmem>>, vector<1x32xf32>
    %c0_10 = arith.constant 0 : index
    %c0_11 = arith.constant 0 : index
    %6 = vector.load %arg10[%c0_10, %c0_11] : memref<1x32xf32, #tpu.memory_space<vmem>>, vector<1x32xf32>
    %c0_12 = arith.constant 0 : index
    %c0_13 = arith.constant 0 : index
    %7 = vector.load %arg12[%c0_12, %c0_13] : memref<1x32xf32, #tpu.memory_space<vmem>>, vector<1x32xf32>
    %c0_14 = arith.constant 0 : index
    %c0_15 = arith.constant 0 : index
    %8 = vector.load %arg14[%c0_14, %c0_15] : memref<1x32xf32, #tpu.memory_space<vmem>>, vector<1x32xf32>
    %c0_16 = arith.constant 0 : index
    %c0_17 = arith.constant 0 : index
    %9 = vector.load %arg16[%c0_16, %c0_17] : memref<1x32xf32, #tpu.memory_space<vmem>>, vector<1x32xf32>
    %c0_18 = arith.constant 0 : index
    %c0_19 = arith.constant 0 : index
    %10 = vector.load %arg18[%c0_18, %c0_19] : memref<1x32xf32, #tpu.memory_space<vmem>>, vector<1x32xf32>
    %c0_20 = arith.constant 0 : index
    %c0_21 = arith.constant 0 : index
    %11 = vector.load %arg19[%c0_20, %c0_21] : memref<32x8xf32, #tpu.memory_space<vmem>>, vector<32x8xf32>
    %c0_22 = arith.constant 0 : index
    %c0_23 = arith.constant 0 : index
    %12 = vector.load %arg20[%c0_22, %c0_23] : memref<32x32xf32, #tpu.memory_space<vmem>>, vector<32x32xf32>
    %c0_24 = arith.constant 0 : index
    %c0_25 = arith.constant 0 : index
    %13 = vector.load %arg21[%c0_24, %c0_25] : memref<32x32xf32, #tpu.memory_space<vmem>>, vector<32x32xf32>
    %c0_26 = arith.constant 0 : index
    %c0_27 = arith.constant 0 : index
    %c0_28 = arith.constant 0 : index
    %c0_29 = arith.constant 0 : index
    %14 = vector.load %arg1[%c0_26, %c0_27, %c0_28, %c0_29] : memref<1x49x64x32xf32, #tpu.memory_space<vmem>>, vector<1x1x64x32xf32>
    %15 = vector.shape_cast %14 : vector<1x1x64x32xf32> to vector<64x32xf32>
    %c0_30 = arith.constant 0 : index
    %c0_31 = arith.constant 0 : index
    %c0_32 = arith.constant 0 : index
    %16 = vector.load %arg3[%c0_30, %c0_31, %c0_32] : memref<49x64x32xf32, #tpu.memory_space<vmem>>, vector<1x64x32xf32>
    %17 = vector.shape_cast %16 : vector<1x64x32xf32> to vector<64x32xf32>
    %18 = arith.mulf %15, %17 : vector<64x32xf32>
    %c0_33 = arith.constant 0 : index
    %c1 = arith.constant 1 : index
    %c0_34 = arith.constant 0 : index
    %c0_35 = arith.constant 0 : index
    %19 = vector.load %arg1[%c0_33, %c1, %c0_34, %c0_35] : memref<1x49x64x32xf32, #tpu.memory_space<vmem>>, vector<1x1x64x32xf32>
    %20 = vector.shape_cast %19 : vector<1x1x64x32xf32> to vector<64x32xf32>
    %c1_36 = arith.constant 1 : index
    %c0_37 = arith.constant 0 : index
    %c0_38 = arith.constant 0 : index
    %21 = vector.load %arg3[%c1_36, %c0_37, %c0_38] : memref<49x64x32xf32, #tpu.memory_space<vmem>>, vector<1x64x32xf32>
    %22 = vector.shape_cast %21 : vector<1x64x32xf32> to vector<64x32xf32>
    %23 = arith.mulf %20, %22 : vector<64x32xf32>
    %24 = arith.addf %18, %23 : vector<64x32xf32>
    %c0_39 = arith.constant 0 : index
    %c2 = arith.constant 2 : index
    %c0_40 = arith.constant 0 : index
    %c0_41 = arith.constant 0 : index
    %25 = vector.load %arg1[%c0_39, %c2, %c0_40, %c0_41] : memref<1x49x64x32xf32, #tpu.memory_space<vmem>>, vector<1x1x64x32xf32>
    %26 = vector.shape_cast %25 : vector<1x1x64x32xf32> to vector<64x32xf32>
    %c2_42 = arith.constant 2 : index
    %c0_43 = arith.constant 0 : index
    %c0_44 = arith.constant 0 : index
    %27 = vector.load %arg3[%c2_42, %c0_43, %c0_44] : memref<49x64x32xf32, #tpu.memory_space<vmem>>, vector<1x64x32xf32>
    %28 = vector.shape_cast %27 : vector<1x64x32xf32> to vector<64x32xf32>
    %29 = arith.mulf %26, %28 : vector<64x32xf32>
    %30 = arith.addf %24, %29 : vector<64x32xf32>
    %c0_45 = arith.constant 0 : index
    %c3 = arith.constant 3 : index
    %c0_46 = arith.constant 0 : index
    %c0_47 = arith.constant 0 : index
    %31 = vector.load %arg1[%c0_45, %c3, %c0_46, %c0_47] : memref<1x49x64x32xf32, #tpu.memory_space<vmem>>, vector<1x1x64x32xf32>
    %32 = vector.shape_cast %31 : vector<1x1x64x32xf32> to vector<64x32xf32>
    %c3_48 = arith.constant 3 : index
    %c0_49 = arith.constant 0 : index
    %c0_50 = arith.constant 0 : index
    %33 = vector.load %arg3[%c3_48, %c0_49, %c0_50] : memref<49x64x32xf32, #tpu.memory_space<vmem>>, vector<1x64x32xf32>
    %34 = vector.shape_cast %33 : vector<1x64x32xf32> to vector<64x32xf32>
    %35 = arith.mulf %32, %34 : vector<64x32xf32>
    %36 = arith.addf %30, %35 : vector<64x32xf32>
    %c0_51 = arith.constant 0 : index
    %c4 = arith.constant 4 : index
    %c0_52 = arith.constant 0 : index
    %c0_53 = arith.constant 0 : index
    %37 = vector.load %arg1[%c0_51, %c4, %c0_52, %c0_53] : memref<1x49x64x32xf32, #tpu.memory_space<vmem>>, vector<1x1x64x32xf32>
    %38 = vector.shape_cast %37 : vector<1x1x64x32xf32> to vector<64x32xf32>
    %c4_54 = arith.constant 4 : index
    %c0_55 = arith.constant 0 : index
    %c0_56 = arith.constant 0 : index
    %39 = vector.load %arg3[%c4_54, %c0_55, %c0_56] : memref<49x64x32xf32, #tpu.memory_space<vmem>>, vector<1x64x32xf32>
    %40 = vector.shape_cast %39 : vector<1x64x32xf32> to vector<64x32xf32>
    %41 = arith.mulf %38, %40 : vector<64x32xf32>
    %42 = arith.addf %36, %41 : vector<64x32xf32>
    %c0_57 = arith.constant 0 : index
    %c5 = arith.constant 5 : index
    %c0_58 = arith.constant 0 : index
    %c0_59 = arith.constant 0 : index
    %43 = vector.load %arg1[%c0_57, %c5, %c0_58, %c0_59] : memref<1x49x64x32xf32, #tpu.memory_space<vmem>>, vector<1x1x64x32xf32>
    %44 = vector.shape_cast %43 : vector<1x1x64x32xf32> to vector<64x32xf32>
    %c5_60 = arith.constant 5 : index
    %c0_61 = arith.constant 0 : index
    %c0_62 = arith.constant 0 : index
    %45 = vector.load %arg3[%c5_60, %c0_61, %c0_62] : memref<49x64x32xf32, #tpu.memory_space<vmem>>, vector<1x64x32xf32>
    %46 = vector.shape_cast %45 : vector<1x64x32xf32> to vector<64x32xf32>
    %47 = arith.mulf %44, %46 : vector<64x32xf32>
    %48 = arith.addf %42, %47 : vector<64x32xf32>
    %c0_63 = arith.constant 0 : index
    %c6 = arith.constant 6 : index
    %c0_64 = arith.constant 0 : index
    %c0_65 = arith.constant 0 : index
    %49 = vector.load %arg1[%c0_63, %c6, %c0_64, %c0_65] : memref<1x49x64x32xf32, #tpu.memory_space<vmem>>, vector<1x1x64x32xf32>
    %50 = vector.shape_cast %49 : vector<1x1x64x32xf32> to vector<64x32xf32>
    %c6_66 = arith.constant 6 : index
    %c0_67 = arith.constant 0 : index
    %c0_68 = arith.constant 0 : index
    %51 = vector.load %arg3[%c6_66, %c0_67, %c0_68] : memref<49x64x32xf32, #tpu.memory_space<vmem>>, vector<1x64x32xf32>
    %52 = vector.shape_cast %51 : vector<1x64x32xf32> to vector<64x32xf32>
    %53 = arith.mulf %50, %52 : vector<64x32xf32>
    %54 = arith.addf %48, %53 : vector<64x32xf32>
    %c0_69 = arith.constant 0 : index
    %c7 = arith.constant 7 : index
    %c0_70 = arith.constant 0 : index
    %c0_71 = arith.constant 0 : index
    %55 = vector.load %arg1[%c0_69, %c7, %c0_70, %c0_71] : memref<1x49x64x32xf32, #tpu.memory_space<vmem>>, vector<1x1x64x32xf32>
    %56 = vector.shape_cast %55 : vector<1x1x64x32xf32> to vector<64x32xf32>
    %c7_72 = arith.constant 7 : index
    %c0_73 = arith.constant 0 : index
    %c0_74 = arith.constant 0 : index
    %57 = vector.load %arg3[%c7_72, %c0_73, %c0_74] : memref<49x64x32xf32, #tpu.memory_space<vmem>>, vector<1x64x32xf32>
    %58 = vector.shape_cast %57 : vector<1x64x32xf32> to vector<64x32xf32>
    %59 = arith.mulf %56, %58 : vector<64x32xf32>
    %60 = arith.addf %54, %59 : vector<64x32xf32>
    %c0_75 = arith.constant 0 : index
    %c8 = arith.constant 8 : index
    %c0_76 = arith.constant 0 : index
    %c0_77 = arith.constant 0 : index
    %61 = vector.load %arg1[%c0_75, %c8, %c0_76, %c0_77] : memref<1x49x64x32xf32, #tpu.memory_space<vmem>>, vector<1x1x64x32xf32>
    %62 = vector.shape_cast %61 : vector<1x1x64x32xf32> to vector<64x32xf32>
    %c8_78 = arith.constant 8 : index
    %c0_79 = arith.constant 0 : index
    %c0_80 = arith.constant 0 : index
    %63 = vector.load %arg3[%c8_78, %c0_79, %c0_80] : memref<49x64x32xf32, #tpu.memory_space<vmem>>, vector<1x64x32xf32>
    %64 = vector.shape_cast %63 : vector<1x64x32xf32> to vector<64x32xf32>
    %65 = arith.mulf %62, %64 : vector<64x32xf32>
    %66 = arith.addf %60, %65 : vector<64x32xf32>
    %c0_81 = arith.constant 0 : index
    %c9 = arith.constant 9 : index
    %c0_82 = arith.constant 0 : index
    %c0_83 = arith.constant 0 : index
    %67 = vector.load %arg1[%c0_81, %c9, %c0_82, %c0_83] : memref<1x49x64x32xf32, #tpu.memory_space<vmem>>, vector<1x1x64x32xf32>
    %68 = vector.shape_cast %67 : vector<1x1x64x32xf32> to vector<64x32xf32>
    %c9_84 = arith.constant 9 : index
    %c0_85 = arith.constant 0 : index
    %c0_86 = arith.constant 0 : index
    %69 = vector.load %arg3[%c9_84, %c0_85, %c0_86] : memref<49x64x32xf32, #tpu.memory_space<vmem>>, vector<1x64x32xf32>
    %70 = vector.shape_cast %69 : vector<1x64x32xf32> to vector<64x32xf32>
    %71 = arith.mulf %68, %70 : vector<64x32xf32>
    %72 = arith.addf %66, %71 : vector<64x32xf32>
    %c0_87 = arith.constant 0 : index
    %c10 = arith.constant 10 : index
    %c0_88 = arith.constant 0 : index
    %c0_89 = arith.constant 0 : index
    %73 = vector.load %arg1[%c0_87, %c10, %c0_88, %c0_89] : memref<1x49x64x32xf32, #tpu.memory_space<vmem>>, vector<1x1x64x32xf32>
    %74 = vector.shape_cast %73 : vector<1x1x64x32xf32> to vector<64x32xf32>
    %c10_90 = arith.constant 10 : index
    %c0_91 = arith.constant 0 : index
    %c0_92 = arith.constant 0 : index
    %75 = vector.load %arg3[%c10_90, %c0_91, %c0_92] : memref<49x64x32xf32, #tpu.memory_space<vmem>>, vector<1x64x32xf32>
    %76 = vector.shape_cast %75 : vector<1x64x32xf32> to vector<64x32xf32>
    %77 = arith.mulf %74, %76 : vector<64x32xf32>
    %78 = arith.addf %72, %77 : vector<64x32xf32>
    %c0_93 = arith.constant 0 : index
    %c11 = arith.constant 11 : index
    %c0_94 = arith.constant 0 : index
    %c0_95 = arith.constant 0 : index
    %79 = vector.load %arg1[%c0_93, %c11, %c0_94, %c0_95] : memref<1x49x64x32xf32, #tpu.memory_space<vmem>>, vector<1x1x64x32xf32>
    %80 = vector.shape_cast %79 : vector<1x1x64x32xf32> to vector<64x32xf32>
    %c11_96 = arith.constant 11 : index
    %c0_97 = arith.constant 0 : index
    %c0_98 = arith.constant 0 : index
    %81 = vector.load %arg3[%c11_96, %c0_97, %c0_98] : memref<49x64x32xf32, #tpu.memory_space<vmem>>, vector<1x64x32xf32>
    %82 = vector.shape_cast %81 : vector<1x64x32xf32> to vector<64x32xf32>
    %83 = arith.mulf %80, %82 : vector<64x32xf32>
    %84 = arith.addf %78, %83 : vector<64x32xf32>
    %c0_99 = arith.constant 0 : index
    %c12 = arith.constant 12 : index
    %c0_100 = arith.constant 0 : index
    %c0_101 = arith.constant 0 : index
    %85 = vector.load %arg1[%c0_99, %c12, %c0_100, %c0_101] : memref<1x49x64x32xf32, #tpu.memory_space<vmem>>, vector<1x1x64x32xf32>
    %86 = vector.shape_cast %85 : vector<1x1x64x32xf32> to vector<64x32xf32>
    %c12_102 = arith.constant 12 : index
    %c0_103 = arith.constant 0 : index
    %c0_104 = arith.constant 0 : index
    %87 = vector.load %arg3[%c12_102, %c0_103, %c0_104] : memref<49x64x32xf32, #tpu.memory_space<vmem>>, vector<1x64x32xf32>
    %88 = vector.shape_cast %87 : vector<1x64x32xf32> to vector<64x32xf32>
    %89 = arith.mulf %86, %88 : vector<64x32xf32>
    %90 = arith.addf %84, %89 : vector<64x32xf32>
    %c0_105 = arith.constant 0 : index
    %c13 = arith.constant 13 : index
    %c0_106 = arith.constant 0 : index
    %c0_107 = arith.constant 0 : index
    %91 = vector.load %arg1[%c0_105, %c13, %c0_106, %c0_107] : memref<1x49x64x32xf32, #tpu.memory_space<vmem>>, vector<1x1x64x32xf32>
    %92 = vector.shape_cast %91 : vector<1x1x64x32xf32> to vector<64x32xf32>
    %c13_108 = arith.constant 13 : index
    %c0_109 = arith.constant 0 : index
    %c0_110 = arith.constant 0 : index
    %93 = vector.load %arg3[%c13_108, %c0_109, %c0_110] : memref<49x64x32xf32, #tpu.memory_space<vmem>>, vector<1x64x32xf32>
    %94 = vector.shape_cast %93 : vector<1x64x32xf32> to vector<64x32xf32>
    %95 = arith.mulf %92, %94 : vector<64x32xf32>
    %96 = arith.addf %90, %95 : vector<64x32xf32>
    %c0_111 = arith.constant 0 : index
    %c14 = arith.constant 14 : index
    %c0_112 = arith.constant 0 : index
    %c0_113 = arith.constant 0 : index
    %97 = vector.load %arg1[%c0_111, %c14, %c0_112, %c0_113] : memref<1x49x64x32xf32, #tpu.memory_space<vmem>>, vector<1x1x64x32xf32>
    %98 = vector.shape_cast %97 : vector<1x1x64x32xf32> to vector<64x32xf32>
    %c14_114 = arith.constant 14 : index
    %c0_115 = arith.constant 0 : index
    %c0_116 = arith.constant 0 : index
    %99 = vector.load %arg3[%c14_114, %c0_115, %c0_116] : memref<49x64x32xf32, #tpu.memory_space<vmem>>, vector<1x64x32xf32>
    %100 = vector.shape_cast %99 : vector<1x64x32xf32> to vector<64x32xf32>
    %101 = arith.mulf %98, %100 : vector<64x32xf32>
    %102 = arith.addf %96, %101 : vector<64x32xf32>
    %c0_117 = arith.constant 0 : index
    %c15 = arith.constant 15 : index
    %c0_118 = arith.constant 0 : index
    %c0_119 = arith.constant 0 : index
    %103 = vector.load %arg1[%c0_117, %c15, %c0_118, %c0_119] : memref<1x49x64x32xf32, #tpu.memory_space<vmem>>, vector<1x1x64x32xf32>
    %104 = vector.shape_cast %103 : vector<1x1x64x32xf32> to vector<64x32xf32>
    %c15_120 = arith.constant 15 : index
    %c0_121 = arith.constant 0 : index
    %c0_122 = arith.constant 0 : index
    %105 = vector.load %arg3[%c15_120, %c0_121, %c0_122] : memref<49x64x32xf32, #tpu.memory_space<vmem>>, vector<1x64x32xf32>
    %106 = vector.shape_cast %105 : vector<1x64x32xf32> to vector<64x32xf32>
    %107 = arith.mulf %104, %106 : vector<64x32xf32>
    %108 = arith.addf %102, %107 : vector<64x32xf32>
    %c0_123 = arith.constant 0 : index
    %c16 = arith.constant 16 : index
    %c0_124 = arith.constant 0 : index
    %c0_125 = arith.constant 0 : index
    %109 = vector.load %arg1[%c0_123, %c16, %c0_124, %c0_125] : memref<1x49x64x32xf32, #tpu.memory_space<vmem>>, vector<1x1x64x32xf32>
    %110 = vector.shape_cast %109 : vector<1x1x64x32xf32> to vector<64x32xf32>
    %c16_126 = arith.constant 16 : index
    %c0_127 = arith.constant 0 : index
    %c0_128 = arith.constant 0 : index
    %111 = vector.load %arg3[%c16_126, %c0_127, %c0_128] : memref<49x64x32xf32, #tpu.memory_space<vmem>>, vector<1x64x32xf32>
    %112 = vector.shape_cast %111 : vector<1x64x32xf32> to vector<64x32xf32>
    %113 = arith.mulf %110, %112 : vector<64x32xf32>
    %114 = arith.addf %108, %113 : vector<64x32xf32>
    %c0_129 = arith.constant 0 : index
    %c17 = arith.constant 17 : index
    %c0_130 = arith.constant 0 : index
    %c0_131 = arith.constant 0 : index
    %115 = vector.load %arg1[%c0_129, %c17, %c0_130, %c0_131] : memref<1x49x64x32xf32, #tpu.memory_space<vmem>>, vector<1x1x64x32xf32>
    %116 = vector.shape_cast %115 : vector<1x1x64x32xf32> to vector<64x32xf32>
    %c17_132 = arith.constant 17 : index
    %c0_133 = arith.constant 0 : index
    %c0_134 = arith.constant 0 : index
    %117 = vector.load %arg3[%c17_132, %c0_133, %c0_134] : memref<49x64x32xf32, #tpu.memory_space<vmem>>, vector<1x64x32xf32>
    %118 = vector.shape_cast %117 : vector<1x64x32xf32> to vector<64x32xf32>
    %119 = arith.mulf %116, %118 : vector<64x32xf32>
    %120 = arith.addf %114, %119 : vector<64x32xf32>
    %c0_135 = arith.constant 0 : index
    %c18 = arith.constant 18 : index
    %c0_136 = arith.constant 0 : index
    %c0_137 = arith.constant 0 : index
    %121 = vector.load %arg1[%c0_135, %c18, %c0_136, %c0_137] : memref<1x49x64x32xf32, #tpu.memory_space<vmem>>, vector<1x1x64x32xf32>
    %122 = vector.shape_cast %121 : vector<1x1x64x32xf32> to vector<64x32xf32>
    %c18_138 = arith.constant 18 : index
    %c0_139 = arith.constant 0 : index
    %c0_140 = arith.constant 0 : index
    %123 = vector.load %arg3[%c18_138, %c0_139, %c0_140] : memref<49x64x32xf32, #tpu.memory_space<vmem>>, vector<1x64x32xf32>
    %124 = vector.shape_cast %123 : vector<1x64x32xf32> to vector<64x32xf32>
    %125 = arith.mulf %122, %124 : vector<64x32xf32>
    %126 = arith.addf %120, %125 : vector<64x32xf32>
    %c0_141 = arith.constant 0 : index
    %c19 = arith.constant 19 : index
    %c0_142 = arith.constant 0 : index
    %c0_143 = arith.constant 0 : index
    %127 = vector.load %arg1[%c0_141, %c19, %c0_142, %c0_143] : memref<1x49x64x32xf32, #tpu.memory_space<vmem>>, vector<1x1x64x32xf32>
    %128 = vector.shape_cast %127 : vector<1x1x64x32xf32> to vector<64x32xf32>
    %c19_144 = arith.constant 19 : index
    %c0_145 = arith.constant 0 : index
    %c0_146 = arith.constant 0 : index
    %129 = vector.load %arg3[%c19_144, %c0_145, %c0_146] : memref<49x64x32xf32, #tpu.memory_space<vmem>>, vector<1x64x32xf32>
    %130 = vector.shape_cast %129 : vector<1x64x32xf32> to vector<64x32xf32>
    %131 = arith.mulf %128, %130 : vector<64x32xf32>
    %132 = arith.addf %126, %131 : vector<64x32xf32>
    %c0_147 = arith.constant 0 : index
    %c20 = arith.constant 20 : index
    %c0_148 = arith.constant 0 : index
    %c0_149 = arith.constant 0 : index
    %133 = vector.load %arg1[%c0_147, %c20, %c0_148, %c0_149] : memref<1x49x64x32xf32, #tpu.memory_space<vmem>>, vector<1x1x64x32xf32>
    %134 = vector.shape_cast %133 : vector<1x1x64x32xf32> to vector<64x32xf32>
    %c20_150 = arith.constant 20 : index
    %c0_151 = arith.constant 0 : index
    %c0_152 = arith.constant 0 : index
    %135 = vector.load %arg3[%c20_150, %c0_151, %c0_152] : memref<49x64x32xf32, #tpu.memory_space<vmem>>, vector<1x64x32xf32>
    %136 = vector.shape_cast %135 : vector<1x64x32xf32> to vector<64x32xf32>
    %137 = arith.mulf %134, %136 : vector<64x32xf32>
    %138 = arith.addf %132, %137 : vector<64x32xf32>
    %c0_153 = arith.constant 0 : index
    %c21 = arith.constant 21 : index
    %c0_154 = arith.constant 0 : index
    %c0_155 = arith.constant 0 : index
    %139 = vector.load %arg1[%c0_153, %c21, %c0_154, %c0_155] : memref<1x49x64x32xf32, #tpu.memory_space<vmem>>, vector<1x1x64x32xf32>
    %140 = vector.shape_cast %139 : vector<1x1x64x32xf32> to vector<64x32xf32>
    %c21_156 = arith.constant 21 : index
    %c0_157 = arith.constant 0 : index
    %c0_158 = arith.constant 0 : index
    %141 = vector.load %arg3[%c21_156, %c0_157, %c0_158] : memref<49x64x32xf32, #tpu.memory_space<vmem>>, vector<1x64x32xf32>
    %142 = vector.shape_cast %141 : vector<1x64x32xf32> to vector<64x32xf32>
    %143 = arith.mulf %140, %142 : vector<64x32xf32>
    %144 = arith.addf %138, %143 : vector<64x32xf32>
    %c0_159 = arith.constant 0 : index
    %c22 = arith.constant 22 : index
    %c0_160 = arith.constant 0 : index
    %c0_161 = arith.constant 0 : index
    %145 = vector.load %arg1[%c0_159, %c22, %c0_160, %c0_161] : memref<1x49x64x32xf32, #tpu.memory_space<vmem>>, vector<1x1x64x32xf32>
    %146 = vector.shape_cast %145 : vector<1x1x64x32xf32> to vector<64x32xf32>
    %c22_162 = arith.constant 22 : index
    %c0_163 = arith.constant 0 : index
    %c0_164 = arith.constant 0 : index
    %147 = vector.load %arg3[%c22_162, %c0_163, %c0_164] : memref<49x64x32xf32, #tpu.memory_space<vmem>>, vector<1x64x32xf32>
    %148 = vector.shape_cast %147 : vector<1x64x32xf32> to vector<64x32xf32>
    %149 = arith.mulf %146, %148 : vector<64x32xf32>
    %150 = arith.addf %144, %149 : vector<64x32xf32>
    %c0_165 = arith.constant 0 : index
    %c23 = arith.constant 23 : index
    %c0_166 = arith.constant 0 : index
    %c0_167 = arith.constant 0 : index
    %151 = vector.load %arg1[%c0_165, %c23, %c0_166, %c0_167] : memref<1x49x64x32xf32, #tpu.memory_space<vmem>>, vector<1x1x64x32xf32>
    %152 = vector.shape_cast %151 : vector<1x1x64x32xf32> to vector<64x32xf32>
    %c23_168 = arith.constant 23 : index
    %c0_169 = arith.constant 0 : index
    %c0_170 = arith.constant 0 : index
    %153 = vector.load %arg3[%c23_168, %c0_169, %c0_170] : memref<49x64x32xf32, #tpu.memory_space<vmem>>, vector<1x64x32xf32>
    %154 = vector.shape_cast %153 : vector<1x64x32xf32> to vector<64x32xf32>
    %155 = arith.mulf %152, %154 : vector<64x32xf32>
    %156 = arith.addf %150, %155 : vector<64x32xf32>
    %c0_171 = arith.constant 0 : index
    %c24 = arith.constant 24 : index
    %c0_172 = arith.constant 0 : index
    %c0_173 = arith.constant 0 : index
    %157 = vector.load %arg1[%c0_171, %c24, %c0_172, %c0_173] : memref<1x49x64x32xf32, #tpu.memory_space<vmem>>, vector<1x1x64x32xf32>
    %158 = vector.shape_cast %157 : vector<1x1x64x32xf32> to vector<64x32xf32>
    %c24_174 = arith.constant 24 : index
    %c0_175 = arith.constant 0 : index
    %c0_176 = arith.constant 0 : index
    %159 = vector.load %arg3[%c24_174, %c0_175, %c0_176] : memref<49x64x32xf32, #tpu.memory_space<vmem>>, vector<1x64x32xf32>
    %160 = vector.shape_cast %159 : vector<1x64x32xf32> to vector<64x32xf32>
    %161 = arith.mulf %158, %160 : vector<64x32xf32>
    %162 = arith.addf %156, %161 : vector<64x32xf32>
    %c0_177 = arith.constant 0 : index
    %c25 = arith.constant 25 : index
    %c0_178 = arith.constant 0 : index
    %c0_179 = arith.constant 0 : index
    %163 = vector.load %arg1[%c0_177, %c25, %c0_178, %c0_179] : memref<1x49x64x32xf32, #tpu.memory_space<vmem>>, vector<1x1x64x32xf32>
    %164 = vector.shape_cast %163 : vector<1x1x64x32xf32> to vector<64x32xf32>
    %c25_180 = arith.constant 25 : index
    %c0_181 = arith.constant 0 : index
    %c0_182 = arith.constant 0 : index
    %165 = vector.load %arg3[%c25_180, %c0_181, %c0_182] : memref<49x64x32xf32, #tpu.memory_space<vmem>>, vector<1x64x32xf32>
    %166 = vector.shape_cast %165 : vector<1x64x32xf32> to vector<64x32xf32>
    %167 = arith.mulf %164, %166 : vector<64x32xf32>
    %168 = arith.addf %162, %167 : vector<64x32xf32>
    %c0_183 = arith.constant 0 : index
    %c26 = arith.constant 26 : index
    %c0_184 = arith.constant 0 : index
    %c0_185 = arith.constant 0 : index
    %169 = vector.load %arg1[%c0_183, %c26, %c0_184, %c0_185] : memref<1x49x64x32xf32, #tpu.memory_space<vmem>>, vector<1x1x64x32xf32>
    %170 = vector.shape_cast %169 : vector<1x1x64x32xf32> to vector<64x32xf32>
    %c26_186 = arith.constant 26 : index
    %c0_187 = arith.constant 0 : index
    %c0_188 = arith.constant 0 : index
    %171 = vector.load %arg3[%c26_186, %c0_187, %c0_188] : memref<49x64x32xf32, #tpu.memory_space<vmem>>, vector<1x64x32xf32>
    %172 = vector.shape_cast %171 : vector<1x64x32xf32> to vector<64x32xf32>
    %173 = arith.mulf %170, %172 : vector<64x32xf32>
    %174 = arith.addf %168, %173 : vector<64x32xf32>
    %c0_189 = arith.constant 0 : index
    %c27 = arith.constant 27 : index
    %c0_190 = arith.constant 0 : index
    %c0_191 = arith.constant 0 : index
    %175 = vector.load %arg1[%c0_189, %c27, %c0_190, %c0_191] : memref<1x49x64x32xf32, #tpu.memory_space<vmem>>, vector<1x1x64x32xf32>
    %176 = vector.shape_cast %175 : vector<1x1x64x32xf32> to vector<64x32xf32>
    %c27_192 = arith.constant 27 : index
    %c0_193 = arith.constant 0 : index
    %c0_194 = arith.constant 0 : index
    %177 = vector.load %arg3[%c27_192, %c0_193, %c0_194] : memref<49x64x32xf32, #tpu.memory_space<vmem>>, vector<1x64x32xf32>
    %178 = vector.shape_cast %177 : vector<1x64x32xf32> to vector<64x32xf32>
    %179 = arith.mulf %176, %178 : vector<64x32xf32>
    %180 = arith.addf %174, %179 : vector<64x32xf32>
    %c0_195 = arith.constant 0 : index
    %c28 = arith.constant 28 : index
    %c0_196 = arith.constant 0 : index
    %c0_197 = arith.constant 0 : index
    %181 = vector.load %arg1[%c0_195, %c28, %c0_196, %c0_197] : memref<1x49x64x32xf32, #tpu.memory_space<vmem>>, vector<1x1x64x32xf32>
    %182 = vector.shape_cast %181 : vector<1x1x64x32xf32> to vector<64x32xf32>
    %c28_198 = arith.constant 28 : index
    %c0_199 = arith.constant 0 : index
    %c0_200 = arith.constant 0 : index
    %183 = vector.load %arg3[%c28_198, %c0_199, %c0_200] : memref<49x64x32xf32, #tpu.memory_space<vmem>>, vector<1x64x32xf32>
    %184 = vector.shape_cast %183 : vector<1x64x32xf32> to vector<64x32xf32>
    %185 = arith.mulf %182, %184 : vector<64x32xf32>
    %186 = arith.addf %180, %185 : vector<64x32xf32>
    %c0_201 = arith.constant 0 : index
    %c29 = arith.constant 29 : index
    %c0_202 = arith.constant 0 : index
    %c0_203 = arith.constant 0 : index
    %187 = vector.load %arg1[%c0_201, %c29, %c0_202, %c0_203] : memref<1x49x64x32xf32, #tpu.memory_space<vmem>>, vector<1x1x64x32xf32>
    %188 = vector.shape_cast %187 : vector<1x1x64x32xf32> to vector<64x32xf32>
    %c29_204 = arith.constant 29 : index
    %c0_205 = arith.constant 0 : index
    %c0_206 = arith.constant 0 : index
    %189 = vector.load %arg3[%c29_204, %c0_205, %c0_206] : memref<49x64x32xf32, #tpu.memory_space<vmem>>, vector<1x64x32xf32>
    %190 = vector.shape_cast %189 : vector<1x64x32xf32> to vector<64x32xf32>
    %191 = arith.mulf %188, %190 : vector<64x32xf32>
    %192 = arith.addf %186, %191 : vector<64x32xf32>
    %c0_207 = arith.constant 0 : index
    %c30 = arith.constant 30 : index
    %c0_208 = arith.constant 0 : index
    %c0_209 = arith.constant 0 : index
    %193 = vector.load %arg1[%c0_207, %c30, %c0_208, %c0_209] : memref<1x49x64x32xf32, #tpu.memory_space<vmem>>, vector<1x1x64x32xf32>
    %194 = vector.shape_cast %193 : vector<1x1x64x32xf32> to vector<64x32xf32>
    %c30_210 = arith.constant 30 : index
    %c0_211 = arith.constant 0 : index
    %c0_212 = arith.constant 0 : index
    %195 = vector.load %arg3[%c30_210, %c0_211, %c0_212] : memref<49x64x32xf32, #tpu.memory_space<vmem>>, vector<1x64x32xf32>
    %196 = vector.shape_cast %195 : vector<1x64x32xf32> to vector<64x32xf32>
    %197 = arith.mulf %194, %196 : vector<64x32xf32>
    %198 = arith.addf %192, %197 : vector<64x32xf32>
    %c0_213 = arith.constant 0 : index
    %c31 = arith.constant 31 : index
    %c0_214 = arith.constant 0 : index
    %c0_215 = arith.constant 0 : index
    %199 = vector.load %arg1[%c0_213, %c31, %c0_214, %c0_215] : memref<1x49x64x32xf32, #tpu.memory_space<vmem>>, vector<1x1x64x32xf32>
    %200 = vector.shape_cast %199 : vector<1x1x64x32xf32> to vector<64x32xf32>
    %c31_216 = arith.constant 31 : index
    %c0_217 = arith.constant 0 : index
    %c0_218 = arith.constant 0 : index
    %201 = vector.load %arg3[%c31_216, %c0_217, %c0_218] : memref<49x64x32xf32, #tpu.memory_space<vmem>>, vector<1x64x32xf32>
    %202 = vector.shape_cast %201 : vector<1x64x32xf32> to vector<64x32xf32>
    %203 = arith.mulf %200, %202 : vector<64x32xf32>
    %204 = arith.addf %198, %203 : vector<64x32xf32>
    %c0_219 = arith.constant 0 : index
    %c32 = arith.constant 32 : index
    %c0_220 = arith.constant 0 : index
    %c0_221 = arith.constant 0 : index
    %205 = vector.load %arg1[%c0_219, %c32, %c0_220, %c0_221] : memref<1x49x64x32xf32, #tpu.memory_space<vmem>>, vector<1x1x64x32xf32>
    %206 = vector.shape_cast %205 : vector<1x1x64x32xf32> to vector<64x32xf32>
    %c32_222 = arith.constant 32 : index
    %c0_223 = arith.constant 0 : index
    %c0_224 = arith.constant 0 : index
    %207 = vector.load %arg3[%c32_222, %c0_223, %c0_224] : memref<49x64x32xf32, #tpu.memory_space<vmem>>, vector<1x64x32xf32>
    %208 = vector.shape_cast %207 : vector<1x64x32xf32> to vector<64x32xf32>
    %209 = arith.mulf %206, %208 : vector<64x32xf32>
    %210 = arith.addf %204, %209 : vector<64x32xf32>
    %c0_225 = arith.constant 0 : index
    %c33 = arith.constant 33 : index
    %c0_226 = arith.constant 0 : index
    %c0_227 = arith.constant 0 : index
    %211 = vector.load %arg1[%c0_225, %c33, %c0_226, %c0_227] : memref<1x49x64x32xf32, #tpu.memory_space<vmem>>, vector<1x1x64x32xf32>
    %212 = vector.shape_cast %211 : vector<1x1x64x32xf32> to vector<64x32xf32>
    %c33_228 = arith.constant 33 : index
    %c0_229 = arith.constant 0 : index
    %c0_230 = arith.constant 0 : index
    %213 = vector.load %arg3[%c33_228, %c0_229, %c0_230] : memref<49x64x32xf32, #tpu.memory_space<vmem>>, vector<1x64x32xf32>
    %214 = vector.shape_cast %213 : vector<1x64x32xf32> to vector<64x32xf32>
    %215 = arith.mulf %212, %214 : vector<64x32xf32>
    %216 = arith.addf %210, %215 : vector<64x32xf32>
    %c0_231 = arith.constant 0 : index
    %c34 = arith.constant 34 : index
    %c0_232 = arith.constant 0 : index
    %c0_233 = arith.constant 0 : index
    %217 = vector.load %arg1[%c0_231, %c34, %c0_232, %c0_233] : memref<1x49x64x32xf32, #tpu.memory_space<vmem>>, vector<1x1x64x32xf32>
    %218 = vector.shape_cast %217 : vector<1x1x64x32xf32> to vector<64x32xf32>
    %c34_234 = arith.constant 34 : index
    %c0_235 = arith.constant 0 : index
    %c0_236 = arith.constant 0 : index
    %219 = vector.load %arg3[%c34_234, %c0_235, %c0_236] : memref<49x64x32xf32, #tpu.memory_space<vmem>>, vector<1x64x32xf32>
    %220 = vector.shape_cast %219 : vector<1x64x32xf32> to vector<64x32xf32>
    %221 = arith.mulf %218, %220 : vector<64x32xf32>
    %222 = arith.addf %216, %221 : vector<64x32xf32>
    %c0_237 = arith.constant 0 : index
    %c35 = arith.constant 35 : index
    %c0_238 = arith.constant 0 : index
    %c0_239 = arith.constant 0 : index
    %223 = vector.load %arg1[%c0_237, %c35, %c0_238, %c0_239] : memref<1x49x64x32xf32, #tpu.memory_space<vmem>>, vector<1x1x64x32xf32>
    %224 = vector.shape_cast %223 : vector<1x1x64x32xf32> to vector<64x32xf32>
    %c35_240 = arith.constant 35 : index
    %c0_241 = arith.constant 0 : index
    %c0_242 = arith.constant 0 : index
    %225 = vector.load %arg3[%c35_240, %c0_241, %c0_242] : memref<49x64x32xf32, #tpu.memory_space<vmem>>, vector<1x64x32xf32>
    %226 = vector.shape_cast %225 : vector<1x64x32xf32> to vector<64x32xf32>
    %227 = arith.mulf %224, %226 : vector<64x32xf32>
    %228 = arith.addf %222, %227 : vector<64x32xf32>
    %c0_243 = arith.constant 0 : index
    %c36 = arith.constant 36 : index
    %c0_244 = arith.constant 0 : index
    %c0_245 = arith.constant 0 : index
    %229 = vector.load %arg1[%c0_243, %c36, %c0_244, %c0_245] : memref<1x49x64x32xf32, #tpu.memory_space<vmem>>, vector<1x1x64x32xf32>
    %230 = vector.shape_cast %229 : vector<1x1x64x32xf32> to vector<64x32xf32>
    %c36_246 = arith.constant 36 : index
    %c0_247 = arith.constant 0 : index
    %c0_248 = arith.constant 0 : index
    %231 = vector.load %arg3[%c36_246, %c0_247, %c0_248] : memref<49x64x32xf32, #tpu.memory_space<vmem>>, vector<1x64x32xf32>
    %232 = vector.shape_cast %231 : vector<1x64x32xf32> to vector<64x32xf32>
    %233 = arith.mulf %230, %232 : vector<64x32xf32>
    %234 = arith.addf %228, %233 : vector<64x32xf32>
    %c0_249 = arith.constant 0 : index
    %c37 = arith.constant 37 : index
    %c0_250 = arith.constant 0 : index
    %c0_251 = arith.constant 0 : index
    %235 = vector.load %arg1[%c0_249, %c37, %c0_250, %c0_251] : memref<1x49x64x32xf32, #tpu.memory_space<vmem>>, vector<1x1x64x32xf32>
    %236 = vector.shape_cast %235 : vector<1x1x64x32xf32> to vector<64x32xf32>
    %c37_252 = arith.constant 37 : index
    %c0_253 = arith.constant 0 : index
    %c0_254 = arith.constant 0 : index
    %237 = vector.load %arg3[%c37_252, %c0_253, %c0_254] : memref<49x64x32xf32, #tpu.memory_space<vmem>>, vector<1x64x32xf32>
    %238 = vector.shape_cast %237 : vector<1x64x32xf32> to vector<64x32xf32>
    %239 = arith.mulf %236, %238 : vector<64x32xf32>
    %240 = arith.addf %234, %239 : vector<64x32xf32>
    %c0_255 = arith.constant 0 : index
    %c38 = arith.constant 38 : index
    %c0_256 = arith.constant 0 : index
    %c0_257 = arith.constant 0 : index
    %241 = vector.load %arg1[%c0_255, %c38, %c0_256, %c0_257] : memref<1x49x64x32xf32, #tpu.memory_space<vmem>>, vector<1x1x64x32xf32>
    %242 = vector.shape_cast %241 : vector<1x1x64x32xf32> to vector<64x32xf32>
    %c38_258 = arith.constant 38 : index
    %c0_259 = arith.constant 0 : index
    %c0_260 = arith.constant 0 : index
    %243 = vector.load %arg3[%c38_258, %c0_259, %c0_260] : memref<49x64x32xf32, #tpu.memory_space<vmem>>, vector<1x64x32xf32>
    %244 = vector.shape_cast %243 : vector<1x64x32xf32> to vector<64x32xf32>
    %245 = arith.mulf %242, %244 : vector<64x32xf32>
    %246 = arith.addf %240, %245 : vector<64x32xf32>
    %c0_261 = arith.constant 0 : index
    %c39 = arith.constant 39 : index
    %c0_262 = arith.constant 0 : index
    %c0_263 = arith.constant 0 : index
    %247 = vector.load %arg1[%c0_261, %c39, %c0_262, %c0_263] : memref<1x49x64x32xf32, #tpu.memory_space<vmem>>, vector<1x1x64x32xf32>
    %248 = vector.shape_cast %247 : vector<1x1x64x32xf32> to vector<64x32xf32>
    %c39_264 = arith.constant 39 : index
    %c0_265 = arith.constant 0 : index
    %c0_266 = arith.constant 0 : index
    %249 = vector.load %arg3[%c39_264, %c0_265, %c0_266] : memref<49x64x32xf32, #tpu.memory_space<vmem>>, vector<1x64x32xf32>
    %250 = vector.shape_cast %249 : vector<1x64x32xf32> to vector<64x32xf32>
    %251 = arith.mulf %248, %250 : vector<64x32xf32>
    %252 = arith.addf %246, %251 : vector<64x32xf32>
    %c0_267 = arith.constant 0 : index
    %c40 = arith.constant 40 : index
    %c0_268 = arith.constant 0 : index
    %c0_269 = arith.constant 0 : index
    %253 = vector.load %arg1[%c0_267, %c40, %c0_268, %c0_269] : memref<1x49x64x32xf32, #tpu.memory_space<vmem>>, vector<1x1x64x32xf32>
    %254 = vector.shape_cast %253 : vector<1x1x64x32xf32> to vector<64x32xf32>
    %c40_270 = arith.constant 40 : index
    %c0_271 = arith.constant 0 : index
    %c0_272 = arith.constant 0 : index
    %255 = vector.load %arg3[%c40_270, %c0_271, %c0_272] : memref<49x64x32xf32, #tpu.memory_space<vmem>>, vector<1x64x32xf32>
    %256 = vector.shape_cast %255 : vector<1x64x32xf32> to vector<64x32xf32>
    %257 = arith.mulf %254, %256 : vector<64x32xf32>
    %258 = arith.addf %252, %257 : vector<64x32xf32>
    %c0_273 = arith.constant 0 : index
    %c41 = arith.constant 41 : index
    %c0_274 = arith.constant 0 : index
    %c0_275 = arith.constant 0 : index
    %259 = vector.load %arg1[%c0_273, %c41, %c0_274, %c0_275] : memref<1x49x64x32xf32, #tpu.memory_space<vmem>>, vector<1x1x64x32xf32>
    %260 = vector.shape_cast %259 : vector<1x1x64x32xf32> to vector<64x32xf32>
    %c41_276 = arith.constant 41 : index
    %c0_277 = arith.constant 0 : index
    %c0_278 = arith.constant 0 : index
    %261 = vector.load %arg3[%c41_276, %c0_277, %c0_278] : memref<49x64x32xf32, #tpu.memory_space<vmem>>, vector<1x64x32xf32>
    %262 = vector.shape_cast %261 : vector<1x64x32xf32> to vector<64x32xf32>
    %263 = arith.mulf %260, %262 : vector<64x32xf32>
    %264 = arith.addf %258, %263 : vector<64x32xf32>
    %c0_279 = arith.constant 0 : index
    %c42 = arith.constant 42 : index
    %c0_280 = arith.constant 0 : index
    %c0_281 = arith.constant 0 : index
    %265 = vector.load %arg1[%c0_279, %c42, %c0_280, %c0_281] : memref<1x49x64x32xf32, #tpu.memory_space<vmem>>, vector<1x1x64x32xf32>
    %266 = vector.shape_cast %265 : vector<1x1x64x32xf32> to vector<64x32xf32>
    %c42_282 = arith.constant 42 : index
    %c0_283 = arith.constant 0 : index
    %c0_284 = arith.constant 0 : index
    %267 = vector.load %arg3[%c42_282, %c0_283, %c0_284] : memref<49x64x32xf32, #tpu.memory_space<vmem>>, vector<1x64x32xf32>
    %268 = vector.shape_cast %267 : vector<1x64x32xf32> to vector<64x32xf32>
    %269 = arith.mulf %266, %268 : vector<64x32xf32>
    %270 = arith.addf %264, %269 : vector<64x32xf32>
    %c0_285 = arith.constant 0 : index
    %c43 = arith.constant 43 : index
    %c0_286 = arith.constant 0 : index
    %c0_287 = arith.constant 0 : index
    %271 = vector.load %arg1[%c0_285, %c43, %c0_286, %c0_287] : memref<1x49x64x32xf32, #tpu.memory_space<vmem>>, vector<1x1x64x32xf32>
    %272 = vector.shape_cast %271 : vector<1x1x64x32xf32> to vector<64x32xf32>
    %c43_288 = arith.constant 43 : index
    %c0_289 = arith.constant 0 : index
    %c0_290 = arith.constant 0 : index
    %273 = vector.load %arg3[%c43_288, %c0_289, %c0_290] : memref<49x64x32xf32, #tpu.memory_space<vmem>>, vector<1x64x32xf32>
    %274 = vector.shape_cast %273 : vector<1x64x32xf32> to vector<64x32xf32>
    %275 = arith.mulf %272, %274 : vector<64x32xf32>
    %276 = arith.addf %270, %275 : vector<64x32xf32>
    %c0_291 = arith.constant 0 : index
    %c44 = arith.constant 44 : index
    %c0_292 = arith.constant 0 : index
    %c0_293 = arith.constant 0 : index
    %277 = vector.load %arg1[%c0_291, %c44, %c0_292, %c0_293] : memref<1x49x64x32xf32, #tpu.memory_space<vmem>>, vector<1x1x64x32xf32>
    %278 = vector.shape_cast %277 : vector<1x1x64x32xf32> to vector<64x32xf32>
    %c44_294 = arith.constant 44 : index
    %c0_295 = arith.constant 0 : index
    %c0_296 = arith.constant 0 : index
    %279 = vector.load %arg3[%c44_294, %c0_295, %c0_296] : memref<49x64x32xf32, #tpu.memory_space<vmem>>, vector<1x64x32xf32>
    %280 = vector.shape_cast %279 : vector<1x64x32xf32> to vector<64x32xf32>
    %281 = arith.mulf %278, %280 : vector<64x32xf32>
    %282 = arith.addf %276, %281 : vector<64x32xf32>
    %c0_297 = arith.constant 0 : index
    %c45 = arith.constant 45 : index
    %c0_298 = arith.constant 0 : index
    %c0_299 = arith.constant 0 : index
    %283 = vector.load %arg1[%c0_297, %c45, %c0_298, %c0_299] : memref<1x49x64x32xf32, #tpu.memory_space<vmem>>, vector<1x1x64x32xf32>
    %284 = vector.shape_cast %283 : vector<1x1x64x32xf32> to vector<64x32xf32>
    %c45_300 = arith.constant 45 : index
    %c0_301 = arith.constant 0 : index
    %c0_302 = arith.constant 0 : index
    %285 = vector.load %arg3[%c45_300, %c0_301, %c0_302] : memref<49x64x32xf32, #tpu.memory_space<vmem>>, vector<1x64x32xf32>
    %286 = vector.shape_cast %285 : vector<1x64x32xf32> to vector<64x32xf32>
    %287 = arith.mulf %284, %286 : vector<64x32xf32>
    %288 = arith.addf %282, %287 : vector<64x32xf32>
    %c0_303 = arith.constant 0 : index
    %c46 = arith.constant 46 : index
    %c0_304 = arith.constant 0 : index
    %c0_305 = arith.constant 0 : index
    %289 = vector.load %arg1[%c0_303, %c46, %c0_304, %c0_305] : memref<1x49x64x32xf32, #tpu.memory_space<vmem>>, vector<1x1x64x32xf32>
    %290 = vector.shape_cast %289 : vector<1x1x64x32xf32> to vector<64x32xf32>
    %c46_306 = arith.constant 46 : index
    %c0_307 = arith.constant 0 : index
    %c0_308 = arith.constant 0 : index
    %291 = vector.load %arg3[%c46_306, %c0_307, %c0_308] : memref<49x64x32xf32, #tpu.memory_space<vmem>>, vector<1x64x32xf32>
    %292 = vector.shape_cast %291 : vector<1x64x32xf32> to vector<64x32xf32>
    %293 = arith.mulf %290, %292 : vector<64x32xf32>
    %294 = arith.addf %288, %293 : vector<64x32xf32>
    %c0_309 = arith.constant 0 : index
    %c47 = arith.constant 47 : index
    %c0_310 = arith.constant 0 : index
    %c0_311 = arith.constant 0 : index
    %295 = vector.load %arg1[%c0_309, %c47, %c0_310, %c0_311] : memref<1x49x64x32xf32, #tpu.memory_space<vmem>>, vector<1x1x64x32xf32>
    %296 = vector.shape_cast %295 : vector<1x1x64x32xf32> to vector<64x32xf32>
    %c47_312 = arith.constant 47 : index
    %c0_313 = arith.constant 0 : index
    %c0_314 = arith.constant 0 : index
    %297 = vector.load %arg3[%c47_312, %c0_313, %c0_314] : memref<49x64x32xf32, #tpu.memory_space<vmem>>, vector<1x64x32xf32>
    %298 = vector.shape_cast %297 : vector<1x64x32xf32> to vector<64x32xf32>
    %299 = arith.mulf %296, %298 : vector<64x32xf32>
    %300 = arith.addf %294, %299 : vector<64x32xf32>
    %c0_315 = arith.constant 0 : index
    %c48 = arith.constant 48 : index
    %c0_316 = arith.constant 0 : index
    %c0_317 = arith.constant 0 : index
    %301 = vector.load %arg1[%c0_315, %c48, %c0_316, %c0_317] : memref<1x49x64x32xf32, #tpu.memory_space<vmem>>, vector<1x1x64x32xf32>
    %302 = vector.shape_cast %301 : vector<1x1x64x32xf32> to vector<64x32xf32>
    %c48_318 = arith.constant 48 : index
    %c0_319 = arith.constant 0 : index
    %c0_320 = arith.constant 0 : index
    %303 = vector.load %arg3[%c48_318, %c0_319, %c0_320] : memref<49x64x32xf32, #tpu.memory_space<vmem>>, vector<1x64x32xf32>
    %304 = vector.shape_cast %303 : vector<1x64x32xf32> to vector<64x32xf32>
    %305 = arith.mulf %302, %304 : vector<64x32xf32>
    %306 = arith.addf %300, %305 : vector<64x32xf32>
    %307 = vector.broadcast %2 : vector<1x32xf32> to vector<64x32xf32>
    %308 = arith.addf %306, %307 : vector<64x32xf32>
    %cst = arith.constant 5.000000e-01 : f32
    %309 = vector.broadcast %cst : f32 to vector<64x32xf32>
    %310 = arith.mulf %309, %308 : vector<64x32xf32>
    %cst_321 = arith.constant 0.707106769 : f32
    %311 = vector.broadcast %cst_321 : f32 to vector<64x32xf32>
    %312 = arith.mulf %308, %311 : vector<64x32xf32>
    %cst_322 = arith.constant 0.000000e+00 : f32
    %313 = vector.broadcast %cst_322 : f32 to vector<64x32xf32>
    %314 = arith.cmpf oge, %312, %313 : vector<64x32xf32>
    %cst_323 = arith.constant 1.000000e+00 : f32
    %cst_324 = arith.constant -1.000000e+00 : f32
    %315 = vector.broadcast %cst_323 : f32 to vector<64x32xf32>
    %316 = vector.broadcast %cst_324 : f32 to vector<64x32xf32>
    %317 = arith.select %314, %315, %316 : vector<64x32xi1>, vector<64x32xf32>
    %318 = math.absf %312 : vector<64x32xf32>
    %cst_325 = arith.constant 0.327591091 : f32
    %319 = vector.broadcast %cst_325 : f32 to vector<64x32xf32>
    %320 = arith.mulf %319, %318 : vector<64x32xf32>
    %cst_326 = arith.constant 1.000000e+00 : f32
    %321 = vector.broadcast %cst_326 : f32 to vector<64x32xf32>
    %322 = arith.addf %321, %320 : vector<64x32xf32>
    %cst_327 = arith.constant 1.000000e+00 : f32
    %323 = vector.broadcast %cst_327 : f32 to vector<64x32xf32>
    %324 = arith.divf %323, %322 : vector<64x32xf32>
    %cst_328 = arith.constant 1.06140542 : f32
    %325 = vector.broadcast %cst_328 : f32 to vector<64x32xf32>
    %326 = arith.mulf %324, %325 : vector<64x32xf32>
    %cst_329 = arith.constant -1.45315206 : f32
    %327 = vector.broadcast %cst_329 : f32 to vector<64x32xf32>
    %328 = arith.addf %327, %326 : vector<64x32xf32>
    %329 = arith.mulf %324, %328 : vector<64x32xf32>
    %cst_330 = arith.constant 1.42141378 : f32
    %330 = vector.broadcast %cst_330 : f32 to vector<64x32xf32>
    %331 = arith.addf %330, %329 : vector<64x32xf32>
    %332 = arith.mulf %324, %331 : vector<64x32xf32>
    %cst_331 = arith.constant -0.284496725 : f32
    %333 = vector.broadcast %cst_331 : f32 to vector<64x32xf32>
    %334 = arith.addf %333, %332 : vector<64x32xf32>
    %335 = arith.mulf %324, %334 : vector<64x32xf32>
    %cst_332 = arith.constant 0.254829586 : f32
    %336 = vector.broadcast %cst_332 : f32 to vector<64x32xf32>
    %337 = arith.addf %336, %335 : vector<64x32xf32>
    %338 = arith.mulf %324, %337 : vector<64x32xf32>
    %cst_333 = arith.constant 0.000000e+00 : f32
    %339 = vector.broadcast %cst_333 : f32 to vector<64x32xf32>
    %340 = arith.subf %339, %318 : vector<64x32xf32>
    %341 = arith.mulf %340, %318 : vector<64x32xf32>
    %342 = math.exp %341 : vector<64x32xf32>
    %343 = arith.mulf %338, %342 : vector<64x32xf32>
    %cst_334 = arith.constant 1.000000e+00 : f32
    %344 = vector.broadcast %cst_334 : f32 to vector<64x32xf32>
    %345 = arith.subf %344, %343 : vector<64x32xf32>
    %346 = arith.mulf %317, %345 : vector<64x32xf32>
    %cst_335 = arith.constant 1.000000e+00 : f32
    %347 = vector.broadcast %cst_335 : f32 to vector<64x32xf32>
    %348 = arith.addf %347, %346 : vector<64x32xf32>
    %349 = arith.mulf %310, %348 : vector<64x32xf32>
    %c0_336 = arith.constant 0 : index
    %c0_337 = arith.constant 0 : index
    %350 = vector.load %arg5[%c0_336, %c0_337] : memref<32x32xf32, #tpu.memory_space<vmem>>, vector<32x32xf32>
    %cst_338 = arith.constant dense<0.000000e+00> : vector<64x32xf32>
    %351 = tpu.matmul %349, %350, %cst_338 {dimension_numbers = #tpu.dot_dimension_numbers<[1], [0], [0], [1], [0, 0, 1, 1], [], []>} : vector<64x32xf32>, vector<32x32xf32>, vector<64x32xf32> -> vector<64x32xf32>
    %352 = vector.broadcast %3 : vector<1x32xf32> to vector<64x32xf32>
    %353 = arith.addf %351, %352 : vector<64x32xf32>
    %cst_339 = arith.constant 5.000000e-01 : f32
    %354 = vector.broadcast %cst_339 : f32 to vector<64x32xf32>
    %355 = arith.mulf %354, %353 : vector<64x32xf32>
    %cst_340 = arith.constant 0.707106769 : f32
    %356 = vector.broadcast %cst_340 : f32 to vector<64x32xf32>
    %357 = arith.mulf %353, %356 : vector<64x32xf32>
    %cst_341 = arith.constant 0.000000e+00 : f32
    %358 = vector.broadcast %cst_341 : f32 to vector<64x32xf32>
    %359 = arith.cmpf oge, %357, %358 : vector<64x32xf32>
    %cst_342 = arith.constant 1.000000e+00 : f32
    %cst_343 = arith.constant -1.000000e+00 : f32
    %360 = vector.broadcast %cst_342 : f32 to vector<64x32xf32>
    %361 = vector.broadcast %cst_343 : f32 to vector<64x32xf32>
    %362 = arith.select %359, %360, %361 : vector<64x32xi1>, vector<64x32xf32>
    %363 = math.absf %357 : vector<64x32xf32>
    %cst_344 = arith.constant 0.327591091 : f32
    %364 = vector.broadcast %cst_344 : f32 to vector<64x32xf32>
    %365 = arith.mulf %364, %363 : vector<64x32xf32>
    %cst_345 = arith.constant 1.000000e+00 : f32
    %366 = vector.broadcast %cst_345 : f32 to vector<64x32xf32>
    %367 = arith.addf %366, %365 : vector<64x32xf32>
    %cst_346 = arith.constant 1.000000e+00 : f32
    %368 = vector.broadcast %cst_346 : f32 to vector<64x32xf32>
    %369 = arith.divf %368, %367 : vector<64x32xf32>
    %cst_347 = arith.constant 1.06140542 : f32
    %370 = vector.broadcast %cst_347 : f32 to vector<64x32xf32>
    %371 = arith.mulf %369, %370 : vector<64x32xf32>
    %cst_348 = arith.constant -1.45315206 : f32
    %372 = vector.broadcast %cst_348 : f32 to vector<64x32xf32>
    %373 = arith.addf %372, %371 : vector<64x32xf32>
    %374 = arith.mulf %369, %373 : vector<64x32xf32>
    %cst_349 = arith.constant 1.42141378 : f32
    %375 = vector.broadcast %cst_349 : f32 to vector<64x32xf32>
    %376 = arith.addf %375, %374 : vector<64x32xf32>
    %377 = arith.mulf %369, %376 : vector<64x32xf32>
    %cst_350 = arith.constant -0.284496725 : f32
    %378 = vector.broadcast %cst_350 : f32 to vector<64x32xf32>
    %379 = arith.addf %378, %377 : vector<64x32xf32>
    %380 = arith.mulf %369, %379 : vector<64x32xf32>
    %cst_351 = arith.constant 0.254829586 : f32
    %381 = vector.broadcast %cst_351 : f32 to vector<64x32xf32>
    %382 = arith.addf %381, %380 : vector<64x32xf32>
    %383 = arith.mulf %369, %382 : vector<64x32xf32>
    %cst_352 = arith.constant 0.000000e+00 : f32
    %384 = vector.broadcast %cst_352 : f32 to vector<64x32xf32>
    %385 = arith.subf %384, %363 : vector<64x32xf32>
    %386 = arith.mulf %385, %363 : vector<64x32xf32>
    %387 = math.exp %386 : vector<64x32xf32>
    %388 = arith.mulf %383, %387 : vector<64x32xf32>
    %cst_353 = arith.constant 1.000000e+00 : f32
    %389 = vector.broadcast %cst_353 : f32 to vector<64x32xf32>
    %390 = arith.subf %389, %388 : vector<64x32xf32>
    %391 = arith.mulf %362, %390 : vector<64x32xf32>
    %cst_354 = arith.constant 1.000000e+00 : f32
    %392 = vector.broadcast %cst_354 : f32 to vector<64x32xf32>
    %393 = arith.addf %392, %391 : vector<64x32xf32>
    %394 = arith.mulf %355, %393 : vector<64x32xf32>
    %c0_355 = arith.constant 0 : index
    %c0_356 = arith.constant 0 : index
    %395 = vector.load %arg7[%c0_355, %c0_356] : memref<8x32xf32, #tpu.memory_space<vmem>>, vector<8x32xf32>
    %cst_357 = arith.constant dense<0.000000e+00> : vector<8x64xf32>
    %396 = tpu.matmul %395, %394, %cst_357 {dimension_numbers = #tpu.dot_dimension_numbers<[1], [1], [0], [0], [0, 0, 1, 0], [], []>} : vector<8x32xf32>, vector<64x32xf32>, vector<8x64xf32> -> vector<8x64xf32>
    %cst_358 = arith.constant dense<0xFF800000> : vector<8xf32>
    %397 = vector.multi_reduction <maximumf>, %396, %cst_358 [1] : vector<8x64xf32> to vector<8xf32>
    %398 = vector.shape_cast %397 : vector<8xf32> to vector<8x1xf32>
    %399 = vector.broadcast %398 : vector<8x1xf32> to vector<8x64xf32>
    %400 = arith.subf %396, %399 : vector<8x64xf32>
    %401 = math.exp %400 : vector<8x64xf32>
    %cst_359 = arith.constant dense<0.000000e+00> : vector<8xf32>
    %402 = vector.multi_reduction <add>, %401, %cst_359 [1] : vector<8x64xf32> to vector<8xf32>
    %403 = vector.shape_cast %402 : vector<8xf32> to vector<8x1xf32>
    %404 = vector.broadcast %403 : vector<8x1xf32> to vector<8x64xf32>
    %405 = arith.divf %401, %404 : vector<8x64xf32>
    %c0_360 = arith.constant 0 : index
    %c0_361 = arith.constant 0 : index
    %c0_362 = arith.constant 0 : index
    %406 = vector.load %arg23[%c0_360, %c0_361, %c0_362] : memref<1x8x64xf32, #tpu.memory_space<vmem>>, vector<1x8x64xf32>
    %407 = vector.shape_cast %406 : vector<1x8x64xf32> to vector<8x64xf32>
    %408 = vector.shape_cast %405 : vector<8x64xf32> to vector<1x8x64xf32>
    tpu.vector_store %arg23[%c0_360, %c0_361, %c0_362], %408 {strides = array<i32>} : memref<1x8x64xf32, #tpu.memory_space<vmem>>, vector<1x8x64xf32>,
    %cst_363 = arith.constant dense<0.000000e+00> : vector<8x32xf32>
    %409 = tpu.matmul %405, %1, %cst_363 {dimension_numbers = #tpu.dot_dimension_numbers<[1], [0], [0], [1], [0, 0, 1, 1], [], []>} : vector<8x64xf32>, vector<64x32xf32>, vector<8x32xf32> -> vector<8x32xf32>
    %410 = arith.addf %409, %4 : vector<8x32xf32>
    %cst_364 = arith.constant dense<0.000000e+00> : vector<8xf32>
    %411 = vector.multi_reduction <add>, %410, %cst_364 [1] : vector<8x32xf32> to vector<8xf32>
    %412 = vector.shape_cast %411 : vector<8xf32> to vector<8x1xf32>
    %cst_365 = arith.constant 3.200000e+01 : f32
    %413 = vector.broadcast %cst_365 : f32 to vector<8x1xf32>
    %414 = arith.divf %412, %413 : vector<8x1xf32>
    %415 = vector.broadcast %414 : vector<8x1xf32> to vector<8x32xf32>
    %416 = arith.subf %410, %415 : vector<8x32xf32>
    %417 = arith.mulf %416, %416 : vector<8x32xf32>
    %cst_366 = arith.constant dense<0.000000e+00> : vector<8xf32>
    %418 = vector.multi_reduction <add>, %417, %cst_366 [1] : vector<8x32xf32> to vector<8xf32>
    %419 = vector.shape_cast %418 : vector<8xf32> to vector<8x1xf32>
    %cst_367 = arith.constant 3.200000e+01 : f32
    %420 = vector.broadcast %cst_367 : f32 to vector<8x1xf32>
    %421 = arith.divf %419, %420 : vector<8x1xf32>
    %cst_368 = arith.constant 9.99999974E-6 : f32
    %422 = vector.broadcast %cst_368 : f32 to vector<8x1xf32>
    %423 = arith.addf %421, %422 : vector<8x1xf32>
    %424 = math.rsqrt %423 : vector<8x1xf32>
    %425 = vector.broadcast %424 : vector<8x1xf32> to vector<8x32xf32>
    %426 = arith.mulf %416, %425 : vector<8x32xf32>
    %427 = vector.broadcast %5 : vector<1x32xf32> to vector<8x32xf32>
    %428 = arith.mulf %426, %427 : vector<8x32xf32>
    %429 = vector.broadcast %6 : vector<1x32xf32> to vector<8x32xf32>
    %430 = arith.addf %428, %429 : vector<8x32xf32>
    %c0_369 = arith.constant 0 : index
    %c0_370 = arith.constant 0 : index
    %431 = vector.load %arg11[%c0_369, %c0_370] : memref<32x32xf32, #tpu.memory_space<vmem>>, vector<32x32xf32>
    %cst_371 = arith.constant dense<0.000000e+00> : vector<64x32xf32>
    %432 = tpu.matmul %1, %431, %cst_371 {dimension_numbers = #tpu.dot_dimension_numbers<[1], [0], [0], [1], [0, 0, 1, 1], [], []>} : vector<64x32xf32>, vector<32x32xf32>, vector<64x32xf32> -> vector<64x32xf32>
    %433 = vector.broadcast %7 : vector<1x32xf32> to vector<64x32xf32>
    %434 = arith.addf %432, %433 : vector<64x32xf32>
    %cst_372 = arith.constant 0.353553385 : f32
    %435 = vector.broadcast %cst_372 : f32 to vector<64x32xf32>
    %436 = arith.mulf %434, %435 : vector<64x32xf32>
    %c0_373 = arith.constant 0 : index
    %c0_374 = arith.constant 0 : index
    %437 = vector.load %arg13[%c0_373, %c0_374] : memref<32x32xf32, #tpu.memory_space<vmem>>, vector<32x32xf32>
    %cst_375 = arith.constant dense<0.000000e+00> : vector<8x32xf32>
    %438 = tpu.matmul %430, %437, %cst_375 {dimension_numbers = #tpu.dot_dimension_numbers<[1], [0], [0], [1], [0, 0, 1, 1], [], []>} : vector<8x32xf32>, vector<32x32xf32>, vector<8x32xf32> -> vector<8x32xf32>
    %439 = vector.broadcast %8 : vector<1x32xf32> to vector<8x32xf32>
    %440 = arith.addf %438, %439 : vector<8x32xf32>
    %c0_376 = arith.constant 0 : index
    %c0_377 = arith.constant 0 : index
    %441 = vector.load %arg15[%c0_376, %c0_377] : memref<32x32xf32, #tpu.memory_space<vmem>>, vector<32x32xf32>
    %cst_378 = arith.constant dense<0.000000e+00> : vector<8x32xf32>
    %442 = tpu.matmul %430, %441, %cst_378 {dimension_numbers = #tpu.dot_dimension_numbers<[1], [0], [0], [1], [0, 0, 1, 1], [], []>} : vector<8x32xf32>, vector<32x32xf32>, vector<8x32xf32> -> vector<8x32xf32>
    %443 = vector.broadcast %9 : vector<1x32xf32> to vector<8x32xf32>
    %444 = arith.addf %442, %443 : vector<8x32xf32>
    %cst_379 = arith.constant dense<0.000000e+00> : vector<32x32xf32>
    %445 = tpu.matmul %11, %440, %cst_379 {dimension_numbers = #tpu.dot_dimension_numbers<[1], [0], [0], [1], [0, 0, 1, 1], [], []>} : vector<32x8xf32>, vector<8x32xf32>, vector<32x32xf32> -> vector<32x32xf32>
    %446 = arith.mulf %445, %12 : vector<32x32xf32>
    %cst_380 = arith.constant dense<0.000000e+00> : vector<32x32xf32>
    %447 = tpu.matmul %11, %444, %cst_380 {dimension_numbers = #tpu.dot_dimension_numbers<[1], [0], [0], [1], [0, 0, 1, 1], [], []>} : vector<32x8xf32>, vector<8x32xf32>, vector<32x32xf32> -> vector<32x32xf32>
    %448 = arith.mulf %447, %12 : vector<32x32xf32>
    %cst_381 = arith.constant dense<0.000000e+00> : vector<64x32xf32>
    %449 = tpu.matmul %436, %446, %cst_381 {dimension_numbers = #tpu.dot_dimension_numbers<[1], [1], [0], [0], [0, 0, 1, 0], [], []>} : vector<64x32xf32>, vector<32x32xf32>, vector<64x32xf32> -> vector<64x32xf32>
    %cst_382 = arith.constant dense<0xFF800000> : vector<64xf32>
    %450 = vector.multi_reduction <maximumf>, %449, %cst_382 [1] : vector<64x32xf32> to vector<64xf32>
    %451 = vector.shape_cast %450 : vector<64xf32> to vector<64x1xf32>
    %452 = vector.broadcast %451 : vector<64x1xf32> to vector<64x32xf32>
    %453 = arith.subf %449, %452 : vector<64x32xf32>
    %454 = math.exp %453 : vector<64x32xf32>
    %cst_383 = arith.constant dense<0.000000e+00> : vector<64x32xf32>
    %455 = tpu.matmul %454, %13, %cst_383 {dimension_numbers = #tpu.dot_dimension_numbers<[1], [0], [0], [1], [0, 0, 1, 1], [], []>} : vector<64x32xf32>, vector<32x32xf32>, vector<64x32xf32> -> vector<64x32xf32>
    %456 = tpu.reciprocal %455 {approx = true} : vector<64x32xf32> -> vector<64x32xf32>
    %457 = arith.mulf %454, %456 : vector<64x32xf32>
    %cst_384 = arith.constant dense<0.000000e+00> : vector<64x32xf32>
    %458 = tpu.matmul %457, %448, %cst_384 {dimension_numbers = #tpu.dot_dimension_numbers<[1], [0], [0], [1], [0, 0, 1, 1], [], []>} : vector<64x32xf32>, vector<32x32xf32>, vector<64x32xf32> -> vector<64x32xf32>
    %c0_385 = arith.constant 0 : index
    %c0_386 = arith.constant 0 : index
    %459 = vector.load %arg17[%c0_385, %c0_386] : memref<32x32xf32, #tpu.memory_space<vmem>>, vector<32x32xf32>
    %cst_387 = arith.constant dense<0.000000e+00> : vector<64x32xf32>
    %460 = tpu.matmul %458, %459, %cst_387 {dimension_numbers = #tpu.dot_dimension_numbers<[1], [0], [0], [1], [0, 0, 1, 1], [], []>} : vector<64x32xf32>, vector<32x32xf32>, vector<64x32xf32> -> vector<64x32xf32>
    %461 = vector.broadcast %10 : vector<1x32xf32> to vector<64x32xf32>
    %462 = arith.addf %460, %461 : vector<64x32xf32>
    %c0_388 = arith.constant 0 : index
    %c0_389 = arith.constant 0 : index
    %c0_390 = arith.constant 0 : index
    %463 = vector.load %arg22[%c0_388, %c0_389, %c0_390] : memref<1x64x32xf32, #tpu.memory_space<vmem>>, vector<1x64x32xf32>
    %464 = vector.shape_cast %463 : vector<1x64x32xf32> to vector<64x32xf32>
    %465 = vector.shape_cast %462 : vector<64x32xf32> to vector<1x64x32xf32>
    tpu.vector_store %arg22[%c0_388, %c0_389, %c0_390], %465 {strides = array<i32>} : memref<1x64x32xf32, #tpu.memory_space<vmem>>, vector<1x64x32xf32>,
    return
  }
  func.func @transform_0(%arg0: i32) -> (i32, i32, i32, i32) {
    %c0_i32 = arith.constant 0 : i32
    %c0_i32_0 = arith.constant 0 : i32
    %c0_i32_1 = arith.constant 0 : i32
    %c0_i32_2 = arith.constant 0 : i32
    return %arg0, %c0_i32, %c0_i32_0, %c0_i32_1 : i32, i32, i32, i32
  }
  func.func @transform_1(%arg0: i32) -> (i32, i32, i32) {
    %c0_i32 = arith.constant 0 : i32
    %c0_i32_0 = arith.constant 0 : i32
    %c0_i32_1 = arith.constant 0 : i32
    return %arg0, %c0_i32, %c0_i32_0 : i32, i32, i32
  }
  func.func @transform_2(%arg0: i32) -> (i32, i32, i32) {
    %c0_i32 = arith.constant 0 : i32
    %c0_i32_0 = arith.constant 0 : i32
    %c0_i32_1 = arith.constant 0 : i32
    %c0_i32_2 = arith.constant 0 : i32
    return %c0_i32, %c0_i32_0, %c0_i32_1 : i32, i32, i32
  }
  func.func @transform_3(%arg0: i32) -> (i32, i32) {
    %c0_i32 = arith.constant 0 : i32
    %c0_i32_0 = arith.constant 0 : i32
    %c0_i32_1 = arith.constant 0 : i32
    return %c0_i32, %c0_i32_0 : i32, i32
  }
  func.func @transform_4(%arg0: i32) -> (i32, i32) {
    %c0_i32 = arith.constant 0 : i32
    %c0_i32_0 = arith.constant 0 : i32
    %c0_i32_1 = arith.constant 0 : i32
    return %c0_i32, %c0_i32_0 : i32, i32
  }
  func.func @transform_5(%arg0: i32) -> (i32, i32) {
    %c0_i32 = arith.constant 0 : i32
    %c0_i32_0 = arith.constant 0 : i32
    %c0_i32_1 = arith.constant 0 : i32
    return %c0_i32, %c0_i32_0 : i32, i32
  }
  func.func @transform_6(%arg0: i32) -> (i32, i32) {
    %c0_i32 = arith.constant 0 : i32
    %c0_i32_0 = arith.constant 0 : i32
    %c0_i32_1 = arith.constant 0 : i32
    return %c0_i32, %c0_i32_0 : i32, i32
  }
  func.func @transform_7(%arg0: i32) -> (i32, i32) {
    %c0_i32 = arith.constant 0 : i32
    %c0_i32_0 = arith.constant 0 : i32
    %c0_i32_1 = arith.constant 0 : i32
    return %c0_i32, %c0_i32_0 : i32, i32
  }
  func.func @transform_8(%arg0: i32) -> (i32, i32) {
    %c0_i32 = arith.constant 0 : i32
    %c0_i32_0 = arith.constant 0 : i32
    %c0_i32_1 = arith.constant 0 : i32
    return %c0_i32, %c0_i32_0 : i32, i32
  }
  func.func @transform_9(%arg0: i32) -> (i32, i32) {
    %c0_i32 = arith.constant 0 : i32
    %c0_i32_0 = arith.constant 0 : i32
    %c0_i32_1 = arith.constant 0 : i32
    return %c0_i32, %c0_i32_0 : i32, i32
  }
  func.func @transform_10(%arg0: i32) -> (i32, i32) {
    %c0_i32 = arith.constant 0 : i32
    %c0_i32_0 = arith.constant 0 : i32
    %c0_i32_1 = arith.constant 0 : i32
    return %c0_i32, %c0_i32_0 : i32, i32
  }
  func.func @transform_11(%arg0: i32) -> (i32, i32) {
    %c0_i32 = arith.constant 0 : i32
    %c0_i32_0 = arith.constant 0 : i32
    %c0_i32_1 = arith.constant 0 : i32
    return %c0_i32, %c0_i32_0 : i32, i32
  }
  func.func @transform_12(%arg0: i32) -> (i32, i32) {
    %c0_i32 = arith.constant 0 : i32
    %c0_i32_0 = arith.constant 0 : i32
    %c0_i32_1 = arith.constant 0 : i32
    return %c0_i32, %c0_i32_0 : i32, i32
  }
  func.func @transform_13(%arg0: i32) -> (i32, i32) {
    %c0_i32 = arith.constant 0 : i32
    %c0_i32_0 = arith.constant 0 : i32
    %c0_i32_1 = arith.constant 0 : i32
    return %c0_i32, %c0_i32_0 : i32, i32
  }
  func.func @transform_14(%arg0: i32) -> (i32, i32) {
    %c0_i32 = arith.constant 0 : i32
    %c0_i32_0 = arith.constant 0 : i32
    %c0_i32_1 = arith.constant 0 : i32
    return %c0_i32, %c0_i32_0 : i32, i32
  }
  func.func @transform_15(%arg0: i32) -> (i32, i32) {
    %c0_i32 = arith.constant 0 : i32
    %c0_i32_0 = arith.constant 0 : i32
    %c0_i32_1 = arith.constant 0 : i32
    return %c0_i32, %c0_i32_0 : i32, i32
  }
  func.func @transform_16(%arg0: i32) -> (i32, i32) {
    %c0_i32 = arith.constant 0 : i32
    %c0_i32_0 = arith.constant 0 : i32
    %c0_i32_1 = arith.constant 0 : i32
    return %c0_i32, %c0_i32_0 : i32, i32
  }
  func.func @transform_17(%arg0: i32) -> (i32, i32) {
    %c0_i32 = arith.constant 0 : i32
    %c0_i32_0 = arith.constant 0 : i32
    %c0_i32_1 = arith.constant 0 : i32
    return %c0_i32, %c0_i32_0 : i32, i32
  }
  func.func @transform_18(%arg0: i32) -> (i32, i32) {
    %c0_i32 = arith.constant 0 : i32
    %c0_i32_0 = arith.constant 0 : i32
    %c0_i32_1 = arith.constant 0 : i32
    return %c0_i32, %c0_i32_0 : i32, i32
  }
  func.func @transform_19(%arg0: i32) -> (i32, i32) {
    %c0_i32 = arith.constant 0 : i32
    %c0_i32_0 = arith.constant 0 : i32
    %c0_i32_1 = arith.constant 0 : i32
    return %c0_i32, %c0_i32_0 : i32, i32
  }
  func.func @transform_20(%arg0: i32) -> (i32, i32) {
    %c0_i32 = arith.constant 0 : i32
    %c0_i32_0 = arith.constant 0 : i32
    %c0_i32_1 = arith.constant 0 : i32
    return %c0_i32, %c0_i32_0 : i32, i32
  }
  func.func @transform_21(%arg0: i32) -> (i32, i32, i32) {
    %c0_i32 = arith.constant 0 : i32
    %c0_i32_0 = arith.constant 0 : i32
    %c0_i32_1 = arith.constant 0 : i32
    return %arg0, %c0_i32, %c0_i32_0 : i32, i32, i32
  }
  func.func @transform_22(%arg0: i32) -> (i32, i32, i32) {
    %c0_i32 = arith.constant 0 : i32
    %c0_i32_0 = arith.constant 0 : i32
    %c0_i32_1 = arith.constant 0 : i32
    return %arg0, %c0_i32, %c0_i32_0 : i32, i32, i32
  }
}

</mosaic_0001>

<llo_original>
// kernel: paca_layer_forward.1
$region0: #{paca_layer_forward.1}
  #allocation0 [shape = 'u32[]', space=smem, size = 0x4, offset = 0x4, fixed_abs, tag = 'smem constant byte address 0x4 - core index']
  #allocation1 [shape = 'u32[144,128]{1,0:T(1,128)}', space=vmem, size = 0x12000, scoped, tag = 'internal scratch']
  %s0 = inlined_call_operand.vmem [shape: f32[2,49,64,32], index: 0, kind: input, shape index: {}]
  %s1 = inlined_call_operand.vmem [shape: f32[2,64,32], index: 1, kind: input, shape index: {}]
  %s2 = inlined_call_operand.vmem [shape: f32[49,64,32], index: 2, kind: input, shape index: {}]
  %s3 = inlined_call_operand.vmem [shape: f32[1,32], index: 3, kind: input, shape index: {}]
  %s4 = inlined_call_operand.vmem [shape: f32[32,32], index: 4, kind: input, shape index: {}]
  %s5 = inlined_call_operand.vmem [shape: f32[1,32], index: 5, kind: input, shape index: {}]
  %s6 = inlined_call_operand.vmem [shape: f32[8,32], index: 6, kind: input, shape index: {}]
  %s7 = inlined_call_operand.vmem [shape: f32[8,32], index: 7, kind: input, shape index: {}]
  %s8 = inlined_call_operand.vmem [shape: f32[1,32], index: 8, kind: input, shape index: {}]
  %s9 = inlined_call_operand.vmem [shape: f32[1,32], index: 9, kind: input, shape index: {}]
  %s10 = inlined_call_operand.vmem [shape: f32[32,32], index: 10, kind: input, shape index: {}]
  %s11 = inlined_call_operand.vmem [shape: f32[1,32], index: 11, kind: input, shape index: {}]
  %s12 = inlined_call_operand.vmem [shape: f32[32,32], index: 12, kind: input, shape index: {}]
  %s13 = inlined_call_operand.vmem [shape: f32[1,32], index: 13, kind: input, shape index: {}]
  %s14 = inlined_call_operand.vmem [shape: f32[32,32], index: 14, kind: input, shape index: {}]
  %s15 = inlined_call_operand.vmem [shape: f32[1,32], index: 15, kind: input, shape index: {}]
  %s16 = inlined_call_operand.vmem [shape: f32[32,32], index: 16, kind: input, shape index: {}]
  %s17 = inlined_call_operand.vmem [shape: f32[1,32], index: 17, kind: input, shape index: {}]
  %s18 = inlined_call_operand.vmem [shape: f32[32,8], index: 18, kind: input, shape index: {}]
  %s19 = inlined_call_operand.vmem [shape: f32[32,32], index: 19, kind: input, shape index: {}, may-alias: {19,20}]
  %s20 = inlined_call_operand.vmem [shape: f32[32,32], index: 20, kind: input, shape index: {}, may-alias: {19,20}]
  %s21 = inlined_call_operand.vmem [shape: f32[2,64,32], index: 21, kind: output, shape index: {0}]
  %s22 = inlined_call_operand.hbm [shape: f32[2,8,64], index: 22, kind: output, shape index: {1}]
  %23 = xla_tuple %s21, %s22
  %s24 = sld [smem:[#allocation0]]
  $region125: #{paca_layer_forward.1} parent=0
    _
  %s26 = ssub.s32 1, %s24
  %s27 = scalar_select 0, %s26, %s24
  $region1: #{paca_layer_forward.1} parent=0
    #allocation2 [shape = 'u8[8192]{0}', space=vmem, size = 0x2000, scoped, tag = 'output window, operand 1']
    #allocation3 [shape = 's32[2]{0}', space=sflag, size = 0x8, scoped, tag = 'scoped memory for paca_layer_forward.1']
    %28 = vsyncpa [#allocation3], 0
    %s29 = scalar_lea.sflag [#allocation3], 1
    %30 = vsyncpa %s29, 0
    loop: start=0, step=1, limit=4
    $region2: #{paca_layer_forward.1} parent=1 // loop_pre_header
      _
    $region3: #{paca_layer_forward.1} parent=1 // loop_header
      %s32 = sphi 0, %s36
      %p33 = scmp.ge.s32.totalorder %s32, 4
      %s42 = sphi 0, %s44
      %s45 = sphi 0, %s42
      %s46 = sphi 0, %s45
      %s62 = sphi 0, %s46
      %s68 = sphi 0, %s70
      %s71 = sphi 0, %s68
      %s72 = sphi 0, %s71
      %s88 = sphi 0, %s72
      %s92 = sphi 0, %s92
      %s94 = sphi 0, %s92
      %s95 = sphi 0, %s94
      %s109 = sphi 0, %s95
      %s113 = sphi 0, %s113
      %s115 = sphi 0, %s113
      %s116 = sphi 0, %s115
      %s130 = sphi 0, %s116
      %s134 = sphi 0, %s134
      %s136 = sphi 0, %s134
      %s137 = sphi 0, %s136
      %s151 = sphi 0, %s137
      %s155 = sphi 0, %s155
      %s157 = sphi 0, %s155
      %s158 = sphi 0, %s157
      %s172 = sphi 0, %s158
      %s176 = sphi 0, %s176
      %s178 = sphi 0, %s176
      %s179 = sphi 0, %s178
      %s193 = sphi 0, %s179
      %s197 = sphi 0, %s197
      %s199 = sphi 0, %s197
      %s200 = sphi 0, %s199
      %s214 = sphi 0, %s200
      %s218 = sphi 0, %s218
      %s220 = sphi 0, %s218
      %s221 = sphi 0, %s220
      %s235 = sphi 0, %s221
      %s239 = sphi 0, %s239
      %s241 = sphi 0, %s239
      %s242 = sphi 0, %s241
      %s256 = sphi 0, %s242
      %s260 = sphi 0, %s260
      %s262 = sphi 0, %s260
      %s263 = sphi 0, %s262
      %s277 = sphi 0, %s263
      %s281 = sphi 0, %s281
      %s283 = sphi 0, %s281
      %s284 = sphi 0, %s283
      %s298 = sphi 0, %s284
      %s302 = sphi 0, %s302
      %s304 = sphi 0, %s302
      %s305 = sphi 0, %s304
      %s319 = sphi 0, %s305
      %s323 = sphi 0, %s323
      %s325 = sphi 0, %s323
      %s326 = sphi 0, %s325
      %s340 = sphi 0, %s326
      %s344 = sphi 0, %s344
      %s346 = sphi 0, %s344
      %s347 = sphi 0, %s346
      %s361 = sphi 0, %s347
      %s365 = sphi 0, %s365
      %s367 = sphi 0, %s365
      %s368 = sphi 0, %s367
      %s382 = sphi 0, %s368
      %s386 = sphi 0, %s386
      %s388 = sphi 0, %s386
      %s389 = sphi 0, %s388
      %s403 = sphi 0, %s389
      %s407 = sphi 0, %s407
      %s409 = sphi 0, %s407
      %s410 = sphi 0, %s409
      %s424 = sphi 0, %s410
      %s428 = sphi 0, %s428
      %s430 = sphi 0, %s428
      %s431 = sphi 0, %s430
      %s445 = sphi 0, %s431
      %s449 = sphi 0, %s449
      %s451 = sphi 0, %s449
      %s452 = sphi 0, %s451
      %s466 = sphi 0, %s452
      %s470 = sphi 0, %s470
      %s472 = sphi 0, %s470
      %s473 = sphi 0, %s472
      %s487 = sphi 0, %s473
      %s493 = sphi 0, %s495
      %s496 = sphi 0, %s493
      %s497 = sphi 0, %s496
      %s513 = sphi 0, %s497
      %s519 = sphi 0, %s521
      %s522 = sphi 0, %s519
      %s523 = sphi 0, %s522
      %s539 = sphi 0, %s523
    $region4: #{paca_layer_forward.1} parent=1 // loop_header_branch
      %35 = sbr.rel (%p33) target = $region8
    $region5: #{paca_layer_forward.1} parent=1 // loop_body
      %s37 = ssub.s32 %s32, 1
      %s38 = ssub.s32 %s32, 2
      %s39 = sadd.s32 %s32, 1
      %s40 = ssub.s32 %s32, %s39
      %p41 = scmp.eq.s32.totalorder %s40, 0
      %s43 = sadd.s32 %s42, 1
      %s44 = scalar_select %p41, %s42, %s43
      %p47 = pneg %p41
      %p48 = scmp.eq.s32.totalorder %s32, 1
      %p49 = por %p47, %p48
      %p50 = scmp.ne.s32.totalorder %s42, %s45
      %p51 = scmp.eq.s32.totalorder %s32, 0
      %p52 = por %p50, %p51
      %p53 = scmp.ne.s32.totalorder %s42, %s45
      %p54 = scmp.eq.s32.totalorder %s37, 1
      %p55 = por %p53, %p54
      %p56 = scmp.ne.s32.totalorder %s45, %s46
      %p57 = scmp.eq.s32.totalorder %s37, 0
      %p58 = por %p56, %p57
      %p59 = scmp.ne.s32.totalorder %s45, %s46
      %p60 = scmp.eq.s32.totalorder %s38, 1
      %p61 = por %p59, %p60
      %p63 = scmp.ne.s32.totalorder %s46, %s62
      %p64 = scmp.eq.s32.totalorder %s38, 0
      %p65 = por %p63, %p64
      %s66 = ssub.s32 %s32, %s39
      %p67 = scmp.eq.s32.totalorder %s66, 0
      %s69 = sadd.s32 %s68, 1
      %s70 = scalar_select %p67, %s68, %s69
      %p73 = pneg %p67
      %p74 = scmp.eq.s32.totalorder %s32, 1
      %p75 = por %p73, %p74
      %p76 = scmp.ne.s32.totalorder %s68, %s71
      %p77 = scmp.eq.s32.totalorder %s32, 0
      %p78 = por %p76, %p77
      %p79 = scmp.ne.s32.totalorder %s68, %s71
      %p80 = scmp.eq.s32.totalorder %s37, 1
      %p81 = por %p79, %p80
      %p82 = scmp.ne.s32.totalorder %s71, %s72
      %p83 = scmp.eq.s32.totalorder %s37, 0
      %p84 = por %p82, %p83
      %p85 = scmp.ne.s32.totalorder %s71, %s72
      %p86 = scmp.eq.s32.totalorder %s38, 1
      %p87 = por %p85, %p86
      %p89 = scmp.ne.s32.totalorder %s72, %s88
      %p90 = scmp.eq.s32.totalorder %s38, 0
      %p91 = por %p89, %p90
      %s93 = sadd.s32 %s92, 1
      %p96 = scmp.eq.s32.totalorder %s32, 1
      %p97 = scmp.ne.s32.totalorder %s92, %s94
      %p98 = scmp.eq.s32.totalorder %s32, 0
      %p99 = por %p97, %p98
      %p100 = scmp.ne.s32.totalorder %s92, %s94
      %p101 = scmp.eq.s32.totalorder %s37, 1
      %p102 = por %p100, %p101
      %p103 = scmp.ne.s32.totalorder %s94, %s95
      %p104 = scmp.eq.s32.totalorder %s37, 0
      %p105 = por %p103, %p104
      %p106 = scmp.ne.s32.totalorder %s94, %s95
      %p107 = scmp.eq.s32.totalorder %s38, 1
      %p108 = por %p106, %p107
      %p110 = scmp.ne.s32.totalorder %s95, %s109
      %p111 = scmp.eq.s32.totalorder %s38, 0
      %p112 = por %p110, %p111
      %s114 = sadd.s32 %s113, 1
      %p117 = scmp.eq.s32.totalorder %s32, 1
      %p118 = scmp.ne.s32.totalorder %s113, %s115
      %p119 = scmp.eq.s32.totalorder %s32, 0
      %p120 = por %p118, %p119
      %p121 = scmp.ne.s32.totalorder %s113, %s115
      %p122 = scmp.eq.s32.totalorder %s37, 1
      %p123 = por %p121, %p122
      %p124 = scmp.ne.s32.totalorder %s115, %s116
      %p125 = scmp.eq.s32.totalorder %s37, 0
      %p126 = por %p124, %p125
      %p127 = scmp.ne.s32.totalorder %s115, %s116
      %p128 = scmp.eq.s32.totalorder %s38, 1
      %p129 = por %p127, %p128
      %p131 = scmp.ne.s32.totalorder %s116, %s130
      %p132 = scmp.eq.s32.totalorder %s38, 0
      %p133 = por %p131, %p132
      %s135 = sadd.s32 %s134, 1
      %p138 = scmp.eq.s32.totalorder %s32, 1
      %p139 = scmp.ne.s32.totalorder %s134, %s136
      %p140 = scmp.eq.s32.totalorder %s32, 0
      %p141 = por %p139, %p140
      %p142 = scmp.ne.s32.totalorder %s134, %s136
      %p143 = scmp.eq.s32.totalorder %s37, 1
      %p144 = por %p142, %p143
      %p145 = scmp.ne.s32.totalorder %s136, %s137
      %p146 = scmp.eq.s32.totalorder %s37, 0
      %p147 = por %p145, %p146
      %p148 = scmp.ne.s32.totalorder %s136, %s137
      %p149 = scmp.eq.s32.totalorder %s38, 1
      %p150 = por %p148, %p149
      %p152 = scmp.ne.s32.totalorder %s137, %s151
      %p153 = scmp.eq.s32.totalorder %s38, 0
      %p154 = por %p152, %p153
      %s156 = sadd.s32 %s155, 1
      %p159 = scmp.eq.s32.totalorder %s32, 1
      %p160 = scmp.ne.s32.totalorder %s155, %s157
      %p161 = scmp.eq.s32.totalorder %s32, 0
      %p162 = por %p160, %p161
      %p163 = scmp.ne.s32.totalorder %s155, %s157
      %p164 = scmp.eq.s32.totalorder %s37, 1
      %p165 = por %p163, %p164
      %p166 = scmp.ne.s32.totalorder %s157, %s158
      %p167 = scmp.eq.s32.totalorder %s37, 0
      %p168 = por %p166, %p167
      %p169 = scmp.ne.s32.totalorder %s157, %s158
      %p170 = scmp.eq.s32.totalorder %s38, 1
      %p171 = por %p169, %p170
      %p173 = scmp.ne.s32.totalorder %s158, %s172
      %p174 = scmp.eq.s32.totalorder %s38, 0
      %p175 = por %p173, %p174
      %s177 = sadd.s32 %s176, 1
      %p180 = scmp.eq.s32.totalorder %s32, 1
      %p181 = scmp.ne.s32.totalorder %s176, %s178
      %p182 = scmp.eq.s32.totalorder %s32, 0
      %p183 = por %p181, %p182
      %p184 = scmp.ne.s32.totalorder %s176, %s178
      %p185 = scmp.eq.s32.totalorder %s37, 1
      %p186 = por %p184, %p185
      %p187 = scmp.ne.s32.totalorder %s178, %s179
      %p188 = scmp.eq.s32.totalorder %s37, 0
      %p189 = por %p187, %p188
      %p190 = scmp.ne.s32.totalorder %s178, %s179
      %p191 = scmp.eq.s32.totalorder %s38, 1
      %p192 = por %p190, %p191
      %p194 = scmp.ne.s32.totalorder %s179, %s193
      %p195 = scmp.eq.s32.totalorder %s38, 0
      %p196 = por %p194, %p195
      %s198 = sadd.s32 %s197, 1
      %p201 = scmp.eq.s32.totalorder %s32, 1
      %p202 = scmp.ne.s32.totalorder %s197, %s199
      %p203 = scmp.eq.s32.totalorder %s32, 0
      %p204 = por %p202, %p203
      %p205 = scmp.ne.s32.totalorder %s197, %s199
      %p206 = scmp.eq.s32.totalorder %s37, 1
      %p207 = por %p205, %p206
      %p208 = scmp.ne.s32.totalorder %s199, %s200
      %p209 = scmp.eq.s32.totalorder %s37, 0
      %p210 = por %p208, %p209
      %p211 = scmp.ne.s32.totalorder %s199, %s200
      %p212 = scmp.eq.s32.totalorder %s38, 1
      %p213 = por %p211, %p212
      %p215 = scmp.ne.s32.totalorder %s200, %s214
      %p216 = scmp.eq.s32.totalorder %s38, 0
      %p217 = por %p215, %p216
      %s219 = sadd.s32 %s218, 1
      %p222 = scmp.eq.s32.totalorder %s32, 1
      %p223 = scmp.ne.s32.totalorder %s218, %s220
      %p224 = scmp.eq.s32.totalorder %s32, 0
      %p225 = por %p223, %p224
      %p226 = scmp.ne.s32.totalorder %s218, %s220
      %p227 = scmp.eq.s32.totalorder %s37, 1
      %p228 = por %p226, %p227
      %p229 = scmp.ne.s32.totalorder %s220, %s221
      %p230 = scmp.eq.s32.totalorder %s37, 0
      %p231 = por %p229, %p230
      %p232 = scmp.ne.s32.totalorder %s220, %s221
      %p233 = scmp.eq.s32.totalorder %s38, 1
      %p234 = por %p232, %p233
      %p236 = scmp.ne.s32.totalorder %s221, %s235
      %p237 = scmp.eq.s32.totalorder %s38, 0
      %p238 = por %p236, %p237
      %s240 = sadd.s32 %s239, 1
      %p243 = scmp.eq.s32.totalorder %s32, 1
      %p244 = scmp.ne.s32.totalorder %s239, %s241
      %p245 = scmp.eq.s32.totalorder %s32, 0
      %p246 = por %p244, %p245
      %p247 = scmp.ne.s32.totalorder %s239, %s241
      %p248 = scmp.eq.s32.totalorder %s37, 1
      %p249 = por %p247, %p248
      %p250 = scmp.ne.s32.totalorder %s241, %s242
      %p251 = scmp.eq.s32.totalorder %s37, 0
      %p252 = por %p250, %p251
      %p253 = scmp.ne.s32.totalorder %s241, %s242
      %p254 = scmp.eq.s32.totalorder %s38, 1
      %p255 = por %p253, %p254
      %p257 = scmp.ne.s32.totalorder %s242, %s256
      %p258 = scmp.eq.s32.totalorder %s38, 0
      %p259 = por %p257, %p258
      %s261 = sadd.s32 %s260, 1
      %p264 = scmp.eq.s32.totalorder %s32, 1
      %p265 = scmp.ne.s32.totalorder %s260, %s262
      %p266 = scmp.eq.s32.totalorder %s32, 0
      %p267 = por %p265, %p266
      %p268 = scmp.ne.s32.totalorder %s260, %s262
      %p269 = scmp.eq.s32.totalorder %s37, 1
      %p270 = por %p268, %p269
      %p271 = scmp.ne.s32.totalorder %s262, %s263
      %p272 = scmp.eq.s32.totalorder %s37, 0
      %p273 = por %p271, %p272
      %p274 = scmp.ne.s32.totalorder %s262, %s263
      %p275 = scmp.eq.s32.totalorder %s38, 1
      %p276 = por %p274, %p275
      %p278 = scmp.ne.s32.totalorder %s263, %s277
      %p279 = scmp.eq.s32.totalorder %s38, 0
      %p280 = por %p278, %p279
      %s282 = sadd.s32 %s281, 1
      %p285 = scmp.eq.s32.totalorder %s32, 1
      %p286 = scmp.ne.s32.totalorder %s281, %s283
      %p287 = scmp.eq.s32.totalorder %s32, 0
      %p288 = por %p286, %p287
      %p289 = scmp.ne.s32.totalorder %s281, %s283
      %p290 = scmp.eq.s32.totalorder %s37, 1
      %p291 = por %p289, %p290
      %p292 = scmp.ne.s32.totalorder %s283, %s284
      %p293 = scmp.eq.s32.totalorder %s37, 0
      %p294 = por %p292, %p293
      %p295 = scmp.ne.s32.totalorder %s283, %s284
      %p296 = scmp.eq.s32.totalorder %s38, 1
      %p297 = por %p295, %p296
      %p299 = scmp.ne.s32.totalorder %s284, %s298
      %p300 = scmp.eq.s32.totalorder %s38, 0
      %p301 = por %p299, %p300
      %s303 = sadd.s32 %s302, 1
      %p306 = scmp.eq.s32.totalorder %s32, 1
      %p307 = scmp.ne.s32.totalorder %s302, %s304
      %p308 = scmp.eq.s32.totalorder %s32, 0
      %p309 = por %p307, %p308
      %p310 = scmp.ne.s32.totalorder %s302, %s304
      %p311 = scmp.eq.s32.totalorder %s37, 1
      %p312 = por %p310, %p311
      %p313 = scmp.ne.s32.totalorder %s304, %s305
      %p314 = scmp.eq.s32.totalorder %s37, 0
      %p315 = por %p313, %p314
      %p316 = scmp.ne.s32.totalorder %s304, %s305
      %p317 = scmp.eq.s32.totalorder %s38, 1
      %p318 = por %p316, %p317
      %p320 = scmp.ne.s32.totalorder %s305, %s319
      %p321 = scmp.eq.s32.totalorder %s38, 0
      %p322 = por %p320, %p321
      %s324 = sadd.s32 %s323, 1
      %p327 = scmp.eq.s32.totalorder %s32, 1
      %p328 = scmp.ne.s32.totalorder %s323, %s325
      %p329 = scmp.eq.s32.totalorder %s32, 0
      %p330 = por %p328, %p329
      %p331 = scmp.ne.s32.totalorder %s323, %s325
      %p332 = scmp.eq.s32.totalorder %s37, 1
      %p333 = por %p331, %p332
      %p334 = scmp.ne.s32.totalorder %s325, %s326
      %p335 = scmp.eq.s32.totalorder %s37, 0
      %p336 = por %p334, %p335
      %p337 = scmp.ne.s32.totalorder %s325, %s326
      %p338 = scmp.eq.s32.totalorder %s38, 1
      %p339 = por %p337, %p338
      %p341 = scmp.ne.s32.totalorder %s326, %s340
      %p342 = scmp.eq.s32.totalorder %s38, 0
      %p343 = por %p341, %p342
      %s345 = sadd.s32 %s344, 1
      %p348 = scmp.eq.s32.totalorder %s32, 1
      %p349 = scmp.ne.s32.totalorder %s344, %s346
      %p350 = scmp.eq.s32.totalorder %s32, 0
      %p351 = por %p349, %p350
      %p352 = scmp.ne.s32.totalorder %s344, %s346
      %p353 = scmp.eq.s32.totalorder %s37, 1
      %p354 = por %p352, %p353
      %p355 = scmp.ne.s32.totalorder %s346, %s347
      %p356 = scmp.eq.s32.totalorder %s37, 0
      %p357 = por %p355, %p356
      %p358 = scmp.ne.s32.totalorder %s346, %s347
      %p359 = scmp.eq.s32.totalorder %s38, 1
      %p360 = por %p358, %p359
      %p362 = scmp.ne.s32.totalorder %s347, %s361
      %p363 = scmp.eq.s32.totalorder %s38, 0
      %p364 = por %p362, %p363
      %s366 = sadd.s32 %s365, 1
      %p369 = scmp.eq.s32.totalorder %s32, 1
      %p370 = scmp.ne.s32.totalorder %s365, %s367
      %p371 = scmp.eq.s32.totalorder %s32, 0
      %p372 = por %p370, %p371
      %p373 = scmp.ne.s32.totalorder %s365, %s367
      %p374 = scmp.eq.s32.totalorder %s37, 1
      %p375 = por %p373, %p374
      %p376 = scmp.ne.s32.totalorder %s367, %s368
      %p377 = scmp.eq.s32.totalorder %s37, 0
      %p378 = por %p376, %p377
      %p379 = scmp.ne.s32.totalorder %s367, %s368
      %p380 = scmp.eq.s32.totalorder %s38, 1
      %p381 = por %p379, %p380
      %p383 = scmp.ne.s32.totalorder %s368, %s382
      %p384 = scmp.eq.s32.totalorder %s38, 0
      %p385 = por %p383, %p384
      %s387 = sadd.s32 %s386, 1
      %p390 = scmp.eq.s32.totalorder %s32, 1
      %p391 = scmp.ne.s32.totalorder %s386, %s388
      %p392 = scmp.eq.s32.totalorder %s32, 0
      %p393 = por %p391, %p392
      %p394 = scmp.ne.s32.totalorder %s386, %s388
      %p395 = scmp.eq.s32.totalorder %s37, 1
      %p396 = por %p394, %p395
      %p397 = scmp.ne.s32.totalorder %s388, %s389
      %p398 = scmp.eq.s32.totalorder %s37, 0
      %p399 = por %p397, %p398
      %p400 = scmp.ne.s32.totalorder %s388, %s389
      %p401 = scmp.eq.s32.totalorder %s38, 1
      %p402 = por %p400, %p401
      %p404 = scmp.ne.s32.totalorder %s389, %s403
      %p405 = scmp.eq.s32.totalorder %s38, 0
      %p406 = por %p404, %p405
      %s408 = sadd.s32 %s407, 1
      %p411 = scmp.eq.s32.totalorder %s32, 1
      %p412 = scmp.ne.s32.totalorder %s407, %s409
      %p413 = scmp.eq.s32.totalorder %s32, 0
      %p414 = por %p412, %p413
      %p415 = scmp.ne.s32.totalorder %s407, %s409
      %p416 = scmp.eq.s32.totalorder %s37, 1
      %p417 = por %p415, %p416
      %p418 = scmp.ne.s32.totalorder %s409, %s410
      %p419 = scmp.eq.s32.totalorder %s37, 0
      %p420 = por %p418, %p419
      %p421 = scmp.ne.s32.totalorder %s409, %s410
      %p422 = scmp.eq.s32.totalorder %s38, 1
      %p423 = por %p421, %p422
      %p425 = scmp.ne.s32.totalorder %s410, %s424
      %p426 = scmp.eq.s32.totalorder %s38, 0
      %p427 = por %p425, %p426
      %s429 = sadd.s32 %s428, 1
      %p432 = scmp.eq.s32.totalorder %s32, 1
      %p433 = scmp.ne.s32.totalorder %s428, %s430
      %p434 = scmp.eq.s32.totalorder %s32, 0
      %p435 = por %p433, %p434
      %p436 = scmp.ne.s32.totalorder %s428, %s430
      %p437 = scmp.eq.s32.totalorder %s37, 1
      %p438 = por %p436, %p437
      %p439 = scmp.ne.s32.totalorder %s430, %s431
      %p440 = scmp.eq.s32.totalorder %s37, 0
      %p441 = por %p439, %p440
      %p442 = scmp.ne.s32.totalorder %s430, %s431
      %p443 = scmp.eq.s32.totalorder %s38, 1
      %p444 = por %p442, %p443
      %p446 = scmp.ne.s32.totalorder %s431, %s445
      %p447 = scmp.eq.s32.totalorder %s38, 0
      %p448 = por %p446, %p447
      %s450 = sadd.s32 %s449, 1
      %p453 = scmp.eq.s32.totalorder %s32, 1
      %p454 = scmp.ne.s32.totalorder %s449, %s451
      %p455 = scmp.eq.s32.totalorder %s32, 0
      %p456 = por %p454, %p455
      %p457 = scmp.ne.s32.totalorder %s449, %s451
      %p458 = scmp.eq.s32.totalorder %s37, 1
      %p459 = por %p457, %p458
      %p460 = scmp.ne.s32.totalorder %s451, %s452
      %p461 = scmp.eq.s32.totalorder %s37, 0
      %p462 = por %p460, %p461
      %p463 = scmp.ne.s32.totalorder %s451, %s452
      %p464 = scmp.eq.s32.totalorder %s38, 1
      %p465 = por %p463, %p464
      %p467 = scmp.ne.s32.totalorder %s452, %s466
      %p468 = scmp.eq.s32.totalorder %s38, 0
      %p469 = por %p467, %p468
      %s471 = sadd.s32 %s470, 1
      %p474 = scmp.eq.s32.totalorder %s32, 1
      %p475 = scmp.ne.s32.totalorder %s470, %s472
      %p476 = scmp.eq.s32.totalorder %s32, 0
      %p477 = por %p475, %p476
      %p478 = scmp.ne.s32.totalorder %s470, %s472
      %p479 = scmp.eq.s32.totalorder %s37, 1
      %p480 = por %p478, %p479
      %p481 = scmp.ne.s32.totalorder %s472, %s473
      %p482 = scmp.eq.s32.totalorder %s37, 0
      %p483 = por %p481, %p482
      %p484 = scmp.ne.s32.totalorder %s472, %s473
      %p485 = scmp.eq.s32.totalorder %s38, 1
      %p486 = por %p484, %p485
      %p488 = scmp.ne.s32.totalorder %s473, %s487
      %p489 = scmp.eq.s32.totalorder %s38, 0
      %p490 = por %p488, %p489
      %s491 = ssub.s32 %s32, %s39
      %p492 = scmp.eq.s32.totalorder %s491, 0
      %s494 = sadd.s32 %s493, 1
      %s495 = scalar_select %p492, %s493, %s494
      %p498 = pneg %p492
      %p499 = scmp.eq.s32.totalorder %s32, 1
      %p500 = por %p498, %p499
      %p501 = scmp.ne.s32.totalorder %s493, %s496
      %p502 = scmp.eq.s32.totalorder %s32, 0
      %p503 = por %p501, %p502
      %p504 = scmp.ne.s32.totalorder %s493, %s496
      %p505 = scmp.eq.s32.totalorder %s37, 1
      %p506 = por %p504, %p505
      %p507 = scmp.ne.s32.totalorder %s496, %s497
      %p508 = scmp.eq.s32.totalorder %s37, 0
      %p509 = por %p507, %p508
      %p510 = scmp.ne.s32.totalorder %s496, %s497
      %p511 = scmp.eq.s32.totalorder %s38, 1
      %p512 = por %p510, %p511
      %p514 = scmp.ne.s32.totalorder %s497, %s513
      %p515 = scmp.eq.s32.totalorder %s38, 0
      %p516 = por %p514, %p515
      %s517 = ssub.s32 %s32, %s39
      %p518 = scmp.eq.s32.totalorder %s517, 0
      %s520 = sadd.s32 %s519, 1
      %s521 = scalar_select %p518, %s519, %s520
      %p524 = pneg %p518
      %p525 = scmp.eq.s32.totalorder %s32, 1
      %p526 = por %p524, %p525
      %p527 = scmp.ne.s32.totalorder %s519, %s522
      %p528 = scmp.eq.s32.totalorder %s32, 0
      %p529 = por %p527, %p528
      %p530 = scmp.ne.s32.totalorder %s519, %s522
      %p531 = scmp.eq.s32.totalorder %s37, 1
      %p532 = por %p530, %p531
      %p533 = scmp.ne.s32.totalorder %s522, %s523
      %p534 = scmp.eq.s32.totalorder %s37, 0
      %p535 = por %p533, %p534
      %p536 = scmp.ne.s32.totalorder %s522, %s523
      %p537 = scmp.eq.s32.totalorder %s38, 1
      %p538 = por %p536, %p537
      %p540 = scmp.ne.s32.totalorder %s523, %s539
      %p541 = scmp.eq.s32.totalorder %s38, 0
      %p542 = por %p540, %p541
      %p543 = scmp.le.s32.totalorder 1, %s32
      %p544 = scmp.lt.s32.totalorder %s32, 3
      %p545 = pnand %p543, %p544
      %p546 = pneg %p545
      // Predicated region
      $region9: #{paca_layer_forward.1} parent=5 // pred_check
        _
      $region10: #{paca_layer_forward.1} parent=5 // pred_check_branch
        %548 = sbr.rel (%p545) target = $region12
      $region11: #{paca_layer_forward.1} parent=5 // pred_region
        %s549 = ssub.s32 %s32, 1
        // Predicated region
        $region13: #{paca_layer_forward.1} parent=11 // pred_check
          %p550 = pneg %p105
        $region14: #{paca_layer_forward.1} parent=11 // pred_check_branch
          %552 = sbr.rel (%p550) target = $region16
        $region15: #{paca_layer_forward.1} parent=11 // pred_region
          _
        $region16: #{paca_layer_forward.1} parent=11 // pred_fallthru
          _
        // Predicated region
        $region17: #{paca_layer_forward.1} parent=11 // pred_check
          %p553 = pneg %p126
        $region18: #{paca_layer_forward.1} parent=11 // pred_check_branch
          %555 = sbr.rel (%p553) target = $region20
        $region19: #{paca_layer_forward.1} parent=11 // pred_region
          _
        $region20: #{paca_layer_forward.1} parent=11 // pred_fallthru
          _
        // Predicated region
        $region21: #{paca_layer_forward.1} parent=11 // pred_check
          %p556 = pneg %p147
        $region22: #{paca_layer_forward.1} parent=11 // pred_check_branch
          %558 = sbr.rel (%p556) target = $region24
        $region23: #{paca_layer_forward.1} parent=11 // pred_region
          _
        $region24: #{paca_layer_forward.1} parent=11 // pred_fallthru
          _
        // Predicated region
        $region25: #{paca_layer_forward.1} parent=11 // pred_check
          %p559 = pneg %p168
        $region26: #{paca_layer_forward.1} parent=11 // pred_check_branch
          %561 = sbr.rel (%p559) target = $region28
        $region27: #{paca_layer_forward.1} parent=11 // pred_region
          _
        $region28: #{paca_layer_forward.1} parent=11 // pred_fallthru
          _
        // Predicated region
        $region29: #{paca_layer_forward.1} parent=11 // pred_check
          %p562 = pneg %p189
        $region30: #{paca_layer_forward.1} parent=11 // pred_check_branch
          %564 = sbr.rel (%p562) target = $region32
        $region31: #{paca_layer_forward.1} parent=11 // pred_region
          _
        $region32: #{paca_layer_forward.1} parent=11 // pred_fallthru
          _
        // Predicated region
        $region33: #{paca_layer_forward.1} parent=11 // pred_check
          %p565 = pneg %p210
        $region34: #{paca_layer_forward.1} parent=11 // pred_check_branch
          %567 = sbr.rel (%p565) target = $region36
        $region35: #{paca_layer_forward.1} parent=11 // pred_region
          _
        $region36: #{paca_layer_forward.1} parent=11 // pred_fallthru
          _
        // Predicated region
        $region37: #{paca_layer_forward.1} parent=11 // pred_check
          %p568 = pneg %p231
        $region38: #{paca_layer_forward.1} parent=11 // pred_check_branch
          %570 = sbr.rel (%p568) target = $region40
        $region39: #{paca_layer_forward.1} parent=11 // pred_region
          _
        $region40: #{paca_layer_forward.1} parent=11 // pred_fallthru
          _
        // Predicated region
        $region41: #{paca_layer_forward.1} parent=11 // pred_check
          %p571 = pneg %p252
        $region42: #{paca_layer_forward.1} parent=11 // pred_check_branch
          %573 = sbr.rel (%p571) target = $region44
        $region43: #{paca_layer_forward.1} parent=11 // pred_region
          _
        $region44: #{paca_layer_forward.1} parent=11 // pred_fallthru
          _
        // Predicated region
        $region45: #{paca_layer_forward.1} parent=11 // pred_check
          %p574 = pneg %p273
        $region46: #{paca_layer_forward.1} parent=11 // pred_check_branch
          %576 = sbr.rel (%p574) target = $region48
        $region47: #{paca_layer_forward.1} parent=11 // pred_region
          _
        $region48: #{paca_layer_forward.1} parent=11 // pred_fallthru
          _
        // Predicated region
        $region49: #{paca_layer_forward.1} parent=11 // pred_check
          %p577 = pneg %p294
        $region50: #{paca_layer_forward.1} parent=11 // pred_check_branch
          %579 = sbr.rel (%p577) target = $region52
        $region51: #{paca_layer_forward.1} parent=11 // pred_region
          _
        $region52: #{paca_layer_forward.1} parent=11 // pred_fallthru
          _
        // Predicated region
        $region53: #{paca_layer_forward.1} parent=11 // pred_check
          %p580 = pneg %p315
        $region54: #{paca_layer_forward.1} parent=11 // pred_check_branch
          %582 = sbr.rel (%p580) target = $region56
        $region55: #{paca_layer_forward.1} parent=11 // pred_region
          _
        $region56: #{paca_layer_forward.1} parent=11 // pred_fallthru
          _
        // Predicated region
        $region57: #{paca_layer_forward.1} parent=11 // pred_check
          %p583 = pneg %p336
        $region58: #{paca_layer_forward.1} parent=11 // pred_check_branch
          %585 = sbr.rel (%p583) target = $region60
        $region59: #{paca_layer_forward.1} parent=11 // pred_region
          _
        $region60: #{paca_layer_forward.1} parent=11 // pred_fallthru
          _
        // Predicated region
        $region61: #{paca_layer_forward.1} parent=11 // pred_check
          %p586 = pneg %p357
        $region62: #{paca_layer_forward.1} parent=11 // pred_check_branch
          %588 = sbr.rel (%p586) target = $region64
        $region63: #{paca_layer_forward.1} parent=11 // pred_region
          _
        $region64: #{paca_layer_forward.1} parent=11 // pred_fallthru
          _
        // Predicated region
        $region65: #{paca_layer_forward.1} parent=11 // pred_check
          %p589 = pneg %p378
        $region66: #{paca_layer_forward.1} parent=11 // pred_check_branch
          %591 = sbr.rel (%p589) target = $region68
        $region67: #{paca_layer_forward.1} parent=11 // pred_region
          _
        $region68: #{paca_layer_forward.1} parent=11 // pred_fallthru
          _
        // Predicated region
        $region69: #{paca_layer_forward.1} parent=11 // pred_check
          %p592 = pneg %p399
        $region70: #{paca_layer_forward.1} parent=11 // pred_check_branch
          %594 = sbr.rel (%p592) target = $region72
        $region71: #{paca_layer_forward.1} parent=11 // pred_region
          _
        $region72: #{paca_layer_forward.1} parent=11 // pred_fallthru
          _
        // Predicated region
        $region73: #{paca_layer_forward.1} parent=11 // pred_check
          %p595 = pneg %p420
        $region74: #{paca_layer_forward.1} parent=11 // pred_check_branch
          %597 = sbr.rel (%p595) target = $region76
        $region75: #{paca_layer_forward.1} parent=11 // pred_region
          _
        $region76: #{paca_layer_forward.1} parent=11 // pred_fallthru
          _
        // Predicated region
        $region77: #{paca_layer_forward.1} parent=11 // pred_check
          %p598 = pneg %p441
        $region78: #{paca_layer_forward.1} parent=11 // pred_check_branch
          %600 = sbr.rel (%p598) target = $region80
        $region79: #{paca_layer_forward.1} parent=11 // pred_region
          _
        $region80: #{paca_layer_forward.1} parent=11 // pred_fallthru
          _
        // Predicated region
        $region81: #{paca_layer_forward.1} parent=11 // pred_check
          %p601 = pneg %p462
        $region82: #{paca_layer_forward.1} parent=11 // pred_check_branch
          %603 = sbr.rel (%p601) target = $region84
        $region83: #{paca_layer_forward.1} parent=11 // pred_region
          _
        $region84: #{paca_layer_forward.1} parent=11 // pred_fallthru
          _
        // Predicated region
        $region85: #{paca_layer_forward.1} parent=11 // pred_check
          %p604 = pneg %p483
        $region86: #{paca_layer_forward.1} parent=11 // pred_check_branch
          %606 = sbr.rel (%p604) target = $region88
        $region87: #{paca_layer_forward.1} parent=11 // pred_region
          _
        $region88: #{paca_layer_forward.1} parent=11 // pred_fallthru
          _
      $region12: #{paca_layer_forward.1} parent=5 // pred_fallthru
        _
      %p607 = scmp.lt.s32.totalorder %s32, 2
      // Predicated region
      $region89: #{paca_layer_forward.1} parent=5 // pred_check
        %p608 = pneg %p607
      $region90: #{paca_layer_forward.1} parent=5 // pred_check_branch
        %610 = sbr.rel (%p608) target = $region92
      $region91: #{paca_layer_forward.1} parent=5 // pred_region
        // Predicated region
        $region93: #{paca_layer_forward.1} parent=91 // pred_check
          %p611 = pneg %p52
        $region94: #{paca_layer_forward.1} parent=91 // pred_check_branch
          %613 = sbr.rel (%p611) target = $region96
        $region95: #{paca_layer_forward.1} parent=91 // pred_region
          %p614 = scmp.lt.s32.totalorder %s32, 1
          %s615 = scalar_select %p614, %s32, 1
          %s616 = smul.addr %s615, 392
          %s617 = smul.addr %s616, 8
          %s618 = scalar_lea.vmem %s0, %s617
        $region96: #{paca_layer_forward.1} parent=91 // pred_fallthru
          _
        // Predicated region
        $region97: #{paca_layer_forward.1} parent=91 // pred_check
          %p619 = pneg %p78
        $region98: #{paca_layer_forward.1} parent=91 // pred_check_branch
          %621 = sbr.rel (%p619) target = $region100
        $region99: #{paca_layer_forward.1} parent=91 // pred_region
          %p622 = scmp.lt.s32.totalorder %s32, 1
          %s623 = scalar_select %p622, %s32, 1
          %s624 = smul.addr %s623, 8
          %s625 = smul.addr %s624, 8
          %s626 = scalar_lea.vmem %s1, %s625
        $region100: #{paca_layer_forward.1} parent=91 // pred_fallthru
          _
      $region92: #{paca_layer_forward.1} parent=5 // pred_fallthru
        _
      %p627 = scmp.le.s32.totalorder 1, %s32
      %p628 = scmp.lt.s32.totalorder %s32, 3
      %p629 = pnand %p627, %p628
      %p630 = pneg %p629
      // Predicated region
      $region101: #{paca_layer_forward.1} parent=5 // pred_check
        _
      $region102: #{paca_layer_forward.1} parent=5 // pred_check_branch
        %632 = sbr.rel (%p629) target = $region104
      $region103: #{paca_layer_forward.1} parent=5 // pred_region
        %s633 = ssub.s32 %s32, 1
        %p634 = scmp.lt.s32.totalorder %s37, 1
        %s635 = scalar_select %p634, %s37, 1
        %s636 = smul.addr %s635, 392
        %s637 = smul.addr %s636, 8
        %s638 = scalar_lea.vmem %s0, %s637
        %p639 = pneg %p58
        %p640 = pneg %p55
        %p641 = scmp.lt.s32.totalorder %s37, 1
        %s642 = scalar_select %p641, %s37, 1
        %s643 = smul.addr %s642, 8
        %s644 = smul.addr %s643, 8
        %s645 = scalar_lea.vmem %s1, %s644
        %p646 = pneg %p84
        %p647 = pneg %p81
        %p648 = pneg %p105
        %p649 = pneg %p102
        %p650 = pneg %p126
        %p651 = pneg %p123
        %p652 = pneg %p147
        %p653 = pneg %p144
        %p654 = pneg %p168
        %p655 = pneg %p165
        %p656 = pneg %p189
        %p657 = pneg %p186
        %p658 = pneg %p210
        %p659 = pneg %p207
        %p660 = pneg %p231
        %p661 = pneg %p228
        %p662 = pneg %p252
        %p663 = pneg %p249
        %p664 = pneg %p273
        %p665 = pneg %p270
        %p666 = pneg %p294
        %p667 = pneg %p291
        %p668 = pneg %p315
        %p669 = pneg %p312
        %p670 = pneg %p336
        %p671 = pneg %p333
        %p672 = pneg %p357
        %p673 = pneg %p354
        %p674 = pneg %p378
        %p675 = pneg %p375
        %p676 = pneg %p399
        %p677 = pneg %p396
        %p678 = pneg %p420
        %p679 = pneg %p417
        %p680 = pneg %p441
        %p681 = pneg %p438
        %p682 = pneg %p462
        %p683 = pneg %p459
        %p684 = pneg %p483
        %p685 = pneg %p480
        %p686 = pneg %p509
        %p687 = pneg %p506
        %p688 = scmp.lt.s32.totalorder %s37, 1
        %s689 = scalar_select %p688, %s37, 1
        %s690 = smul.addr %s689, 8
        %s691 = smul.addr %s690, 8
        %s692 = scalar_lea.vmem %s21, %s691
        %p693 = pneg %p535
        %p694 = pneg %p532
        %s695 = sand.u32 %s522, 1
        %s696 = scalar_lea.sflag [#allocation3], %s695
        %s697 = sand.u32 %s522, 1
        %s698 = smul.addr %s697, 8
        %s699 = scalar_lea.vmem [#allocation2], %s698
        %p700 = scmp.lt.s32.totalorder %s37, 1
        %s701 = scalar_select %p700, %s37, 1
        %s702 = smul.addr %s701, 392
        %s703 = smul.addr %s702, 8
        %s704 = scalar_lea.vmem %s0, %s703
        %p705 = scmp.lt.s32.totalorder %s37, 1
        %s706 = scalar_select %p705, %s37, 1
        %s707 = smul.addr %s706, 8
        %s708 = smul.addr %s707, 8
        %s709 = scalar_lea.vmem %s1, %s708
        %p710 = scmp.lt.s32.totalorder %s37, 1
        %s711 = scalar_select %p710, %s37, 1
        %s712 = smul.addr %s711, 8
        %s713 = smul.addr %s712, 8
        %s714 = scalar_lea.vmem %s21, %s713
        %v715 = vld [vmem:[%s709] sm:$0xff]
        %v716 = vld [vmem:[%s709 + $0x8] sm:$0xff]
        %v717 = vld [vmem:[%s709 + $0x10] sm:$0xff]
        %v718 = vld [vmem:[%s709 + $0x18] sm:$0xff]
        %v719 = vld [vmem:[%s709 + $0x20] sm:$0xff]
        %v720 = vld [vmem:[%s709 + $0x28] sm:$0xff]
        %v721 = vld [vmem:[%s709 + $0x30] sm:$0xff]
        %v722 = vld [vmem:[%s709 + $0x38] sm:$0xff]
        %v723 = vld [vmem:[%s3] sm:$0x1]
        %v724 = vld [vmem:[%s5] sm:$0x1]
        %v725 = vld [vmem:[%s7] sm:$0xff]
        %v726 = vld [vmem:[%s8] sm:$0x1]
        %v727 = vld [vmem:[%s9] sm:$0x1]
        %v728 = vld [vmem:[%s11] sm:$0x1]
        %v729 = vld [vmem:[%s13] sm:$0x1]
        %v730 = vld [vmem:[%s15] sm:$0x1]
        %v731 = vld [vmem:[%s17] sm:$0x1]
        %v732 = vld [vmem:[%s18] sm:$0xff]
        %v733 = vld [vmem:[%s18 + $0x8] sm:$0xff]
        %v734 = vld [vmem:[%s18 + $0x10] sm:$0xff]
        %v735 = vld [vmem:[%s18 + $0x18] sm:$0xff]
        %v736 = vld [vmem:[%s19] sm:$0xff]
        %v737 = vld [vmem:[%s19 + $0x8] sm:$0xff]
        %v738 = vld [vmem:[%s19 + $0x10] sm:$0xff]
        %v739 = vld [vmem:[%s19 + $0x18] sm:$0xff]
        %v740 = vld [vmem:[%s20] sm:$0xff]
        %v741 = vld [vmem:[%s20 + $0x8] sm:$0xff]
        %v742 = vld [vmem:[%s20 + $0x10] sm:$0xff]
        %v743 = vld [vmem:[%s20 + $0x18] sm:$0xff]
        %v744 = vld [vmem:[%s704] sm:$0xff]
        %v745 = vld [vmem:[%s704 + $0x8] sm:$0xff]
        %v746 = vld [vmem:[%s704 + $0x10] sm:$0xff]
        %v747 = vld [vmem:[%s704 + $0x18] sm:$0xff]
        %v748 = vld [vmem:[%s704 + $0x20] sm:$0xff]
        %v749 = vld [vmem:[%s704 + $0x28] sm:$0xff]
        %v750 = vld [vmem:[%s704 + $0x30] sm:$0xff]
        %v751 = vld [vmem:[%s704 + $0x38] sm:$0xff]
        %v752 = vld [vmem:[%s2] sm:$0xff]
        %v753 = vld [vmem:[%s2 + $0x8] sm:$0xff]
        %v754 = vld [vmem:[%s2 + $0x10] sm:$0xff]
        %v755 = vld [vmem:[%s2 + $0x18] sm:$0xff]
        %v756 = vld [vmem:[%s2 + $0x20] sm:$0xff]
        %v757 = vld [vmem:[%s2 + $0x28] sm:$0xff]
        %v758 = vld [vmem:[%s2 + $0x30] sm:$0xff]
        %v759 = vld [vmem:[%s2 + $0x38] sm:$0xff]
        %v760 = vmul.f32 %v744, %v752
        %v761 = vmul.f32 %v745, %v753
        %v762 = vmul.f32 %v746, %v754
        %v763 = vmul.f32 %v747, %v755
        %v764 = vmul.f32 %v748, %v756
        %v765 = vmul.f32 %v749, %v757
        %v766 = vmul.f32 %v750, %v758
        %v767 = vmul.f32 %v751, %v759
        %s768 = scalar_lea.vmem %s704, 64
        %v769 = vld [vmem:[%s768] sm:$0xff]
        %v770 = vld [vmem:[%s768 + $0x8] sm:$0xff]
        %v771 = vld [vmem:[%s768 + $0x10] sm:$0xff]
        %v772 = vld [vmem:[%s768 + $0x18] sm:$0xff]
        %v773 = vld [vmem:[%s768 + $0x20] sm:$0xff]
        %v774 = vld [vmem:[%s768 + $0x28] sm:$0xff]
        %v775 = vld [vmem:[%s768 + $0x30] sm:$0xff]
        %v776 = vld [vmem:[%s768 + $0x38] sm:$0xff]
        %s777 = scalar_lea.vmem %s2, 64
        %v778 = vld [vmem:[%s777] sm:$0xff]
        %v779 = vld [vmem:[%s777 + $0x8] sm:$0xff]
        %v780 = vld [vmem:[%s777 + $0x10] sm:$0xff]
        %v781 = vld [vmem:[%s777 + $0x18] sm:$0xff]
        %v782 = vld [vmem:[%s777 + $0x20] sm:$0xff]
        %v783 = vld [vmem:[%s777 + $0x28] sm:$0xff]
        %v784 = vld [vmem:[%s777 + $0x30] sm:$0xff]
        %v785 = vld [vmem:[%s777 + $0x38] sm:$0xff]
        %v786 = vmul.f32 %v769, %v778
        %v787 = vmul.f32 %v770, %v779
        %v788 = vmul.f32 %v771, %v780
        %v789 = vmul.f32 %v772, %v781
        %v790 = vmul.f32 %v773, %v782
        %v791 = vmul.f32 %v774, %v783
        %v792 = vmul.f32 %v775, %v784
        %v793 = vmul.f32 %v776, %v785
        %v794 = vadd.f32 %v760, %v786
        %v795 = vadd.f32 %v761, %v787
        %v796 = vadd.f32 %v762, %v788
        %v797 = vadd.f32 %v763, %v789
        %v798 = vadd.f32 %v764, %v790
        %v799 = vadd.f32 %v765, %v791
        %v800 = vadd.f32 %v766, %v792
        %v801 = vadd.f32 %v767, %v793
        %s802 = scalar_lea.vmem %s704, 128
        %v803 = vld [vmem:[%s802] sm:$0xff]
        %v804 = vld [vmem:[%s802 + $0x8] sm:$0xff]
        %v805 = vld [vmem:[%s802 + $0x10] sm:$0xff]
        %v806 = vld [vmem:[%s802 + $0x18] sm:$0xff]
        %v807 = vld [vmem:[%s802 + $0x20] sm:$0xff]
        %v808 = vld [vmem:[%s802 + $0x28] sm:$0xff]
        %v809 = vld [vmem:[%s802 + $0x30] sm:$0xff]
        %v810 = vld [vmem:[%s802 + $0x38] sm:$0xff]
        %s811 = scalar_lea.vmem %s2, 128
        %v812 = vld [vmem:[%s811] sm:$0xff]
        %v813 = vld [vmem:[%s811 + $0x8] sm:$0xff]
        %v814 = vld [vmem:[%s811 + $0x10] sm:$0xff]
        %v815 = vld [vmem:[%s811 + $0x18] sm:$0xff]
        %v816 = vld [vmem:[%s811 + $0x20] sm:$0xff]
        %v817 = vld [vmem:[%s811 + $0x28] sm:$0xff]
        %v818 = vld [vmem:[%s811 + $0x30] sm:$0xff]
        %v819 = vld [vmem:[%s811 + $0x38] sm:$0xff]
        %v820 = vmul.f32 %v803, %v812
        %v821 = vmul.f32 %v804, %v813
        %v822 = vmul.f32 %v805, %v814
        %v823 = vmul.f32 %v806, %v815
        %v824 = vmul.f32 %v807, %v816
        %v825 = vmul.f32 %v808, %v817
        %v826 = vmul.f32 %v809, %v818
        %v827 = vmul.f32 %v810, %v819
        %v828 = vadd.f32 %v794, %v820
        %v829 = vadd.f32 %v795, %v821
        %v830 = vadd.f32 %v796, %v822
        %v831 = vadd.f32 %v797, %v823
        %v832 = vadd.f32 %v798, %v824
        %v833 = vadd.f32 %v799, %v825
        %v834 = vadd.f32 %v800, %v826
        %v835 = vadd.f32 %v801, %v827
        %s836 = scalar_lea.vmem %s704, 192
        %v837 = vld [vmem:[%s836] sm:$0xff]
        %v838 = vld [vmem:[%s836 + $0x8] sm:$0xff]
        %v839 = vld [vmem:[%s836 + $0x10] sm:$0xff]
        %v840 = vld [vmem:[%s836 + $0x18] sm:$0xff]
        %v841 = vld [vmem:[%s836 + $0x20] sm:$0xff]
        %v842 = vld [vmem:[%s836 + $0x28] sm:$0xff]
        %v843 = vld [vmem:[%s836 + $0x30] sm:$0xff]
        %v844 = vld [vmem:[%s836 + $0x38] sm:$0xff]
        %s845 = scalar_lea.vmem %s2, 192
        %v846 = vld [vmem:[%s845] sm:$0xff]
        %v847 = vld [vmem:[%s845 + $0x8] sm:$0xff]
        %v848 = vld [vmem:[%s845 + $0x10] sm:$0xff]
        %v849 = vld [vmem:[%s845 + $0x18] sm:$0xff]
        %v850 = vld [vmem:[%s845 + $0x20] sm:$0xff]
        %v851 = vld [vmem:[%s845 + $0x28] sm:$0xff]
        %v852 = vld [vmem:[%s845 + $0x30] sm:$0xff]
        %v853 = vld [vmem:[%s845 + $0x38] sm:$0xff]
        %v854 = vmul.f32 %v837, %v846
        %v855 = vmul.f32 %v838, %v847
        %v856 = vmul.f32 %v839, %v848
        %v857 = vmul.f32 %v840, %v849
        %v858 = vmul.f32 %v841, %v850
        %v859 = vmul.f32 %v842, %v851
        %v860 = vmul.f32 %v843, %v852
        %v861 = vmul.f32 %v844, %v853
        %v862 = vadd.f32 %v828, %v854
        %v863 = vadd.f32 %v829, %v855
        %v864 = vadd.f32 %v830, %v856
        %v865 = vadd.f32 %v831, %v857
        %v866 = vadd.f32 %v832, %v858
        %v867 = vadd.f32 %v833, %v859
        %v868 = vadd.f32 %v834, %v860
        %v869 = vadd.f32 %v835, %v861
        %s870 = scalar_lea.vmem %s704, 256
        %v871 = vld [vmem:[%s870] sm:$0xff]
        %v872 = vld [vmem:[%s870 + $0x8] sm:$0xff]
        %v873 = vld [vmem:[%s870 + $0x10] sm:$0xff]
        %v874 = vld [vmem:[%s870 + $0x18] sm:$0xff]
        %v875 = vld [vmem:[%s870 + $0x20] sm:$0xff]
        %v876 = vld [vmem:[%s870 + $0x28] sm:$0xff]
        %v877 = vld [vmem:[%s870 + $0x30] sm:$0xff]
        %v878 = vld [vmem:[%s870 + $0x38] sm:$0xff]
        %s879 = scalar_lea.vmem %s2, 256
        %v880 = vld [vmem:[%s879] sm:$0xff]
        %v881 = vld [vmem:[%s879 + $0x8] sm:$0xff]
        %v882 = vld [vmem:[%s879 + $0x10] sm:$0xff]
        %v883 = vld [vmem:[%s879 + $0x18] sm:$0xff]
        %v884 = vld [vmem:[%s879 + $0x20] sm:$0xff]
        %v885 = vld [vmem:[%s879 + $0x28] sm:$0xff]
        %v886 = vld [vmem:[%s879 + $0x30] sm:$0xff]
        %v887 = vld [vmem:[%s879 + $0x38] sm:$0xff]
        %v888 = vmul.f32 %v871, %v880
        %v889 = vmul.f32 %v872, %v881
        %v890 = vmul.f32 %v873, %v882
        %v891 = vmul.f32 %v874, %v883
        %v892 = vmul.f32 %v875, %v884
        %v893 = vmul.f32 %v876, %v885
        %v894 = vmul.f32 %v877, %v886
        %v895 = vmul.f32 %v878, %v887
        %v896 = vadd.f32 %v862, %v888
        %v897 = vadd.f32 %v863, %v889
        %v898 = vadd.f32 %v864, %v890
        %v899 = vadd.f32 %v865, %v891
        %v900 = vadd.f32 %v866, %v892
        %v901 = vadd.f32 %v867, %v893
        %v902 = vadd.f32 %v868, %v894
        %v903 = vadd.f32 %v869, %v895
        %s904 = scalar_lea.vmem %s704, 320
        %v905 = vld [vmem:[%s904] sm:$0xff]
        %v906 = vld [vmem:[%s904 + $0x8] sm:$0xff]
        %v907 = vld [vmem:[%s904 + $0x10] sm:$0xff]
        %v908 = vld [vmem:[%s904 + $0x18] sm:$0xff]
        %v909 = vld [vmem:[%s904 + $0x20] sm:$0xff]
        %v910 = vld [vmem:[%s904 + $0x28] sm:$0xff]
        %v911 = vld [vmem:[%s904 + $0x30] sm:$0xff]
        %v912 = vld [vmem:[%s904 + $0x38] sm:$0xff]
        %s913 = scalar_lea.vmem %s2, 320
        %v914 = vld [vmem:[%s913] sm:$0xff]
        %v915 = vld [vmem:[%s913 + $0x8] sm:$0xff]
        %v916 = vld [vmem:[%s913 + $0x10] sm:$0xff]
        %v917 = vld [vmem:[%s913 + $0x18] sm:$0xff]
        %v918 = vld [vmem:[%s913 + $0x20] sm:$0xff]
        %v919 = vld [vmem:[%s913 + $0x28] sm:$0xff]
        %v920 = vld [vmem:[%s913 + $0x30] sm:$0xff]
        %v921 = vld [vmem:[%s913 + $0x38] sm:$0xff]
        %v922 = vmul.f32 %v905, %v914
        %v923 = vmul.f32 %v906, %v915
        %v924 = vmul.f32 %v907, %v916
        %v925 = vmul.f32 %v908, %v917
        %v926 = vmul.f32 %v909, %v918
        %v927 = vmul.f32 %v910, %v919
        %v928 = vmul.f32 %v911, %v920
        %v929 = vmul.f32 %v912, %v921
        %v930 = vadd.f32 %v896, %v922
        %v931 = vadd.f32 %v897, %v923
        %v932 = vadd.f32 %v898, %v924
        %v933 = vadd.f32 %v899, %v925
        %v934 = vadd.f32 %v900, %v926
        %v935 = vadd.f32 %v901, %v927
        %v936 = vadd.f32 %v902, %v928
        %v937 = vadd.f32 %v903, %v929
        %s938 = scalar_lea.vmem %s704, 384
        %v939 = vld [vmem:[%s938] sm:$0xff]
        %v940 = vld [vmem:[%s938 + $0x8] sm:$0xff]
        %v941 = vld [vmem:[%s938 + $0x10] sm:$0xff]
        %v942 = vld [vmem:[%s938 + $0x18] sm:$0xff]
        %v943 = vld [vmem:[%s938 + $0x20] sm:$0xff]
        %v944 = vld [vmem:[%s938 + $0x28] sm:$0xff]
        %v945 = vld [vmem:[%s938 + $0x30] sm:$0xff]
        %v946 = vld [vmem:[%s938 + $0x38] sm:$0xff]
        %s947 = scalar_lea.vmem %s2, 384
        %v948 = vld [vmem:[%s947] sm:$0xff]
        %v949 = vld [vmem:[%s947 + $0x8] sm:$0xff]
        %v950 = vld [vmem:[%s947 + $0x10] sm:$0xff]
        %v951 = vld [vmem:[%s947 + $0x18] sm:$0xff]
        %v952 = vld [vmem:[%s947 + $0x20] sm:$0xff]
        %v953 = vld [vmem:[%s947 + $0x28] sm:$0xff]
        %v954 = vld [vmem:[%s947 + $0x30] sm:$0xff]
        %v955 = vld [vmem:[%s947 + $0x38] sm:$0xff]
        %v956 = vmul.f32 %v939, %v948
        %v957 = vmul.f32 %v940, %v949
        %v958 = vmul.f32 %v941, %v950
        %v959 = vmul.f32 %v942, %v951
        %v960 = vmul.f32 %v943, %v952
        %v961 = vmul.f32 %v944, %v953
        %v962 = vmul.f32 %v945, %v954
        %v963 = vmul.f32 %v946, %v955
        %v964 = vadd.f32 %v930, %v956
        %v965 = vadd.f32 %v931, %v957
        %v966 = vadd.f32 %v932, %v958
        %v967 = vadd.f32 %v933, %v959
        %v968 = vadd.f32 %v934, %v960
        %v969 = vadd.f32 %v935, %v961
        %v970 = vadd.f32 %v936, %v962
        %v971 = vadd.f32 %v937, %v963
        %s972 = scalar_lea.vmem %s704, 448
        %v973 = vld [vmem:[%s972] sm:$0xff]
        %v974 = vld [vmem:[%s972 + $0x8] sm:$0xff]
        %v975 = vld [vmem:[%s972 + $0x10] sm:$0xff]
        %v976 = vld [vmem:[%s972 + $0x18] sm:$0xff]
        %v977 = vld [vmem:[%s972 + $0x20] sm:$0xff]
        %v978 = vld [vmem:[%s972 + $0x28] sm:$0xff]
        %v979 = vld [vmem:[%s972 + $0x30] sm:$0xff]
        %v980 = vld [vmem:[%s972 + $0x38] sm:$0xff]
        %s981 = scalar_lea.vmem %s2, 448
        %v982 = vld [vmem:[%s981] sm:$0xff]
        %v983 = vld [vmem:[%s981 + $0x8] sm:$0xff]
        %v984 = vld [vmem:[%s981 + $0x10] sm:$0xff]
        %v985 = vld [vmem:[%s981 + $0x18] sm:$0xff]
        %v986 = vld [vmem:[%s981 + $0x20] sm:$0xff]
        %v987 = vld [vmem:[%s981 + $0x28] sm:$0xff]
        %v988 = vld [vmem:[%s981 + $0x30] sm:$0xff]
        %v989 = vld [vmem:[%s981 + $0x38] sm:$0xff]
        %v990 = vmul.f32 %v973, %v982
        %v991 = vmul.f32 %v974, %v983
        %v992 = vmul.f32 %v975, %v984
        %v993 = vmul.f32 %v976, %v985
        %v994 = vmul.f32 %v977, %v986
        %v995 = vmul.f32 %v978, %v987
        %v996 = vmul.f32 %v979, %v988
        %v997 = vmul.f32 %v980, %v989
        %v998 = vadd.f32 %v964, %v990
        %v999 = vadd.f32 %v965, %v991
        %v1000 = vadd.f32 %v966, %v992
        %v1001 = vadd.f32 %v967, %v993
        %v1002 = vadd.f32 %v968, %v994
        %v1003 = vadd.f32 %v969, %v995
        %v1004 = vadd.f32 %v970, %v996
        %v1005 = vadd.f32 %v971, %v997
        %s1006 = scalar_lea.vmem %s704, 512
        %v1007 = vld [vmem:[%s1006] sm:$0xff]
        %v1008 = vld [vmem:[%s1006 + $0x8] sm:$0xff]
        %v1009 = vld [vmem:[%s1006 + $0x10] sm:$0xff]
        %v1010 = vld [vmem:[%s1006 + $0x18] sm:$0xff]
        %v1011 = vld [vmem:[%s1006 + $0x20] sm:$0xff]
        %v1012 = vld [vmem:[%s1006 + $0x28] sm:$0xff]
        %v1013 = vld [vmem:[%s1006 + $0x30] sm:$0xff]
        %v1014 = vld [vmem:[%s1006 + $0x38] sm:$0xff]
        %s1015 = scalar_lea.vmem %s2, 512
        %v1016 = vld [vmem:[%s1015] sm:$0xff]
        %v1017 = vld [vmem:[%s1015 + $0x8] sm:$0xff]
        %v1018 = vld [vmem:[%s1015 + $0x10] sm:$0xff]
        %v1019 = vld [vmem:[%s1015 + $0x18] sm:$0xff]
        %v1020 = vld [vmem:[%s1015 + $0x20] sm:$0xff]
        %v1021 = vld [vmem:[%s1015 + $0x28] sm:$0xff]
        %v1022 = vld [vmem:[%s1015 + $0x30] sm:$0xff]
        %v1023 = vld [vmem:[%s1015 + $0x38] sm:$0xff]
        %v1024 = vmul.f32 %v1007, %v1016
        %v1025 = vmul.f32 %v1008, %v1017
        %v1026 = vmul.f32 %v1009, %v1018
        %v1027 = vmul.f32 %v1010, %v1019
        %v1028 = vmul.f32 %v1011, %v1020
        %v1029 = vmul.f32 %v1012, %v1021
        %v1030 = vmul.f32 %v1013, %v1022
        %v1031 = vmul.f32 %v1014, %v1023
        %v1032 = vadd.f32 %v998, %v1024
        %v1033 = vadd.f32 %v999, %v1025
        %v1034 = vadd.f32 %v1000, %v1026
        %v1035 = vadd.f32 %v1001, %v1027
        %v1036 = vadd.f32 %v1002, %v1028
        %v1037 = vadd.f32 %v1003, %v1029
        %v1038 = vadd.f32 %v1004, %v1030
        %v1039 = vadd.f32 %v1005, %v1031
        %s1040 = scalar_lea.vmem %s704, 576
        %v1041 = vld [vmem:[%s1040] sm:$0xff]
        %v1042 = vld [vmem:[%s1040 + $0x8] sm:$0xff]
        %v1043 = vld [vmem:[%s1040 + $0x10] sm:$0xff]
        %v1044 = vld [vmem:[%s1040 + $0x18] sm:$0xff]
        %v1045 = vld [vmem:[%s1040 + $0x20] sm:$0xff]
        %v1046 = vld [vmem:[%s1040 + $0x28] sm:$0xff]
        %v1047 = vld [vmem:[%s1040 + $0x30] sm:$0xff]
        %v1048 = vld [vmem:[%s1040 + $0x38] sm:$0xff]
        %s1049 = scalar_lea.vmem %s2, 576
        %v1050 = vld [vmem:[%s1049] sm:$0xff]
        %v1051 = vld [vmem:[%s1049 + $0x8] sm:$0xff]
        %v1052 = vld [vmem:[%s1049 + $0x10] sm:$0xff]
        %v1053 = vld [vmem:[%s1049 + $0x18] sm:$0xff]
        %v1054 = vld [vmem:[%s1049 + $0x20] sm:$0xff]
        %v1055 = vld [vmem:[%s1049 + $0x28] sm:$0xff]
        %v1056 = vld [vmem:[%s1049 + $0x30] sm:$0xff]
        %v1057 = vld [vmem:[%s1049 + $0x38] sm:$0xff]
        %v1058 = vmul.f32 %v1041, %v1050
        %v1059 = vmul.f32 %v1042, %v1051
        %v1060 = vmul.f32 %v1043, %v1052
        %v1061 = vmul.f32 %v1044, %v1053
        %v1062 = vmul.f32 %v1045, %v1054
        %v1063 = vmul.f32 %v1046, %v1055
        %v1064 = vmul.f32 %v1047, %v1056
        %v1065 = vmul.f32 %v1048, %v1057
        %v1066 = vadd.f32 %v1032, %v1058
        %v1067 = vadd.f32 %v1033, %v1059
        %v1068 = vadd.f32 %v1034, %v1060
        %v1069 = vadd.f32 %v1035, %v1061
        %v1070 = vadd.f32 %v1036, %v1062
        %v1071 = vadd.f32 %v1037, %v1063
        %v1072 = vadd.f32 %v1038, %v1064
        %v1073 = vadd.f32 %v1039, %v1065
        %s1074 = scalar_lea.vmem %s704, 640
        %v1075 = vld [vmem:[%s1074] sm:$0xff]
        %v1076 = vld [vmem:[%s1074 + $0x8] sm:$0xff]
        %v1077 = vld [vmem:[%s1074 + $0x10] sm:$0xff]
        %v1078 = vld [vmem:[%s1074 + $0x18] sm:$0xff]
        %v1079 = vld [vmem:[%s1074 + $0x20] sm:$0xff]
        %v1080 = vld [vmem:[%s1074 + $0x28] sm:$0xff]
        %v1081 = vld [vmem:[%s1074 + $0x30] sm:$0xff]
        %v1082 = vld [vmem:[%s1074 + $0x38] sm:$0xff]
        %s1083 = scalar_lea.vmem %s2, 640
        %v1084 = vld [vmem:[%s1083] sm:$0xff]
        %v1085 = vld [vmem:[%s1083 + $0x8] sm:$0xff]
        %v1086 = vld [vmem:[%s1083 + $0x10] sm:$0xff]
        %v1087 = vld [vmem:[%s1083 + $0x18] sm:$0xff]
        %v1088 = vld [vmem:[%s1083 + $0x20] sm:$0xff]
        %v1089 = vld [vmem:[%s1083 + $0x28] sm:$0xff]
        %v1090 = vld [vmem:[%s1083 + $0x30] sm:$0xff]
        %v1091 = vld [vmem:[%s1083 + $0x38] sm:$0xff]
        %v1092 = vmul.f32 %v1075, %v1084
        %v1093 = vmul.f32 %v1076, %v1085
        %v1094 = vmul.f32 %v1077, %v1086
        %v1095 = vmul.f32 %v1078, %v1087
        %v1096 = vmul.f32 %v1079, %v1088
        %v1097 = vmul.f32 %v1080, %v1089
        %v1098 = vmul.f32 %v1081, %v1090
        %v1099 = vmul.f32 %v1082, %v1091
        %v1100 = vadd.f32 %v1066, %v1092
        %v1101 = vadd.f32 %v1067, %v1093
        %v1102 = vadd.f32 %v1068, %v1094
        %v1103 = vadd.f32 %v1069, %v1095
        %v1104 = vadd.f32 %v1070, %v1096
        %v1105 = vadd.f32 %v1071, %v1097
        %v1106 = vadd.f32 %v1072, %v1098
        %v1107 = vadd.f32 %v1073, %v1099
        %s1108 = scalar_lea.vmem %s704, 704
        %v1109 = vld [vmem:[%s1108] sm:$0xff]
        %v1110 = vld [vmem:[%s1108 + $0x8] sm:$0xff]
        %v1111 = vld [vmem:[%s1108 + $0x10] sm:$0xff]
        %v1112 = vld [vmem:[%s1108 + $0x18] sm:$0xff]
        %v1113 = vld [vmem:[%s1108 + $0x20] sm:$0xff]
        %v1114 = vld [vmem:[%s1108 + $0x28] sm:$0xff]
        %v1115 = vld [vmem:[%s1108 + $0x30] sm:$0xff]
        %v1116 = vld [vmem:[%s1108 + $0x38] sm:$0xff]
        %s1117 = scalar_lea.vmem %s2, 704
        %v1118 = vld [vmem:[%s1117] sm:$0xff]
        %v1119 = vld [vmem:[%s1117 + $0x8] sm:$0xff]
        %v1120 = vld [vmem:[%s1117 + $0x10] sm:$0xff]
        %v1121 = vld [vmem:[%s1117 + $0x18] sm:$0xff]
        %v1122 = vld [vmem:[%s1117 + $0x20] sm:$0xff]
        %v1123 = vld [vmem:[%s1117 + $0x28] sm:$0xff]
        %v1124 = vld [vmem:[%s1117 + $0x30] sm:$0xff]
        %v1125 = vld [vmem:[%s1117 + $0x38] sm:$0xff]
        %v1126 = vmul.f32 %v1109, %v1118
        %v1127 = vmul.f32 %v1110, %v1119
        %v1128 = vmul.f32 %v1111, %v1120
        %v1129 = vmul.f32 %v1112, %v1121
        %v1130 = vmul.f32 %v1113, %v1122
        %v1131 = vmul.f32 %v1114, %v1123
        %v1132 = vmul.f32 %v1115, %v1124
        %v1133 = vmul.f32 %v1116, %v1125
        %v1134 = vadd.f32 %v1100, %v1126
        %v1135 = vadd.f32 %v1101, %v1127
        %v1136 = vadd.f32 %v1102, %v1128
        %v1137 = vadd.f32 %v1103, %v1129
        %v1138 = vadd.f32 %v1104, %v1130
        %v1139 = vadd.f32 %v1105, %v1131
        %v1140 = vadd.f32 %v1106, %v1132
        %v1141 = vadd.f32 %v1107, %v1133
        %s1142 = scalar_lea.vmem %s704, 768
        %v1143 = vld [vmem:[%s1142] sm:$0xff]
        %v1144 = vld [vmem:[%s1142 + $0x8] sm:$0xff]
        %v1145 = vld [vmem:[%s1142 + $0x10] sm:$0xff]
        %v1146 = vld [vmem:[%s1142 + $0x18] sm:$0xff]
        %v1147 = vld [vmem:[%s1142 + $0x20] sm:$0xff]
        %v1148 = vld [vmem:[%s1142 + $0x28] sm:$0xff]
        %v1149 = vld [vmem:[%s1142 + $0x30] sm:$0xff]
        %v1150 = vld [vmem:[%s1142 + $0x38] sm:$0xff]
        %s1151 = scalar_lea.vmem %s2, 768
        %v1152 = vld [vmem:[%s1151] sm:$0xff]
        %v1153 = vld [vmem:[%s1151 + $0x8] sm:$0xff]
        %v1154 = vld [vmem:[%s1151 + $0x10] sm:$0xff]
        %v1155 = vld [vmem:[%s1151 + $0x18] sm:$0xff]
        %v1156 = vld [vmem:[%s1151 + $0x20] sm:$0xff]
        %v1157 = vld [vmem:[%s1151 + $0x28] sm:$0xff]
        %v1158 = vld [vmem:[%s1151 + $0x30] sm:$0xff]
        %v1159 = vld [vmem:[%s1151 + $0x38] sm:$0xff]
        %v1160 = vmul.f32 %v1143, %v1152
        %v1161 = vmul.f32 %v1144, %v1153
        %v1162 = vmul.f32 %v1145, %v1154
        %v1163 = vmul.f32 %v1146, %v1155
        %v1164 = vmul.f32 %v1147, %v1156
        %v1165 = vmul.f32 %v1148, %v1157
        %v1166 = vmul.f32 %v1149, %v1158
        %v1167 = vmul.f32 %v1150, %v1159
        %v1168 = vadd.f32 %v1134, %v1160
        %v1169 = vadd.f32 %v1135, %v1161
        %v1170 = vadd.f32 %v1136, %v1162
        %v1171 = vadd.f32 %v1137, %v1163
        %v1172 = vadd.f32 %v1138, %v1164
        %v1173 = vadd.f32 %v1139, %v1165
        %v1174 = vadd.f32 %v1140, %v1166
        %v1175 = vadd.f32 %v1141, %v1167
        %s1176 = scalar_lea.vmem %s704, 832
        %v1177 = vld [vmem:[%s1176] sm:$0xff]
        %v1178 = vld [vmem:[%s1176 + $0x8] sm:$0xff]
        %v1179 = vld [vmem:[%s1176 + $0x10] sm:$0xff]
        %v1180 = vld [vmem:[%s1176 + $0x18] sm:$0xff]
        %v1181 = vld [vmem:[%s1176 + $0x20] sm:$0xff]
        %v1182 = vld [vmem:[%s1176 + $0x28] sm:$0xff]
        %v1183 = vld [vmem:[%s1176 + $0x30] sm:$0xff]
        %v1184 = vld [vmem:[%s1176 + $0x38] sm:$0xff]
        %s1185 = scalar_lea.vmem %s2, 832
        %v1186 = vld [vmem:[%s1185] sm:$0xff]
        %v1187 = vld [vmem:[%s1185 + $0x8] sm:$0xff]
        %v1188 = vld [vmem:[%s1185 + $0x10] sm:$0xff]
        %v1189 = vld [vmem:[%s1185 + $0x18] sm:$0xff]
        %v1190 = vld [vmem:[%s1185 + $0x20] sm:$0xff]
        %v1191 = vld [vmem:[%s1185 + $0x28] sm:$0xff]
        %v1192 = vld [vmem:[%s1185 + $0x30] sm:$0xff]
        %v1193 = vld [vmem:[%s1185 + $0x38] sm:$0xff]
        %v1194 = vmul.f32 %v1177, %v1186
        %v1195 = vmul.f32 %v1178, %v1187
        %v1196 = vmul.f32 %v1179, %v1188
        %v1197 = vmul.f32 %v1180, %v1189
        %v1198 = vmul.f32 %v1181, %v1190
        %v1199 = vmul.f32 %v1182, %v1191
        %v1200 = vmul.f32 %v1183, %v1192
        %v1201 = vmul.f32 %v1184, %v1193
        %v1202 = vadd.f32 %v1168, %v1194
        %v1203 = vadd.f32 %v1169, %v1195
        %v1204 = vadd.f32 %v1170, %v1196
        %v1205 = vadd.f32 %v1171, %v1197
        %v1206 = vadd.f32 %v1172, %v1198
        %v1207 = vadd.f32 %v1173, %v1199
        %v1208 = vadd.f32 %v1174, %v1200
        %v1209 = vadd.f32 %v1175, %v1201
        %s1210 = scalar_lea.vmem %s704, 896
        %v1211 = vld [vmem:[%s1210] sm:$0xff]
        %v1212 = vld [vmem:[%s1210 + $0x8] sm:$0xff]
        %v1213 = vld [vmem:[%s1210 + $0x10] sm:$0xff]
        %v1214 = vld [vmem:[%s1210 + $0x18] sm:$0xff]
        %v1215 = vld [vmem:[%s1210 + $0x20] sm:$0xff]
        %v1216 = vld [vmem:[%s1210 + $0x28] sm:$0xff]
        %v1217 = vld [vmem:[%s1210 + $0x30] sm:$0xff]
        %v1218 = vld [vmem:[%s1210 + $0x38] sm:$0xff]
        %s1219 = scalar_lea.vmem %s2, 896
        %v1220 = vld [vmem:[%s1219] sm:$0xff]
        %v1221 = vld [vmem:[%s1219 + $0x8] sm:$0xff]
        %v1222 = vld [vmem:[%s1219 + $0x10] sm:$0xff]
        %v1223 = vld [vmem:[%s1219 + $0x18] sm:$0xff]
        %v1224 = vld [vmem:[%s1219 + $0x20] sm:$0xff]
        %v1225 = vld [vmem:[%s1219 + $0x28] sm:$0xff]
        %v1226 = vld [vmem:[%s1219 + $0x30] sm:$0xff]
        %v1227 = vld [vmem:[%s1219 + $0x38] sm:$0xff]
        %v1228 = vmul.f32 %v1211, %v1220
        %v1229 = vmul.f32 %v1212, %v1221
        %v1230 = vmul.f32 %v1213, %v1222
        %v1231 = vmul.f32 %v1214, %v1223
        %v1232 = vmul.f32 %v1215, %v1224
        %v1233 = vmul.f32 %v1216, %v1225
        %v1234 = vmul.f32 %v1217, %v1226
        %v1235 = vmul.f32 %v1218, %v1227
        %v1236 = vadd.f32 %v1202, %v1228
        %v1237 = vadd.f32 %v1203, %v1229
        %v1238 = vadd.f32 %v1204, %v1230
        %v1239 = vadd.f32 %v1205, %v1231
        %v1240 = vadd.f32 %v1206, %v1232
        %v1241 = vadd.f32 %v1207, %v1233
        %v1242 = vadd.f32 %v1208, %v1234
        %v1243 = vadd.f32 %v1209, %v1235
        %s1244 = scalar_lea.vmem %s704, 960
        %v1245 = vld [vmem:[%s1244] sm:$0xff]
        %v1246 = vld [vmem:[%s1244 + $0x8] sm:$0xff]
        %v1247 = vld [vmem:[%s1244 + $0x10] sm:$0xff]
        %v1248 = vld [vmem:[%s1244 + $0x18] sm:$0xff]
        %v1249 = vld [vmem:[%s1244 + $0x20] sm:$0xff]
        %v1250 = vld [vmem:[%s1244 + $0x28] sm:$0xff]
        %v1251 = vld [vmem:[%s1244 + $0x30] sm:$0xff]
        %v1252 = vld [vmem:[%s1244 + $0x38] sm:$0xff]
        %s1253 = scalar_lea.vmem %s2, 960
        %v1254 = vld [vmem:[%s1253] sm:$0xff]
        %v1255 = vld [vmem:[%s1253 + $0x8] sm:$0xff]
        %v1256 = vld [vmem:[%s1253 + $0x10] sm:$0xff]
        %v1257 = vld [vmem:[%s1253 + $0x18] sm:$0xff]
        %v1258 = vld [vmem:[%s1253 + $0x20] sm:$0xff]
        %v1259 = vld [vmem:[%s1253 + $0x28] sm:$0xff]
        %v1260 = vld [vmem:[%s1253 + $0x30] sm:$0xff]
        %v1261 = vld [vmem:[%s1253 + $0x38] sm:$0xff]
        %v1262 = vmul.f32 %v1245, %v1254
        %v1263 = vmul.f32 %v1246, %v1255
        %v1264 = vmul.f32 %v1247, %v1256
        %v1265 = vmul.f32 %v1248, %v1257
        %v1266 = vmul.f32 %v1249, %v1258
        %v1267 = vmul.f32 %v1250, %v1259
        %v1268 = vmul.f32 %v1251, %v1260
        %v1269 = vmul.f32 %v1252, %v1261
        %v1270 = vadd.f32 %v1236, %v1262
        %v1271 = vadd.f32 %v1237, %v1263
        %v1272 = vadd.f32 %v1238, %v1264
        %v1273 = vadd.f32 %v1239, %v1265
        %v1274 = vadd.f32 %v1240, %v1266
        %v1275 = vadd.f32 %v1241, %v1267
        %v1276 = vadd.f32 %v1242, %v1268
        %v1277 = vadd.f32 %v1243, %v1269
        %s1278 = scalar_lea.vmem %s704, 1024
        %v1279 = vld [vmem:[%s1278] sm:$0xff]
        %v1280 = vld [vmem:[%s1278 + $0x8] sm:$0xff]
        %v1281 = vld [vmem:[%s1278 + $0x10] sm:$0xff]
        %v1282 = vld [vmem:[%s1278 + $0x18] sm:$0xff]
        %v1283 = vld [vmem:[%s1278 + $0x20] sm:$0xff]
        %v1284 = vld [vmem:[%s1278 + $0x28] sm:$0xff]
        %v1285 = vld [vmem:[%s1278 + $0x30] sm:$0xff]
        %v1286 = vld [vmem:[%s1278 + $0x38] sm:$0xff]
        %s1287 = scalar_lea.vmem %s2, 1024
        %v1288 = vld [vmem:[%s1287] sm:$0xff]
        %v1289 = vld [vmem:[%s1287 + $0x8] sm:$0xff]
        %v1290 = vld [vmem:[%s1287 + $0x10] sm:$0xff]
        %v1291 = vld [vmem:[%s1287 + $0x18] sm:$0xff]
        %v1292 = vld [vmem:[%s1287 + $0x20] sm:$0xff]
        %v1293 = vld [vmem:[%s1287 + $0x28] sm:$0xff]
        %v1294 = vld [vmem:[%s1287 + $0x30] sm:$0xff]
        %v1295 = vld [vmem:[%s1287 + $0x38] sm:$0xff]
        %v1296 = vmul.f32 %v1279, %v1288
        %v1297 = vmul.f32 %v1280, %v1289
        %v1298 = vmul.f32 %v1281, %v1290
        %v1299 = vmul.f32 %v1282, %v1291
        %v1300 = vmul.f32 %v1283, %v1292
        %v1301 = vmul.f32 %v1284, %v1293
        %v1302 = vmul.f32 %v1285, %v1294
        %v1303 = vmul.f32 %v1286, %v1295
        %v1304 = vadd.f32 %v1270, %v1296
        %v1305 = vadd.f32 %v1271, %v1297
        %v1306 = vadd.f32 %v1272, %v1298
        %v1307 = vadd.f32 %v1273, %v1299
        %v1308 = vadd.f32 %v1274, %v1300
        %v1309 = vadd.f32 %v1275, %v1301
        %v1310 = vadd.f32 %v1276, %v1302
        %v1311 = vadd.f32 %v1277, %v1303
        %s1312 = scalar_lea.vmem %s704, 1088
        %v1313 = vld [vmem:[%s1312] sm:$0xff]
        %v1314 = vld [vmem:[%s1312 + $0x8] sm:$0xff]
        %v1315 = vld [vmem:[%s1312 + $0x10] sm:$0xff]
        %v1316 = vld [vmem:[%s1312 + $0x18] sm:$0xff]
        %v1317 = vld [vmem:[%s1312 + $0x20] sm:$0xff]
        %v1318 = vld [vmem:[%s1312 + $0x28] sm:$0xff]
        %v1319 = vld [vmem:[%s1312 + $0x30] sm:$0xff]
        %v1320 = vld [vmem:[%s1312 + $0x38] sm:$0xff]
        %s1321 = scalar_lea.vmem %s2, 1088
        %v1322 = vld [vmem:[%s1321] sm:$0xff]
        %v1323 = vld [vmem:[%s1321 + $0x8] sm:$0xff]
        %v1324 = vld [vmem:[%s1321 + $0x10] sm:$0xff]
        %v1325 = vld [vmem:[%s1321 + $0x18] sm:$0xff]
        %v1326 = vld [vmem:[%s1321 + $0x20] sm:$0xff]
        %v1327 = vld [vmem:[%s1321 + $0x28] sm:$0xff]
        %v1328 = vld [vmem:[%s1321 + $0x30] sm:$0xff]
        %v1329 = vld [vmem:[%s1321 + $0x38] sm:$0xff]
        %v1330 = vmul.f32 %v1313, %v1322
        %v1331 = vmul.f32 %v1314, %v1323
        %v1332 = vmul.f32 %v1315, %v1324
        %v1333 = vmul.f32 %v1316, %v1325
        %v1334 = vmul.f32 %v1317, %v1326
        %v1335 = vmul.f32 %v1318, %v1327
        %v1336 = vmul.f32 %v1319, %v1328
        %v1337 = vmul.f32 %v1320, %v1329
        %v1338 = vadd.f32 %v1304, %v1330
        %v1339 = vadd.f32 %v1305, %v1331
        %v1340 = vadd.f32 %v1306, %v1332
        %v1341 = vadd.f32 %v1307, %v1333
        %v1342 = vadd.f32 %v1308, %v1334
        %v1343 = vadd.f32 %v1309, %v1335
        %v1344 = vadd.f32 %v1310, %v1336
        %v1345 = vadd.f32 %v1311, %v1337
        %s1346 = scalar_lea.vmem %s704, 1152
        %v1347 = vld [vmem:[%s1346] sm:$0xff]
        %v1348 = vld [vmem:[%s1346 + $0x8] sm:$0xff]
        %v1349 = vld [vmem:[%s1346 + $0x10] sm:$0xff]
        %v1350 = vld [vmem:[%s1346 + $0x18] sm:$0xff]
        %v1351 = vld [vmem:[%s1346 + $0x20] sm:$0xff]
        %v1352 = vld [vmem:[%s1346 + $0x28] sm:$0xff]
        %v1353 = vld [vmem:[%s1346 + $0x30] sm:$0xff]
        %v1354 = vld [vmem:[%s1346 + $0x38] sm:$0xff]
        %s1355 = scalar_lea.vmem %s2, 1152
        %v1356 = vld [vmem:[%s1355] sm:$0xff]
        %v1357 = vld [vmem:[%s1355 + $0x8] sm:$0xff]
        %v1358 = vld [vmem:[%s1355 + $0x10] sm:$0xff]
        %v1359 = vld [vmem:[%s1355 + $0x18] sm:$0xff]
        %v1360 = vld [vmem:[%s1355 + $0x20] sm:$0xff]
        %v1361 = vld [vmem:[%s1355 + $0x28] sm:$0xff]
        %v1362 = vld [vmem:[%s1355 + $0x30] sm:$0xff]
        %v1363 = vld [vmem:[%s1355 + $0x38] sm:$0xff]
        %v1364 = vmul.f32 %v1347, %v1356
        %v1365 = vmul.f32 %v1348, %v1357
        %v1366 = vmul.f32 %v1349, %v1358
        %v1367 = vmul.f32 %v1350, %v1359
        %v1368 = vmul.f32 %v1351, %v1360
        %v1369 = vmul.f32 %v1352, %v1361
        %v1370 = vmul.f32 %v1353, %v1362
        %v1371 = vmul.f32 %v1354, %v1363
        %v1372 = vadd.f32 %v1338, %v1364
        %v1373 = vadd.f32 %v1339, %v1365
        %v1374 = vadd.f32 %v1340, %v1366
        %v1375 = vadd.f32 %v1341, %v1367
        %v1376 = vadd.f32 %v1342, %v1368
        %v1377 = vadd.f32 %v1343, %v1369
        %v1378 = vadd.f32 %v1344, %v1370
        %v1379 = vadd.f32 %v1345, %v1371
        %s1380 = scalar_lea.vmem %s704, 1216
        %v1381 = vld [vmem:[%s1380] sm:$0xff]
        %v1382 = vld [vmem:[%s1380 + $0x8] sm:$0xff]
        %v1383 = vld [vmem:[%s1380 + $0x10] sm:$0xff]
        %v1384 = vld [vmem:[%s1380 + $0x18] sm:$0xff]
        %v1385 = vld [vmem:[%s1380 + $0x20] sm:$0xff]
        %v1386 = vld [vmem:[%s1380 + $0x28] sm:$0xff]
        %v1387 = vld [vmem:[%s1380 + $0x30] sm:$0xff]
        %v1388 = vld [vmem:[%s1380 + $0x38] sm:$0xff]
        %s1389 = scalar_lea.vmem %s2, 1216
        %v1390 = vld [vmem:[%s1389] sm:$0xff]
        %v1391 = vld [vmem:[%s1389 + $0x8] sm:$0xff]
        %v1392 = vld [vmem:[%s1389 + $0x10] sm:$0xff]
        %v1393 = vld [vmem:[%s1389 + $0x18] sm:$0xff]
        %v1394 = vld [vmem:[%s1389 + $0x20] sm:$0xff]
        %v1395 = vld [vmem:[%s1389 + $0x28] sm:$0xff]
        %v1396 = vld [vmem:[%s1389 + $0x30] sm:$0xff]
        %v1397 = vld [vmem:[%s1389 + $0x38] sm:$0xff]
        %v1398 = vmul.f32 %v1381, %v1390
        %v1399 = vmul.f32 %v1382, %v1391
        %v1400 = vmul.f32 %v1383, %v1392
        %v1401 = vmul.f32 %v1384, %v1393
        %v1402 = vmul.f32 %v1385, %v1394
        %v1403 = vmul.f32 %v1386, %v1395
        %v1404 = vmul.f32 %v1387, %v1396
        %v1405 = vmul.f32 %v1388, %v1397
        %v1406 = vadd.f32 %v1372, %v1398
        %v1407 = vadd.f32 %v1373, %v1399
        %v1408 = vadd.f32 %v1374, %v1400
        %v1409 = vadd.f32 %v1375, %v1401
        %v1410 = vadd.f32 %v1376, %v1402
        %v1411 = vadd.f32 %v1377, %v1403
        %v1412 = vadd.f32 %v1378, %v1404
        %v1413 = vadd.f32 %v1379, %v1405
        %s1414 = scalar_lea.vmem %s704, 1280
        %v1415 = vld [vmem:[%s1414] sm:$0xff]
        %v1416 = vld [vmem:[%s1414 + $0x8] sm:$0xff]
        %v1417 = vld [vmem:[%s1414 + $0x10] sm:$0xff]
        %v1418 = vld [vmem:[%s1414 + $0x18] sm:$0xff]
        %v1419 = vld [vmem:[%s1414 + $0x20] sm:$0xff]
        %v1420 = vld [vmem:[%s1414 + $0x28] sm:$0xff]
        %v1421 = vld [vmem:[%s1414 + $0x30] sm:$0xff]
        %v1422 = vld [vmem:[%s1414 + $0x38] sm:$0xff]
        %s1423 = scalar_lea.vmem %s2, 1280
        %v1424 = vld [vmem:[%s1423] sm:$0xff]
        %v1425 = vld [vmem:[%s1423 + $0x8] sm:$0xff]
        %v1426 = vld [vmem:[%s1423 + $0x10] sm:$0xff]
        %v1427 = vld [vmem:[%s1423 + $0x18] sm:$0xff]
        %v1428 = vld [vmem:[%s1423 + $0x20] sm:$0xff]
        %v1429 = vld [vmem:[%s1423 + $0x28] sm:$0xff]
        %v1430 = vld [vmem:[%s1423 + $0x30] sm:$0xff]
        %v1431 = vld [vmem:[%s1423 + $0x38] sm:$0xff]
        %v1432 = vmul.f32 %v1415, %v1424
        %v1433 = vmul.f32 %v1416, %v1425
        %v1434 = vmul.f32 %v1417, %v1426
        %v1435 = vmul.f32 %v1418, %v1427
        %v1436 = vmul.f32 %v1419, %v1428
        %v1437 = vmul.f32 %v1420, %v1429
        %v1438 = vmul.f32 %v1421, %v1430
        %v1439 = vmul.f32 %v1422, %v1431
        %v1440 = vadd.f32 %v1406, %v1432
        %v1441 = vadd.f32 %v1407, %v1433
        %v1442 = vadd.f32 %v1408, %v1434
        %v1443 = vadd.f32 %v1409, %v1435
        %v1444 = vadd.f32 %v1410, %v1436
        %v1445 = vadd.f32 %v1411, %v1437
        %v1446 = vadd.f32 %v1412, %v1438
        %v1447 = vadd.f32 %v1413, %v1439
        %s1448 = scalar_lea.vmem %s704, 1344
        %v1449 = vld [vmem:[%s1448] sm:$0xff]
        %v1450 = vld [vmem:[%s1448 + $0x8] sm:$0xff]
        %v1451 = vld [vmem:[%s1448 + $0x10] sm:$0xff]
        %v1452 = vld [vmem:[%s1448 + $0x18] sm:$0xff]
        %v1453 = vld [vmem:[%s1448 + $0x20] sm:$0xff]
        %v1454 = vld [vmem:[%s1448 + $0x28] sm:$0xff]
        %v1455 = vld [vmem:[%s1448 + $0x30] sm:$0xff]
        %v1456 = vld [vmem:[%s1448 + $0x38] sm:$0xff]
        %s1457 = scalar_lea.vmem %s2, 1344
        %v1458 = vld [vmem:[%s1457] sm:$0xff]
        %v1459 = vld [vmem:[%s1457 + $0x8] sm:$0xff]
        %v1460 = vld [vmem:[%s1457 + $0x10] sm:$0xff]
        %v1461 = vld [vmem:[%s1457 + $0x18] sm:$0xff]
        %v1462 = vld [vmem:[%s1457 + $0x20] sm:$0xff]
        %v1463 = vld [vmem:[%s1457 + $0x28] sm:$0xff]
        %v1464 = vld [vmem:[%s1457 + $0x30] sm:$0xff]
        %v1465 = vld [vmem:[%s1457 + $0x38] sm:$0xff]
        %v1466 = vmul.f32 %v1449, %v1458
        %v1467 = vmul.f32 %v1450, %v1459
        %v1468 = vmul.f32 %v1451, %v1460
        %v1469 = vmul.f32 %v1452, %v1461
        %v1470 = vmul.f32 %v1453, %v1462
        %v1471 = vmul.f32 %v1454, %v1463
        %v1472 = vmul.f32 %v1455, %v1464
        %v1473 = vmul.f32 %v1456, %v1465
        %v1474 = vadd.f32 %v1440, %v1466
        %v1475 = vadd.f32 %v1441, %v1467
        %v1476 = vadd.f32 %v1442, %v1468
        %v1477 = vadd.f32 %v1443, %v1469
        %v1478 = vadd.f32 %v1444, %v1470
        %v1479 = vadd.f32 %v1445, %v1471
        %v1480 = vadd.f32 %v1446, %v1472
        %v1481 = vadd.f32 %v1447, %v1473
        %s1482 = scalar_lea.vmem %s704, 1408
        %v1483 = vld [vmem:[%s1482] sm:$0xff]
        %v1484 = vld [vmem:[%s1482 + $0x8] sm:$0xff]
        %v1485 = vld [vmem:[%s1482 + $0x10] sm:$0xff]
        %v1486 = vld [vmem:[%s1482 + $0x18] sm:$0xff]
        %v1487 = vld [vmem:[%s1482 + $0x20] sm:$0xff]
        %v1488 = vld [vmem:[%s1482 + $0x28] sm:$0xff]
        %v1489 = vld [vmem:[%s1482 + $0x30] sm:$0xff]
        %v1490 = vld [vmem:[%s1482 + $0x38] sm:$0xff]
        %s1491 = scalar_lea.vmem %s2, 1408
        %v1492 = vld [vmem:[%s1491] sm:$0xff]
        %v1493 = vld [vmem:[%s1491 + $0x8] sm:$0xff]
        %v1494 = vld [vmem:[%s1491 + $0x10] sm:$0xff]
        %v1495 = vld [vmem:[%s1491 + $0x18] sm:$0xff]
        %v1496 = vld [vmem:[%s1491 + $0x20] sm:$0xff]
        %v1497 = vld [vmem:[%s1491 + $0x28] sm:$0xff]
        %v1498 = vld [vmem:[%s1491 + $0x30] sm:$0xff]
        %v1499 = vld [vmem:[%s1491 + $0x38] sm:$0xff]
        %v1500 = vmul.f32 %v1483, %v1492
        %v1501 = vmul.f32 %v1484, %v1493
        %v1502 = vmul.f32 %v1485, %v1494
        %v1503 = vmul.f32 %v1486, %v1495
        %v1504 = vmul.f32 %v1487, %v1496
        %v1505 = vmul.f32 %v1488, %v1497
        %v1506 = vmul.f32 %v1489, %v1498
        %v1507 = vmul.f32 %v1490, %v1499
        %v1508 = vadd.f32 %v1474, %v1500
        %v1509 = vadd.f32 %v1475, %v1501
        %v1510 = vadd.f32 %v1476, %v1502
        %v1511 = vadd.f32 %v1477, %v1503
        %v1512 = vadd.f32 %v1478, %v1504
        %v1513 = vadd.f32 %v1479, %v1505
        %v1514 = vadd.f32 %v1480, %v1506
        %v1515 = vadd.f32 %v1481, %v1507
        %s1516 = scalar_lea.vmem %s704, 1472
        %v1517 = vld [vmem:[%s1516] sm:$0xff]
        %v1518 = vld [vmem:[%s1516 + $0x8] sm:$0xff]
        %v1519 = vld [vmem:[%s1516 + $0x10] sm:$0xff]
        %v1520 = vld [vmem:[%s1516 + $0x18] sm:$0xff]
        %v1521 = vld [vmem:[%s1516 + $0x20] sm:$0xff]
        %v1522 = vld [vmem:[%s1516 + $0x28] sm:$0xff]
        %v1523 = vld [vmem:[%s1516 + $0x30] sm:$0xff]
        %v1524 = vld [vmem:[%s1516 + $0x38] sm:$0xff]
        %s1525 = scalar_lea.vmem %s2, 1472
        %v1526 = vld [vmem:[%s1525] sm:$0xff]
        %v1527 = vld [vmem:[%s1525 + $0x8] sm:$0xff]
        %v1528 = vld [vmem:[%s1525 + $0x10] sm:$0xff]
        %v1529 = vld [vmem:[%s1525 + $0x18] sm:$0xff]
        %v1530 = vld [vmem:[%s1525 + $0x20] sm:$0xff]
        %v1531 = vld [vmem:[%s1525 + $0x28] sm:$0xff]
        %v1532 = vld [vmem:[%s1525 + $0x30] sm:$0xff]
        %v1533 = vld [vmem:[%s1525 + $0x38] sm:$0xff]
        %v1534 = vmul.f32 %v1517, %v1526
        %v1535 = vmul.f32 %v1518, %v1527
        %v1536 = vmul.f32 %v1519, %v1528
        %v1537 = vmul.f32 %v1520, %v1529
        %v1538 = vmul.f32 %v1521, %v1530
        %v1539 = vmul.f32 %v1522, %v1531
        %v1540 = vmul.f32 %v1523, %v1532
        %v1541 = vmul.f32 %v1524, %v1533
        %v1542 = vadd.f32 %v1508, %v1534
        %v1543 = vadd.f32 %v1509, %v1535
        %v1544 = vadd.f32 %v1510, %v1536
        %v1545 = vadd.f32 %v1511, %v1537
        %v1546 = vadd.f32 %v1512, %v1538
        %v1547 = vadd.f32 %v1513, %v1539
        %v1548 = vadd.f32 %v1514, %v1540
        %v1549 = vadd.f32 %v1515, %v1541
        %s1550 = scalar_lea.vmem %s704, 1536
        %v1551 = vld [vmem:[%s1550] sm:$0xff]
        %v1552 = vld [vmem:[%s1550 + $0x8] sm:$0xff]
        %v1553 = vld [vmem:[%s1550 + $0x10] sm:$0xff]
        %v1554 = vld [vmem:[%s1550 + $0x18] sm:$0xff]
        %v1555 = vld [vmem:[%s1550 + $0x20] sm:$0xff]
        %v1556 = vld [vmem:[%s1550 + $0x28] sm:$0xff]
        %v1557 = vld [vmem:[%s1550 + $0x30] sm:$0xff]
        %v1558 = vld [vmem:[%s1550 + $0x38] sm:$0xff]
        %s1559 = scalar_lea.vmem %s2, 1536
        %v1560 = vld [vmem:[%s1559] sm:$0xff]
        %v1561 = vld [vmem:[%s1559 + $0x8] sm:$0xff]
        %v1562 = vld [vmem:[%s1559 + $0x10] sm:$0xff]
        %v1563 = vld [vmem:[%s1559 + $0x18] sm:$0xff]
        %v1564 = vld [vmem:[%s1559 + $0x20] sm:$0xff]
        %v1565 = vld [vmem:[%s1559 + $0x28] sm:$0xff]
        %v1566 = vld [vmem:[%s1559 + $0x30] sm:$0xff]
        %v1567 = vld [vmem:[%s1559 + $0x38] sm:$0xff]
        %v1568 = vmul.f32 %v1551, %v1560
        %v1569 = vmul.f32 %v1552, %v1561
        %v1570 = vmul.f32 %v1553, %v1562
        %v1571 = vmul.f32 %v1554, %v1563
        %v1572 = vmul.f32 %v1555, %v1564
        %v1573 = vmul.f32 %v1556, %v1565
        %v1574 = vmul.f32 %v1557, %v1566
        %v1575 = vmul.f32 %v1558, %v1567
        %v1576 = vadd.f32 %v1542, %v1568
        %v1577 = vadd.f32 %v1543, %v1569
        %v1578 = vadd.f32 %v1544, %v1570
        %v1579 = vadd.f32 %v1545, %v1571
        %v1580 = vadd.f32 %v1546, %v1572
        %v1581 = vadd.f32 %v1547, %v1573
        %v1582 = vadd.f32 %v1548, %v1574
        %v1583 = vadd.f32 %v1549, %v1575
        %s1584 = scalar_lea.vmem %s704, 1600
        %v1585 = vld [vmem:[%s1584] sm:$0xff]
        %v1586 = vld [vmem:[%s1584 + $0x8] sm:$0xff]
        %v1587 = vld [vmem:[%s1584 + $0x10] sm:$0xff]
        %v1588 = vld [vmem:[%s1584 + $0x18] sm:$0xff]
        %v1589 = vld [vmem:[%s1584 + $0x20] sm:$0xff]
        %v1590 = vld [vmem:[%s1584 + $0x28] sm:$0xff]
        %v1591 = vld [vmem:[%s1584 + $0x30] sm:$0xff]
        %v1592 = vld [vmem:[%s1584 + $0x38] sm:$0xff]
        %s1593 = scalar_lea.vmem %s2, 1600
        %v1594 = vld [vmem:[%s1593] sm:$0xff]
        %v1595 = vld [vmem:[%s1593 + $0x8] sm:$0xff]
        %v1596 = vld [vmem:[%s1593 + $0x10] sm:$0xff]
        %v1597 = vld [vmem:[%s1593 + $0x18] sm:$0xff]
        %v1598 = vld [vmem:[%s1593 + $0x20] sm:$0xff]
        %v1599 = vld [vmem:[%s1593 + $0x28] sm:$0xff]
        %v1600 = vld [vmem:[%s1593 + $0x30] sm:$0xff]
        %v1601 = vld [vmem:[%s1593 + $0x38] sm:$0xff]
        %v1602 = vmul.f32 %v1585, %v1594
        %v1603 = vmul.f32 %v1586, %v1595
        %v1604 = vmul.f32 %v1587, %v1596
        %v1605 = vmul.f32 %v1588, %v1597
        %v1606 = vmul.f32 %v1589, %v1598
        %v1607 = vmul.f32 %v1590, %v1599
        %v1608 = vmul.f32 %v1591, %v1600
        %v1609 = vmul.f32 %v1592, %v1601
        %v1610 = vadd.f32 %v1576, %v1602
        %v1611 = vadd.f32 %v1577, %v1603
        %v1612 = vadd.f32 %v1578, %v1604
        %v1613 = vadd.f32 %v1579, %v1605
        %v1614 = vadd.f32 %v1580, %v1606
        %v1615 = vadd.f32 %v1581, %v1607
        %v1616 = vadd.f32 %v1582, %v1608
        %v1617 = vadd.f32 %v1583, %v1609
        %s1618 = scalar_lea.vmem %s704, 1664
        %v1619 = vld [vmem:[%s1618] sm:$0xff]
        %v1620 = vld [vmem:[%s1618 + $0x8] sm:$0xff]
        %v1621 = vld [vmem:[%s1618 + $0x10] sm:$0xff]
        %v1622 = vld [vmem:[%s1618 + $0x18] sm:$0xff]
        %v1623 = vld [vmem:[%s1618 + $0x20] sm:$0xff]
        %v1624 = vld [vmem:[%s1618 + $0x28] sm:$0xff]
        %v1625 = vld [vmem:[%s1618 + $0x30] sm:$0xff]
        %v1626 = vld [vmem:[%s1618 + $0x38] sm:$0xff]
        %s1627 = scalar_lea.vmem %s2, 1664
        %v1628 = vld [vmem:[%s1627] sm:$0xff]
        %v1629 = vld [vmem:[%s1627 + $0x8] sm:$0xff]
        %v1630 = vld [vmem:[%s1627 + $0x10] sm:$0xff]
        %v1631 = vld [vmem:[%s1627 + $0x18] sm:$0xff]
        %v1632 = vld [vmem:[%s1627 + $0x20] sm:$0xff]
        %v1633 = vld [vmem:[%s1627 + $0x28] sm:$0xff]
        %v1634 = vld [vmem:[%s1627 + $0x30] sm:$0xff]
        %v1635 = vld [vmem:[%s1627 + $0x38] sm:$0xff]
        %v1636 = vmul.f32 %v1619, %v1628
        %v1637 = vmul.f32 %v1620, %v1629
        %v1638 = vmul.f32 %v1621, %v1630
        %v1639 = vmul.f32 %v1622, %v1631
        %v1640 = vmul.f32 %v1623, %v1632
        %v1641 = vmul.f32 %v1624, %v1633
        %v1642 = vmul.f32 %v1625, %v1634
        %v1643 = vmul.f32 %v1626, %v1635
        %v1644 = vadd.f32 %v1610, %v1636
        %v1645 = vadd.f32 %v1611, %v1637
        %v1646 = vadd.f32 %v1612, %v1638
        %v1647 = vadd.f32 %v1613, %v1639
        %v1648 = vadd.f32 %v1614, %v1640
        %v1649 = vadd.f32 %v1615, %v1641
        %v1650 = vadd.f32 %v1616, %v1642
        %v1651 = vadd.f32 %v1617, %v1643
        %s1652 = scalar_lea.vmem %s704, 1728
        %v1653 = vld [vmem:[%s1652] sm:$0xff]
        %v1654 = vld [vmem:[%s1652 + $0x8] sm:$0xff]
        %v1655 = vld [vmem:[%s1652 + $0x10] sm:$0xff]
        %v1656 = vld [vmem:[%s1652 + $0x18] sm:$0xff]
        %v1657 = vld [vmem:[%s1652 + $0x20] sm:$0xff]
        %v1658 = vld [vmem:[%s1652 + $0x28] sm:$0xff]
        %v1659 = vld [vmem:[%s1652 + $0x30] sm:$0xff]
        %v1660 = vld [vmem:[%s1652 + $0x38] sm:$0xff]
        %s1661 = scalar_lea.vmem %s2, 1728
        %v1662 = vld [vmem:[%s1661] sm:$0xff]
        %v1663 = vld [vmem:[%s1661 + $0x8] sm:$0xff]
        %v1664 = vld [vmem:[%s1661 + $0x10] sm:$0xff]
        %v1665 = vld [vmem:[%s1661 + $0x18] sm:$0xff]
        %v1666 = vld [vmem:[%s1661 + $0x20] sm:$0xff]
        %v1667 = vld [vmem:[%s1661 + $0x28] sm:$0xff]
        %v1668 = vld [vmem:[%s1661 + $0x30] sm:$0xff]
        %v1669 = vld [vmem:[%s1661 + $0x38] sm:$0xff]
        %v1670 = vmul.f32 %v1653, %v1662
        %v1671 = vmul.f32 %v1654, %v1663
        %v1672 = vmul.f32 %v1655, %v1664
        %v1673 = vmul.f32 %v1656, %v1665
        %v1674 = vmul.f32 %v1657, %v1666
        %v1675 = vmul.f32 %v1658, %v1667
        %v1676 = vmul.f32 %v1659, %v1668
        %v1677 = vmul.f32 %v1660, %v1669
        %v1678 = vadd.f32 %v1644, %v1670
        %v1679 = vadd.f32 %v1645, %v1671
        %v1680 = vadd.f32 %v1646, %v1672
        %v1681 = vadd.f32 %v1647, %v1673
        %v1682 = vadd.f32 %v1648, %v1674
        %v1683 = vadd.f32 %v1649, %v1675
        %v1684 = vadd.f32 %v1650, %v1676
        %v1685 = vadd.f32 %v1651, %v1677
        %s1686 = scalar_lea.vmem %s704, 1792
        %v1687 = vld [vmem:[%s1686] sm:$0xff]
        %v1688 = vld [vmem:[%s1686 + $0x8] sm:$0xff]
        %v1689 = vld [vmem:[%s1686 + $0x10] sm:$0xff]
        %v1690 = vld [vmem:[%s1686 + $0x18] sm:$0xff]
        %v1691 = vld [vmem:[%s1686 + $0x20] sm:$0xff]
        %v1692 = vld [vmem:[%s1686 + $0x28] sm:$0xff]
        %v1693 = vld [vmem:[%s1686 + $0x30] sm:$0xff]
        %v1694 = vld [vmem:[%s1686 + $0x38] sm:$0xff]
        %s1695 = scalar_lea.vmem %s2, 1792
        %v1696 = vld [vmem:[%s1695] sm:$0xff]
        %v1697 = vld [vmem:[%s1695 + $0x8] sm:$0xff]
        %v1698 = vld [vmem:[%s1695 + $0x10] sm:$0xff]
        %v1699 = vld [vmem:[%s1695 + $0x18] sm:$0xff]
        %v1700 = vld [vmem:[%s1695 + $0x20] sm:$0xff]
        %v1701 = vld [vmem:[%s1695 + $0x28] sm:$0xff]
        %v1702 = vld [vmem:[%s1695 + $0x30] sm:$0xff]
        %v1703 = vld [vmem:[%s1695 + $0x38] sm:$0xff]
        %v1704 = vmul.f32 %v1687, %v1696
        %v1705 = vmul.f32 %v1688, %v1697
        %v1706 = vmul.f32 %v1689, %v1698
        %v1707 = vmul.f32 %v1690, %v1699
        %v1708 = vmul.f32 %v1691, %v1700
        %v1709 = vmul.f32 %v1692, %v1701
        %v1710 = vmul.f32 %v1693, %v1702
        %v1711 = vmul.f32 %v1694, %v1703
        %v1712 = vadd.f32 %v1678, %v1704
        %v1713 = vadd.f32 %v1679, %v1705
        %v1714 = vadd.f32 %v1680, %v1706
        %v1715 = vadd.f32 %v1681, %v1707
        %v1716 = vadd.f32 %v1682, %v1708
        %v1717 = vadd.f32 %v1683, %v1709
        %v1718 = vadd.f32 %v1684, %v1710
        %v1719 = vadd.f32 %v1685, %v1711
        %s1720 = scalar_lea.vmem %s704, 1856
        %v1721 = vld [vmem:[%s1720] sm:$0xff]
        %v1722 = vld [vmem:[%s1720 + $0x8] sm:$0xff]
        %v1723 = vld [vmem:[%s1720 + $0x10] sm:$0xff]
        %v1724 = vld [vmem:[%s1720 + $0x18] sm:$0xff]
        %v1725 = vld [vmem:[%s1720 + $0x20] sm:$0xff]
        %v1726 = vld [vmem:[%s1720 + $0x28] sm:$0xff]
        %v1727 = vld [vmem:[%s1720 + $0x30] sm:$0xff]
        %v1728 = vld [vmem:[%s1720 + $0x38] sm:$0xff]
        %s1729 = scalar_lea.vmem %s2, 1856
        %v1730 = vld [vmem:[%s1729] sm:$0xff]
        %v1731 = vld [vmem:[%s1729 + $0x8] sm:$0xff]
        %v1732 = vld [vmem:[%s1729 + $0x10] sm:$0xff]
        %v1733 = vld [vmem:[%s1729 + $0x18] sm:$0xff]
        %v1734 = vld [vmem:[%s1729 + $0x20] sm:$0xff]
        %v1735 = vld [vmem:[%s1729 + $0x28] sm:$0xff]
        %v1736 = vld [vmem:[%s1729 + $0x30] sm:$0xff]
        %v1737 = vld [vmem:[%s1729 + $0x38] sm:$0xff]
        %v1738 = vmul.f32 %v1721, %v1730
        %v1739 = vmul.f32 %v1722, %v1731
        %v1740 = vmul.f32 %v1723, %v1732
        %v1741 = vmul.f32 %v1724, %v1733
        %v1742 = vmul.f32 %v1725, %v1734
        %v1743 = vmul.f32 %v1726, %v1735
        %v1744 = vmul.f32 %v1727, %v1736
        %v1745 = vmul.f32 %v1728, %v1737
        %v1746 = vadd.f32 %v1712, %v1738
        %v1747 = vadd.f32 %v1713, %v1739
        %v1748 = vadd.f32 %v1714, %v1740
        %v1749 = vadd.f32 %v1715, %v1741
        %v1750 = vadd.f32 %v1716, %v1742
        %v1751 = vadd.f32 %v1717, %v1743
        %v1752 = vadd.f32 %v1718, %v1744
        %v1753 = vadd.f32 %v1719, %v1745
        %s1754 = scalar_lea.vmem %s704, 1920
        %v1755 = vld [vmem:[%s1754] sm:$0xff]
        %v1756 = vld [vmem:[%s1754 + $0x8] sm:$0xff]
        %v1757 = vld [vmem:[%s1754 + $0x10] sm:$0xff]
        %v1758 = vld [vmem:[%s1754 + $0x18] sm:$0xff]
        %v1759 = vld [vmem:[%s1754 + $0x20] sm:$0xff]
        %v1760 = vld [vmem:[%s1754 + $0x28] sm:$0xff]
        %v1761 = vld [vmem:[%s1754 + $0x30] sm:$0xff]
        %v1762 = vld [vmem:[%s1754 + $0x38] sm:$0xff]
        %s1763 = scalar_lea.vmem %s2, 1920
        %v1764 = vld [vmem:[%s1763] sm:$0xff]
        %v1765 = vld [vmem:[%s1763 + $0x8] sm:$0xff]
        %v1766 = vld [vmem:[%s1763 + $0x10] sm:$0xff]
        %v1767 = vld [vmem:[%s1763 + $0x18] sm:$0xff]
        %v1768 = vld [vmem:[%s1763 + $0x20] sm:$0xff]
        %v1769 = vld [vmem:[%s1763 + $0x28] sm:$0xff]
        %v1770 = vld [vmem:[%s1763 + $0x30] sm:$0xff]
        %v1771 = vld [vmem:[%s1763 + $0x38] sm:$0xff]
        %v1772 = vmul.f32 %v1755, %v1764
        %v1773 = vmul.f32 %v1756, %v1765
        %v1774 = vmul.f32 %v1757, %v1766
        %v1775 = vmul.f32 %v1758, %v1767
        %v1776 = vmul.f32 %v1759, %v1768
        %v1777 = vmul.f32 %v1760, %v1769
        %v1778 = vmul.f32 %v1761, %v1770
        %v1779 = vmul.f32 %v1762, %v1771
        %v1780 = vadd.f32 %v1746, %v1772
        %v1781 = vadd.f32 %v1747, %v1773
        %v1782 = vadd.f32 %v1748, %v1774
        %v1783 = vadd.f32 %v1749, %v1775
        %v1784 = vadd.f32 %v1750, %v1776
        %v1785 = vadd.f32 %v1751, %v1777
        %v1786 = vadd.f32 %v1752, %v1778
        %v1787 = vadd.f32 %v1753, %v1779
        %s1788 = scalar_lea.vmem %s704, 1984
        %v1789 = vld [vmem:[%s1788] sm:$0xff]
        %v1790 = vld [vmem:[%s1788 + $0x8] sm:$0xff]
        %v1791 = vld [vmem:[%s1788 + $0x10] sm:$0xff]
        %v1792 = vld [vmem:[%s1788 + $0x18] sm:$0xff]
        %v1793 = vld [vmem:[%s1788 + $0x20] sm:$0xff]
        %v1794 = vld [vmem:[%s1788 + $0x28] sm:$0xff]
        %v1795 = vld [vmem:[%s1788 + $0x30] sm:$0xff]
        %v1796 = vld [vmem:[%s1788 + $0x38] sm:$0xff]
        %s1797 = scalar_lea.vmem %s2, 1984
        %v1798 = vld [vmem:[%s1797] sm:$0xff]
        %v1799 = vld [vmem:[%s1797 + $0x8] sm:$0xff]
        %v1800 = vld [vmem:[%s1797 + $0x10] sm:$0xff]
        %v1801 = vld [vmem:[%s1797 + $0x18] sm:$0xff]
        %v1802 = vld [vmem:[%s1797 + $0x20] sm:$0xff]
        %v1803 = vld [vmem:[%s1797 + $0x28] sm:$0xff]
        %v1804 = vld [vmem:[%s1797 + $0x30] sm:$0xff]
        %v1805 = vld [vmem:[%s1797 + $0x38] sm:$0xff]
        %v1806 = vmul.f32 %v1789, %v1798
        %v1807 = vmul.f32 %v1790, %v1799
        %v1808 = vmul.f32 %v1791, %v1800
        %v1809 = vmul.f32 %v1792, %v1801
        %v1810 = vmul.f32 %v1793, %v1802
        %v1811 = vmul.f32 %v1794, %v1803
        %v1812 = vmul.f32 %v1795, %v1804
        %v1813 = vmul.f32 %v1796, %v1805
        %v1814 = vadd.f32 %v1780, %v1806
        %v1815 = vadd.f32 %v1781, %v1807
        %v1816 = vadd.f32 %v1782, %v1808
        %v1817 = vadd.f32 %v1783, %v1809
        %v1818 = vadd.f32 %v1784, %v1810
        %v1819 = vadd.f32 %v1785, %v1811
        %v1820 = vadd.f32 %v1786, %v1812
        %v1821 = vadd.f32 %v1787, %v1813
        %s1822 = scalar_lea.vmem %s704, 2048
        %v1823 = vld [vmem:[%s1822] sm:$0xff]
        %v1824 = vld [vmem:[%s1822 + $0x8] sm:$0xff]
        %v1825 = vld [vmem:[%s1822 + $0x10] sm:$0xff]
        %v1826 = vld [vmem:[%s1822 + $0x18] sm:$0xff]
        %v1827 = vld [vmem:[%s1822 + $0x20] sm:$0xff]
        %v1828 = vld [vmem:[%s1822 + $0x28] sm:$0xff]
        %v1829 = vld [vmem:[%s1822 + $0x30] sm:$0xff]
        %v1830 = vld [vmem:[%s1822 + $0x38] sm:$0xff]
        %s1831 = scalar_lea.vmem %s2, 2048
        %v1832 = vld [vmem:[%s1831] sm:$0xff]
        %v1833 = vld [vmem:[%s1831 + $0x8] sm:$0xff]
        %v1834 = vld [vmem:[%s1831 + $0x10] sm:$0xff]
        %v1835 = vld [vmem:[%s1831 + $0x18] sm:$0xff]
        %v1836 = vld [vmem:[%s1831 + $0x20] sm:$0xff]
        %v1837 = vld [vmem:[%s1831 + $0x28] sm:$0xff]
        %v1838 = vld [vmem:[%s1831 + $0x30] sm:$0xff]
        %v1839 = vld [vmem:[%s1831 + $0x38] sm:$0xff]
        %v1840 = vmul.f32 %v1823, %v1832
        %v1841 = vmul.f32 %v1824, %v1833
        %v1842 = vmul.f32 %v1825, %v1834
        %v1843 = vmul.f32 %v1826, %v1835
        %v1844 = vmul.f32 %v1827, %v1836
        %v1845 = vmul.f32 %v1828, %v1837
        %v1846 = vmul.f32 %v1829, %v1838
        %v1847 = vmul.f32 %v1830, %v1839
        %v1848 = vadd.f32 %v1814, %v1840
        %v1849 = vadd.f32 %v1815, %v1841
        %v1850 = vadd.f32 %v1816, %v1842
        %v1851 = vadd.f32 %v1817, %v1843
        %v1852 = vadd.f32 %v1818, %v1844
        %v1853 = vadd.f32 %v1819, %v1845
        %v1854 = vadd.f32 %v1820, %v1846
        %v1855 = vadd.f32 %v1821, %v1847
        %s1856 = scalar_lea.vmem %s704, 2112
        %v1857 = vld [vmem:[%s1856] sm:$0xff]
        %v1858 = vld [vmem:[%s1856 + $0x8] sm:$0xff]
        %v1859 = vld [vmem:[%s1856 + $0x10] sm:$0xff]
        %v1860 = vld [vmem:[%s1856 + $0x18] sm:$0xff]
        %v1861 = vld [vmem:[%s1856 + $0x20] sm:$0xff]
        %v1862 = vld [vmem:[%s1856 + $0x28] sm:$0xff]
        %v1863 = vld [vmem:[%s1856 + $0x30] sm:$0xff]
        %v1864 = vld [vmem:[%s1856 + $0x38] sm:$0xff]
        %s1865 = scalar_lea.vmem %s2, 2112
        %v1866 = vld [vmem:[%s1865] sm:$0xff]
        %v1867 = vld [vmem:[%s1865 + $0x8] sm:$0xff]
        %v1868 = vld [vmem:[%s1865 + $0x10] sm:$0xff]
        %v1869 = vld [vmem:[%s1865 + $0x18] sm:$0xff]
        %v1870 = vld [vmem:[%s1865 + $0x20] sm:$0xff]
        %v1871 = vld [vmem:[%s1865 + $0x28] sm:$0xff]
        %v1872 = vld [vmem:[%s1865 + $0x30] sm:$0xff]
        %v1873 = vld [vmem:[%s1865 + $0x38] sm:$0xff]
        %v1874 = vmul.f32 %v1857, %v1866
        %v1875 = vmul.f32 %v1858, %v1867
        %v1876 = vmul.f32 %v1859, %v1868
        %v1877 = vmul.f32 %v1860, %v1869
        %v1878 = vmul.f32 %v1861, %v1870
        %v1879 = vmul.f32 %v1862, %v1871
        %v1880 = vmul.f32 %v1863, %v1872
        %v1881 = vmul.f32 %v1864, %v1873
        %v1882 = vadd.f32 %v1848, %v1874
        %v1883 = vadd.f32 %v1849, %v1875
        %v1884 = vadd.f32 %v1850, %v1876
        %v1885 = vadd.f32 %v1851, %v1877
        %v1886 = vadd.f32 %v1852, %v1878
        %v1887 = vadd.f32 %v1853, %v1879
        %v1888 = vadd.f32 %v1854, %v1880
        %v1889 = vadd.f32 %v1855, %v1881
        %s1890 = scalar_lea.vmem %s704, 2176
        %v1891 = vld [vmem:[%s1890] sm:$0xff]
        %v1892 = vld [vmem:[%s1890 + $0x8] sm:$0xff]
        %v1893 = vld [vmem:[%s1890 + $0x10] sm:$0xff]
        %v1894 = vld [vmem:[%s1890 + $0x18] sm:$0xff]
        %v1895 = vld [vmem:[%s1890 + $0x20] sm:$0xff]
        %v1896 = vld [vmem:[%s1890 + $0x28] sm:$0xff]
        %v1897 = vld [vmem:[%s1890 + $0x30] sm:$0xff]
        %v1898 = vld [vmem:[%s1890 + $0x38] sm:$0xff]
        %s1899 = scalar_lea.vmem %s2, 2176
        %v1900 = vld [vmem:[%s1899] sm:$0xff]
        %v1901 = vld [vmem:[%s1899 + $0x8] sm:$0xff]
        %v1902 = vld [vmem:[%s1899 + $0x10] sm:$0xff]
        %v1903 = vld [vmem:[%s1899 + $0x18] sm:$0xff]
        %v1904 = vld [vmem:[%s1899 + $0x20] sm:$0xff]
        %v1905 = vld [vmem:[%s1899 + $0x28] sm:$0xff]
        %v1906 = vld [vmem:[%s1899 + $0x30] sm:$0xff]
        %v1907 = vld [vmem:[%s1899 + $0x38] sm:$0xff]
        %v1908 = vmul.f32 %v1891, %v1900
        %v1909 = vmul.f32 %v1892, %v1901
        %v1910 = vmul.f32 %v1893, %v1902
        %v1911 = vmul.f32 %v1894, %v1903
        %v1912 = vmul.f32 %v1895, %v1904
        %v1913 = vmul.f32 %v1896, %v1905
        %v1914 = vmul.f32 %v1897, %v1906
        %v1915 = vmul.f32 %v1898, %v1907
        %v1916 = vadd.f32 %v1882, %v1908
        %v1917 = vadd.f32 %v1883, %v1909
        %v1918 = vadd.f32 %v1884, %v1910
        %v1919 = vadd.f32 %v1885, %v1911
        %v1920 = vadd.f32 %v1886, %v1912
        %v1921 = vadd.f32 %v1887, %v1913
        %v1922 = vadd.f32 %v1888, %v1914
        %v1923 = vadd.f32 %v1889, %v1915
        %s1924 = scalar_lea.vmem %s704, 2240
        %v1925 = vld [vmem:[%s1924] sm:$0xff]
        %v1926 = vld [vmem:[%s1924 + $0x8] sm:$0xff]
        %v1927 = vld [vmem:[%s1924 + $0x10] sm:$0xff]
        %v1928 = vld [vmem:[%s1924 + $0x18] sm:$0xff]
        %v1929 = vld [vmem:[%s1924 + $0x20] sm:$0xff]
        %v1930 = vld [vmem:[%s1924 + $0x28] sm:$0xff]
        %v1931 = vld [vmem:[%s1924 + $0x30] sm:$0xff]
        %v1932 = vld [vmem:[%s1924 + $0x38] sm:$0xff]
        %s1933 = scalar_lea.vmem %s2, 2240
        %v1934 = vld [vmem:[%s1933] sm:$0xff]
        %v1935 = vld [vmem:[%s1933 + $0x8] sm:$0xff]
        %v1936 = vld [vmem:[%s1933 + $0x10] sm:$0xff]
        %v1937 = vld [vmem:[%s1933 + $0x18] sm:$0xff]
        %v1938 = vld [vmem:[%s1933 + $0x20] sm:$0xff]
        %v1939 = vld [vmem:[%s1933 + $0x28] sm:$0xff]
        %v1940 = vld [vmem:[%s1933 + $0x30] sm:$0xff]
        %v1941 = vld [vmem:[%s1933 + $0x38] sm:$0xff]
        %v1942 = vmul.f32 %v1925, %v1934
        %v1943 = vmul.f32 %v1926, %v1935
        %v1944 = vmul.f32 %v1927, %v1936
        %v1945 = vmul.f32 %v1928, %v1937
        %v1946 = vmul.f32 %v1929, %v1938
        %v1947 = vmul.f32 %v1930, %v1939
        %v1948 = vmul.f32 %v1931, %v1940
        %v1949 = vmul.f32 %v1932, %v1941
        %v1950 = vadd.f32 %v1916, %v1942
        %v1951 = vadd.f32 %v1917, %v1943
        %v1952 = vadd.f32 %v1918, %v1944
        %v1953 = vadd.f32 %v1919, %v1945
        %v1954 = vadd.f32 %v1920, %v1946
        %v1955 = vadd.f32 %v1921, %v1947
        %v1956 = vadd.f32 %v1922, %v1948
        %v1957 = vadd.f32 %v1923, %v1949
        %s1958 = scalar_lea.vmem %s704, 2304
        %v1959 = vld [vmem:[%s1958] sm:$0xff]
        %v1960 = vld [vmem:[%s1958 + $0x8] sm:$0xff]
        %v1961 = vld [vmem:[%s1958 + $0x10] sm:$0xff]
        %v1962 = vld [vmem:[%s1958 + $0x18] sm:$0xff]
        %v1963 = vld [vmem:[%s1958 + $0x20] sm:$0xff]
        %v1964 = vld [vmem:[%s1958 + $0x28] sm:$0xff]
        %v1965 = vld [vmem:[%s1958 + $0x30] sm:$0xff]
        %v1966 = vld [vmem:[%s1958 + $0x38] sm:$0xff]
        %s1967 = scalar_lea.vmem %s2, 2304
        %v1968 = vld [vmem:[%s1967] sm:$0xff]
        %v1969 = vld [vmem:[%s1967 + $0x8] sm:$0xff]
        %v1970 = vld [vmem:[%s1967 + $0x10] sm:$0xff]
        %v1971 = vld [vmem:[%s1967 + $0x18] sm:$0xff]
        %v1972 = vld [vmem:[%s1967 + $0x20] sm:$0xff]
        %v1973 = vld [vmem:[%s1967 + $0x28] sm:$0xff]
        %v1974 = vld [vmem:[%s1967 + $0x30] sm:$0xff]
        %v1975 = vld [vmem:[%s1967 + $0x38] sm:$0xff]
        %v1976 = vmul.f32 %v1959, %v1968
        %v1977 = vmul.f32 %v1960, %v1969
        %v1978 = vmul.f32 %v1961, %v1970
        %v1979 = vmul.f32 %v1962, %v1971
        %v1980 = vmul.f32 %v1963, %v1972
        %v1981 = vmul.f32 %v1964, %v1973
        %v1982 = vmul.f32 %v1965, %v1974
        %v1983 = vmul.f32 %v1966, %v1975
        %v1984 = vadd.f32 %v1950, %v1976
        %v1985 = vadd.f32 %v1951, %v1977
        %v1986 = vadd.f32 %v1952, %v1978
        %v1987 = vadd.f32 %v1953, %v1979
        %v1988 = vadd.f32 %v1954, %v1980
        %v1989 = vadd.f32 %v1955, %v1981
        %v1990 = vadd.f32 %v1956, %v1982
        %v1991 = vadd.f32 %v1957, %v1983
        %s1992 = scalar_lea.vmem %s704, 2368
        %v1993 = vld [vmem:[%s1992] sm:$0xff]
        %v1994 = vld [vmem:[%s1992 + $0x8] sm:$0xff]
        %v1995 = vld [vmem:[%s1992 + $0x10] sm:$0xff]
        %v1996 = vld [vmem:[%s1992 + $0x18] sm:$0xff]
        %v1997 = vld [vmem:[%s1992 + $0x20] sm:$0xff]
        %v1998 = vld [vmem:[%s1992 + $0x28] sm:$0xff]
        %v1999 = vld [vmem:[%s1992 + $0x30] sm:$0xff]
        %v2000 = vld [vmem:[%s1992 + $0x38] sm:$0xff]
        %s2001 = scalar_lea.vmem %s2, 2368
        %v2002 = vld [vmem:[%s2001] sm:$0xff]
        %v2003 = vld [vmem:[%s2001 + $0x8] sm:$0xff]
        %v2004 = vld [vmem:[%s2001 + $0x10] sm:$0xff]
        %v2005 = vld [vmem:[%s2001 + $0x18] sm:$0xff]
        %v2006 = vld [vmem:[%s2001 + $0x20] sm:$0xff]
        %v2007 = vld [vmem:[%s2001 + $0x28] sm:$0xff]
        %v2008 = vld [vmem:[%s2001 + $0x30] sm:$0xff]
        %v2009 = vld [vmem:[%s2001 + $0x38] sm:$0xff]
        %v2010 = vmul.f32 %v1993, %v2002
        %v2011 = vmul.f32 %v1994, %v2003
        %v2012 = vmul.f32 %v1995, %v2004
        %v2013 = vmul.f32 %v1996, %v2005
        %v2014 = vmul.f32 %v1997, %v2006
        %v2015 = vmul.f32 %v1998, %v2007
        %v2016 = vmul.f32 %v1999, %v2008
        %v2017 = vmul.f32 %v2000, %v2009
        %v2018 = vadd.f32 %v1984, %v2010
        %v2019 = vadd.f32 %v1985, %v2011
        %v2020 = vadd.f32 %v1986, %v2012
        %v2021 = vadd.f32 %v1987, %v2013
        %v2022 = vadd.f32 %v1988, %v2014
        %v2023 = vadd.f32 %v1989, %v2015
        %v2024 = vadd.f32 %v1990, %v2016
        %v2025 = vadd.f32 %v1991, %v2017
        %s2026 = scalar_lea.vmem %s704, 2432
        %v2027 = vld [vmem:[%s2026] sm:$0xff]
        %v2028 = vld [vmem:[%s2026 + $0x8] sm:$0xff]
        %v2029 = vld [vmem:[%s2026 + $0x10] sm:$0xff]
        %v2030 = vld [vmem:[%s2026 + $0x18] sm:$0xff]
        %v2031 = vld [vmem:[%s2026 + $0x20] sm:$0xff]
        %v2032 = vld [vmem:[%s2026 + $0x28] sm:$0xff]
        %v2033 = vld [vmem:[%s2026 + $0x30] sm:$0xff]
        %v2034 = vld [vmem:[%s2026 + $0x38] sm:$0xff]
        %s2035 = scalar_lea.vmem %s2, 2432
        %v2036 = vld [vmem:[%s2035] sm:$0xff]
        %v2037 = vld [vmem:[%s2035 + $0x8] sm:$0xff]
        %v2038 = vld [vmem:[%s2035 + $0x10] sm:$0xff]
        %v2039 = vld [vmem:[%s2035 + $0x18] sm:$0xff]
        %v2040 = vld [vmem:[%s2035 + $0x20] sm:$0xff]
        %v2041 = vld [vmem:[%s2035 + $0x28] sm:$0xff]
        %v2042 = vld [vmem:[%s2035 + $0x30] sm:$0xff]
        %v2043 = vld [vmem:[%s2035 + $0x38] sm:$0xff]
        %v2044 = vmul.f32 %v2027, %v2036
        %v2045 = vmul.f32 %v2028, %v2037
        %v2046 = vmul.f32 %v2029, %v2038
        %v2047 = vmul.f32 %v2030, %v2039
        %v2048 = vmul.f32 %v2031, %v2040
        %v2049 = vmul.f32 %v2032, %v2041
        %v2050 = vmul.f32 %v2033, %v2042
        %v2051 = vmul.f32 %v2034, %v2043
        %v2052 = vadd.f32 %v2018, %v2044
        %v2053 = vadd.f32 %v2019, %v2045
        %v2054 = vadd.f32 %v2020, %v2046
        %v2055 = vadd.f32 %v2021, %v2047
        %v2056 = vadd.f32 %v2022, %v2048
        %v2057 = vadd.f32 %v2023, %v2049
        %v2058 = vadd.f32 %v2024, %v2050
        %v2059 = vadd.f32 %v2025, %v2051
        %s2060 = scalar_lea.vmem %s704, 2496
        %v2061 = vld [vmem:[%s2060] sm:$0xff]
        %v2062 = vld [vmem:[%s2060 + $0x8] sm:$0xff]
        %v2063 = vld [vmem:[%s2060 + $0x10] sm:$0xff]
        %v2064 = vld [vmem:[%s2060 + $0x18] sm:$0xff]
        %v2065 = vld [vmem:[%s2060 + $0x20] sm:$0xff]
        %v2066 = vld [vmem:[%s2060 + $0x28] sm:$0xff]
        %v2067 = vld [vmem:[%s2060 + $0x30] sm:$0xff]
        %v2068 = vld [vmem:[%s2060 + $0x38] sm:$0xff]
        %s2069 = scalar_lea.vmem %s2, 2496
        %v2070 = vld [vmem:[%s2069] sm:$0xff]
        %v2071 = vld [vmem:[%s2069 + $0x8] sm:$0xff]
        %v2072 = vld [vmem:[%s2069 + $0x10] sm:$0xff]
        %v2073 = vld [vmem:[%s2069 + $0x18] sm:$0xff]
        %v2074 = vld [vmem:[%s2069 + $0x20] sm:$0xff]
        %v2075 = vld [vmem:[%s2069 + $0x28] sm:$0xff]
        %v2076 = vld [vmem:[%s2069 + $0x30] sm:$0xff]
        %v2077 = vld [vmem:[%s2069 + $0x38] sm:$0xff]
        %v2078 = vmul.f32 %v2061, %v2070
        %v2079 = vmul.f32 %v2062, %v2071
        %v2080 = vmul.f32 %v2063, %v2072
        %v2081 = vmul.f32 %v2064, %v2073
        %v2082 = vmul.f32 %v2065, %v2074
        %v2083 = vmul.f32 %v2066, %v2075
        %v2084 = vmul.f32 %v2067, %v2076
        %v2085 = vmul.f32 %v2068, %v2077
        %v2086 = vadd.f32 %v2052, %v2078
        %v2087 = vadd.f32 %v2053, %v2079
        %v2088 = vadd.f32 %v2054, %v2080
        %v2089 = vadd.f32 %v2055, %v2081
        %v2090 = vadd.f32 %v2056, %v2082
        %v2091 = vadd.f32 %v2057, %v2083
        %v2092 = vadd.f32 %v2058, %v2084
        %v2093 = vadd.f32 %v2059, %v2085
        %s2094 = scalar_lea.vmem %s704, 2560
        %v2095 = vld [vmem:[%s2094] sm:$0xff]
        %v2096 = vld [vmem:[%s2094 + $0x8] sm:$0xff]
        %v2097 = vld [vmem:[%s2094 + $0x10] sm:$0xff]
        %v2098 = vld [vmem:[%s2094 + $0x18] sm:$0xff]
        %v2099 = vld [vmem:[%s2094 + $0x20] sm:$0xff]
        %v2100 = vld [vmem:[%s2094 + $0x28] sm:$0xff]
        %v2101 = vld [vmem:[%s2094 + $0x30] sm:$0xff]
        %v2102 = vld [vmem:[%s2094 + $0x38] sm:$0xff]
        %s2103 = scalar_lea.vmem %s2, 2560
        %v2104 = vld [vmem:[%s2103] sm:$0xff]
        %v2105 = vld [vmem:[%s2103 + $0x8] sm:$0xff]
        %v2106 = vld [vmem:[%s2103 + $0x10] sm:$0xff]
        %v2107 = vld [vmem:[%s2103 + $0x18] sm:$0xff]
        %v2108 = vld [vmem:[%s2103 + $0x20] sm:$0xff]
        %v2109 = vld [vmem:[%s2103 + $0x28] sm:$0xff]
        %v2110 = vld [vmem:[%s2103 + $0x30] sm:$0xff]
        %v2111 = vld [vmem:[%s2103 + $0x38] sm:$0xff]
        %v2112 = vmul.f32 %v2095, %v2104
        %v2113 = vmul.f32 %v2096, %v2105
        %v2114 = vmul.f32 %v2097, %v2106
        %v2115 = vmul.f32 %v2098, %v2107
        %v2116 = vmul.f32 %v2099, %v2108
        %v2117 = vmul.f32 %v2100, %v2109
        %v2118 = vmul.f32 %v2101, %v2110
        %v2119 = vmul.f32 %v2102, %v2111
        %v2120 = vadd.f32 %v2086, %v2112
        %v2121 = vadd.f32 %v2087, %v2113
        %v2122 = vadd.f32 %v2088, %v2114
        %v2123 = vadd.f32 %v2089, %v2115
        %v2124 = vadd.f32 %v2090, %v2116
        %v2125 = vadd.f32 %v2091, %v2117
        %v2126 = vadd.f32 %v2092, %v2118
        %v2127 = vadd.f32 %v2093, %v2119
        %s2128 = scalar_lea.vmem %s704, 2624
        %v2129 = vld [vmem:[%s2128] sm:$0xff]
        %v2130 = vld [vmem:[%s2128 + $0x8] sm:$0xff]
        %v2131 = vld [vmem:[%s2128 + $0x10] sm:$0xff]
        %v2132 = vld [vmem:[%s2128 + $0x18] sm:$0xff]
        %v2133 = vld [vmem:[%s2128 + $0x20] sm:$0xff]
        %v2134 = vld [vmem:[%s2128 + $0x28] sm:$0xff]
        %v2135 = vld [vmem:[%s2128 + $0x30] sm:$0xff]
        %v2136 = vld [vmem:[%s2128 + $0x38] sm:$0xff]
        %s2137 = scalar_lea.vmem %s2, 2624
        %v2138 = vld [vmem:[%s2137] sm:$0xff]
        %v2139 = vld [vmem:[%s2137 + $0x8] sm:$0xff]
        %v2140 = vld [vmem:[%s2137 + $0x10] sm:$0xff]
        %v2141 = vld [vmem:[%s2137 + $0x18] sm:$0xff]
        %v2142 = vld [vmem:[%s2137 + $0x20] sm:$0xff]
        %v2143 = vld [vmem:[%s2137 + $0x28] sm:$0xff]
        %v2144 = vld [vmem:[%s2137 + $0x30] sm:$0xff]
        %v2145 = vld [vmem:[%s2137 + $0x38] sm:$0xff]
        %v2146 = vmul.f32 %v2129, %v2138
        %v2147 = vmul.f32 %v2130, %v2139
        %v2148 = vmul.f32 %v2131, %v2140
        %v2149 = vmul.f32 %v2132, %v2141
        %v2150 = vmul.f32 %v2133, %v2142
        %v2151 = vmul.f32 %v2134, %v2143
        %v2152 = vmul.f32 %v2135, %v2144
        %v2153 = vmul.f32 %v2136, %v2145
        %v2154 = vadd.f32 %v2120, %v2146
        %v2155 = vadd.f32 %v2121, %v2147
        %v2156 = vadd.f32 %v2122, %v2148
        %v2157 = vadd.f32 %v2123, %v2149
        %v2158 = vadd.f32 %v2124, %v2150
        %v2159 = vadd.f32 %v2125, %v2151
        %v2160 = vadd.f32 %v2126, %v2152
        %v2161 = vadd.f32 %v2127, %v2153
        %s2162 = scalar_lea.vmem %s704, 2688
        %v2163 = vld [vmem:[%s2162] sm:$0xff]
        %v2164 = vld [vmem:[%s2162 + $0x8] sm:$0xff]
        %v2165 = vld [vmem:[%s2162 + $0x10] sm:$0xff]
        %v2166 = vld [vmem:[%s2162 + $0x18] sm:$0xff]
        %v2167 = vld [vmem:[%s2162 + $0x20] sm:$0xff]
        %v2168 = vld [vmem:[%s2162 + $0x28] sm:$0xff]
        %v2169 = vld [vmem:[%s2162 + $0x30] sm:$0xff]
        %v2170 = vld [vmem:[%s2162 + $0x38] sm:$0xff]
        %s2171 = scalar_lea.vmem %s2, 2688
        %v2172 = vld [vmem:[%s2171] sm:$0xff]
        %v2173 = vld [vmem:[%s2171 + $0x8] sm:$0xff]
        %v2174 = vld [vmem:[%s2171 + $0x10] sm:$0xff]
        %v2175 = vld [vmem:[%s2171 + $0x18] sm:$0xff]
        %v2176 = vld [vmem:[%s2171 + $0x20] sm:$0xff]
        %v2177 = vld [vmem:[%s2171 + $0x28] sm:$0xff]
        %v2178 = vld [vmem:[%s2171 + $0x30] sm:$0xff]
        %v2179 = vld [vmem:[%s2171 + $0x38] sm:$0xff]
        %v2180 = vmul.f32 %v2163, %v2172
        %v2181 = vmul.f32 %v2164, %v2173
        %v2182 = vmul.f32 %v2165, %v2174
        %v2183 = vmul.f32 %v2166, %v2175
        %v2184 = vmul.f32 %v2167, %v2176
        %v2185 = vmul.f32 %v2168, %v2177
        %v2186 = vmul.f32 %v2169, %v2178
        %v2187 = vmul.f32 %v2170, %v2179
        %v2188 = vadd.f32 %v2154, %v2180
        %v2189 = vadd.f32 %v2155, %v2181
        %v2190 = vadd.f32 %v2156, %v2182
        %v2191 = vadd.f32 %v2157, %v2183
        %v2192 = vadd.f32 %v2158, %v2184
        %v2193 = vadd.f32 %v2159, %v2185
        %v2194 = vadd.f32 %v2160, %v2186
        %v2195 = vadd.f32 %v2161, %v2187
        %s2196 = scalar_lea.vmem %s704, 2752
        %v2197 = vld [vmem:[%s2196] sm:$0xff]
        %v2198 = vld [vmem:[%s2196 + $0x8] sm:$0xff]
        %v2199 = vld [vmem:[%s2196 + $0x10] sm:$0xff]
        %v2200 = vld [vmem:[%s2196 + $0x18] sm:$0xff]
        %v2201 = vld [vmem:[%s2196 + $0x20] sm:$0xff]
        %v2202 = vld [vmem:[%s2196 + $0x28] sm:$0xff]
        %v2203 = vld [vmem:[%s2196 + $0x30] sm:$0xff]
        %v2204 = vld [vmem:[%s2196 + $0x38] sm:$0xff]
        %s2205 = scalar_lea.vmem %s2, 2752
        %v2206 = vld [vmem:[%s2205] sm:$0xff]
        %v2207 = vld [vmem:[%s2205 + $0x8] sm:$0xff]
        %v2208 = vld [vmem:[%s2205 + $0x10] sm:$0xff]
        %v2209 = vld [vmem:[%s2205 + $0x18] sm:$0xff]
        %v2210 = vld [vmem:[%s2205 + $0x20] sm:$0xff]
        %v2211 = vld [vmem:[%s2205 + $0x28] sm:$0xff]
        %v2212 = vld [vmem:[%s2205 + $0x30] sm:$0xff]
        %v2213 = vld [vmem:[%s2205 + $0x38] sm:$0xff]
        %v2214 = vmul.f32 %v2197, %v2206
        %v2215 = vmul.f32 %v2198, %v2207
        %v2216 = vmul.f32 %v2199, %v2208
        %v2217 = vmul.f32 %v2200, %v2209
        %v2218 = vmul.f32 %v2201, %v2210
        %v2219 = vmul.f32 %v2202, %v2211
        %v2220 = vmul.f32 %v2203, %v2212
        %v2221 = vmul.f32 %v2204, %v2213
        %v2222 = vadd.f32 %v2188, %v2214
        %v2223 = vadd.f32 %v2189, %v2215
        %v2224 = vadd.f32 %v2190, %v2216
        %v2225 = vadd.f32 %v2191, %v2217
        %v2226 = vadd.f32 %v2192, %v2218
        %v2227 = vadd.f32 %v2193, %v2219
        %v2228 = vadd.f32 %v2194, %v2220
        %v2229 = vadd.f32 %v2195, %v2221
        %s2230 = scalar_lea.vmem %s704, 2816
        %v2231 = vld [vmem:[%s2230] sm:$0xff]
        %v2232 = vld [vmem:[%s2230 + $0x8] sm:$0xff]
        %v2233 = vld [vmem:[%s2230 + $0x10] sm:$0xff]
        %v2234 = vld [vmem:[%s2230 + $0x18] sm:$0xff]
        %v2235 = vld [vmem:[%s2230 + $0x20] sm:$0xff]
        %v2236 = vld [vmem:[%s2230 + $0x28] sm:$0xff]
        %v2237 = vld [vmem:[%s2230 + $0x30] sm:$0xff]
        %v2238 = vld [vmem:[%s2230 + $0x38] sm:$0xff]
        %s2239 = scalar_lea.vmem %s2, 2816
        %v2240 = vld [vmem:[%s2239] sm:$0xff]
        %v2241 = vld [vmem:[%s2239 + $0x8] sm:$0xff]
        %v2242 = vld [vmem:[%s2239 + $0x10] sm:$0xff]
        %v2243 = vld [vmem:[%s2239 + $0x18] sm:$0xff]
        %v2244 = vld [vmem:[%s2239 + $0x20] sm:$0xff]
        %v2245 = vld [vmem:[%s2239 + $0x28] sm:$0xff]
        %v2246 = vld [vmem:[%s2239 + $0x30] sm:$0xff]
        %v2247 = vld [vmem:[%s2239 + $0x38] sm:$0xff]
        %v2248 = vmul.f32 %v2231, %v2240
        %v2249 = vmul.f32 %v2232, %v2241
        %v2250 = vmul.f32 %v2233, %v2242
        %v2251 = vmul.f32 %v2234, %v2243
        %v2252 = vmul.f32 %v2235, %v2244
        %v2253 = vmul.f32 %v2236, %v2245
        %v2254 = vmul.f32 %v2237, %v2246
        %v2255 = vmul.f32 %v2238, %v2247
        %v2256 = vadd.f32 %v2222, %v2248
        %v2257 = vadd.f32 %v2223, %v2249
        %v2258 = vadd.f32 %v2224, %v2250
        %v2259 = vadd.f32 %v2225, %v2251
        %v2260 = vadd.f32 %v2226, %v2252
        %v2261 = vadd.f32 %v2227, %v2253
        %v2262 = vadd.f32 %v2228, %v2254
        %v2263 = vadd.f32 %v2229, %v2255
        %s2264 = scalar_lea.vmem %s704, 2880
        %v2265 = vld [vmem:[%s2264] sm:$0xff]
        %v2266 = vld [vmem:[%s2264 + $0x8] sm:$0xff]
        %v2267 = vld [vmem:[%s2264 + $0x10] sm:$0xff]
        %v2268 = vld [vmem:[%s2264 + $0x18] sm:$0xff]
        %v2269 = vld [vmem:[%s2264 + $0x20] sm:$0xff]
        %v2270 = vld [vmem:[%s2264 + $0x28] sm:$0xff]
        %v2271 = vld [vmem:[%s2264 + $0x30] sm:$0xff]
        %v2272 = vld [vmem:[%s2264 + $0x38] sm:$0xff]
        %s2273 = scalar_lea.vmem %s2, 2880
        %v2274 = vld [vmem:[%s2273] sm:$0xff]
        %v2275 = vld [vmem:[%s2273 + $0x8] sm:$0xff]
        %v2276 = vld [vmem:[%s2273 + $0x10] sm:$0xff]
        %v2277 = vld [vmem:[%s2273 + $0x18] sm:$0xff]
        %v2278 = vld [vmem:[%s2273 + $0x20] sm:$0xff]
        %v2279 = vld [vmem:[%s2273 + $0x28] sm:$0xff]
        %v2280 = vld [vmem:[%s2273 + $0x30] sm:$0xff]
        %v2281 = vld [vmem:[%s2273 + $0x38] sm:$0xff]
        %v2282 = vmul.f32 %v2265, %v2274
        %v2283 = vmul.f32 %v2266, %v2275
        %v2284 = vmul.f32 %v2267, %v2276
        %v2285 = vmul.f32 %v2268, %v2277
        %v2286 = vmul.f32 %v2269, %v2278
        %v2287 = vmul.f32 %v2270, %v2279
        %v2288 = vmul.f32 %v2271, %v2280
        %v2289 = vmul.f32 %v2272, %v2281
        %v2290 = vadd.f32 %v2256, %v2282
        %v2291 = vadd.f32 %v2257, %v2283
        %v2292 = vadd.f32 %v2258, %v2284
        %v2293 = vadd.f32 %v2259, %v2285
        %v2294 = vadd.f32 %v2260, %v2286
        %v2295 = vadd.f32 %v2261, %v2287
        %v2296 = vadd.f32 %v2262, %v2288
        %v2297 = vadd.f32 %v2263, %v2289
        %s2298 = scalar_lea.vmem %s704, 2944
        %v2299 = vld [vmem:[%s2298] sm:$0xff]
        %v2300 = vld [vmem:[%s2298 + $0x8] sm:$0xff]
        %v2301 = vld [vmem:[%s2298 + $0x10] sm:$0xff]
        %v2302 = vld [vmem:[%s2298 + $0x18] sm:$0xff]
        %v2303 = vld [vmem:[%s2298 + $0x20] sm:$0xff]
        %v2304 = vld [vmem:[%s2298 + $0x28] sm:$0xff]
        %v2305 = vld [vmem:[%s2298 + $0x30] sm:$0xff]
        %v2306 = vld [vmem:[%s2298 + $0x38] sm:$0xff]
        %s2307 = scalar_lea.vmem %s2, 2944
        %v2308 = vld [vmem:[%s2307] sm:$0xff]
        %v2309 = vld [vmem:[%s2307 + $0x8] sm:$0xff]
        %v2310 = vld [vmem:[%s2307 + $0x10] sm:$0xff]
        %v2311 = vld [vmem:[%s2307 + $0x18] sm:$0xff]
        %v2312 = vld [vmem:[%s2307 + $0x20] sm:$0xff]
        %v2313 = vld [vmem:[%s2307 + $0x28] sm:$0xff]
        %v2314 = vld [vmem:[%s2307 + $0x30] sm:$0xff]
        %v2315 = vld [vmem:[%s2307 + $0x38] sm:$0xff]
        %v2316 = vmul.f32 %v2299, %v2308
        %v2317 = vmul.f32 %v2300, %v2309
        %v2318 = vmul.f32 %v2301, %v2310
        %v2319 = vmul.f32 %v2302, %v2311
        %v2320 = vmul.f32 %v2303, %v2312
        %v2321 = vmul.f32 %v2304, %v2313
        %v2322 = vmul.f32 %v2305, %v2314
        %v2323 = vmul.f32 %v2306, %v2315
        %v2324 = vadd.f32 %v2290, %v2316
        %v2325 = vadd.f32 %v2291, %v2317
        %v2326 = vadd.f32 %v2292, %v2318
        %v2327 = vadd.f32 %v2293, %v2319
        %v2328 = vadd.f32 %v2294, %v2320
        %v2329 = vadd.f32 %v2295, %v2321
        %v2330 = vadd.f32 %v2296, %v2322
        %v2331 = vadd.f32 %v2297, %v2323
        %s2332 = scalar_lea.vmem %s704, 3008
        %v2333 = vld [vmem:[%s2332] sm:$0xff]
        %v2334 = vld [vmem:[%s2332 + $0x8] sm:$0xff]
        %v2335 = vld [vmem:[%s2332 + $0x10] sm:$0xff]
        %v2336 = vld [vmem:[%s2332 + $0x18] sm:$0xff]
        %v2337 = vld [vmem:[%s2332 + $0x20] sm:$0xff]
        %v2338 = vld [vmem:[%s2332 + $0x28] sm:$0xff]
        %v2339 = vld [vmem:[%s2332 + $0x30] sm:$0xff]
        %v2340 = vld [vmem:[%s2332 + $0x38] sm:$0xff]
        %s2341 = scalar_lea.vmem %s2, 3008
        %v2342 = vld [vmem:[%s2341] sm:$0xff]
        %v2343 = vld [vmem:[%s2341 + $0x8] sm:$0xff]
        %v2344 = vld [vmem:[%s2341 + $0x10] sm:$0xff]
        %v2345 = vld [vmem:[%s2341 + $0x18] sm:$0xff]
        %v2346 = vld [vmem:[%s2341 + $0x20] sm:$0xff]
        %v2347 = vld [vmem:[%s2341 + $0x28] sm:$0xff]
        %v2348 = vld [vmem:[%s2341 + $0x30] sm:$0xff]
        %v2349 = vld [vmem:[%s2341 + $0x38] sm:$0xff]
        %v2350 = vmul.f32 %v2333, %v2342
        %v2351 = vmul.f32 %v2334, %v2343
        %v2352 = vmul.f32 %v2335, %v2344
        %v2353 = vmul.f32 %v2336, %v2345
        %v2354 = vmul.f32 %v2337, %v2346
        %v2355 = vmul.f32 %v2338, %v2347
        %v2356 = vmul.f32 %v2339, %v2348
        %v2357 = vmul.f32 %v2340, %v2349
        %v2358 = vadd.f32 %v2324, %v2350
        %v2359 = vadd.f32 %v2325, %v2351
        %v2360 = vadd.f32 %v2326, %v2352
        %v2361 = vadd.f32 %v2327, %v2353
        %v2362 = vadd.f32 %v2328, %v2354
        %v2363 = vadd.f32 %v2329, %v2355
        %v2364 = vadd.f32 %v2330, %v2356
        %v2365 = vadd.f32 %v2331, %v2357
        %s2366 = scalar_lea.vmem %s704, 3072
        %v2367 = vld [vmem:[%s2366] sm:$0xff]
        %v2368 = vld [vmem:[%s2366 + $0x8] sm:$0xff]
        %v2369 = vld [vmem:[%s2366 + $0x10] sm:$0xff]
        %v2370 = vld [vmem:[%s2366 + $0x18] sm:$0xff]
        %v2371 = vld [vmem:[%s2366 + $0x20] sm:$0xff]
        %v2372 = vld [vmem:[%s2366 + $0x28] sm:$0xff]
        %v2373 = vld [vmem:[%s2366 + $0x30] sm:$0xff]
        %v2374 = vld [vmem:[%s2366 + $0x38] sm:$0xff]
        %s2375 = scalar_lea.vmem %s2, 3072
        %v2376 = vld [vmem:[%s2375] sm:$0xff]
        %v2377 = vld [vmem:[%s2375 + $0x8] sm:$0xff]
        %v2378 = vld [vmem:[%s2375 + $0x10] sm:$0xff]
        %v2379 = vld [vmem:[%s2375 + $0x18] sm:$0xff]
        %v2380 = vld [vmem:[%s2375 + $0x20] sm:$0xff]
        %v2381 = vld [vmem:[%s2375 + $0x28] sm:$0xff]
        %v2382 = vld [vmem:[%s2375 + $0x30] sm:$0xff]
        %v2383 = vld [vmem:[%s2375 + $0x38] sm:$0xff]
        %v2384 = vmul.f32 %v2367, %v2376
        %v2385 = vmul.f32 %v2368, %v2377
        %v2386 = vmul.f32 %v2369, %v2378
        %v2387 = vmul.f32 %v2370, %v2379
        %v2388 = vmul.f32 %v2371, %v2380
        %v2389 = vmul.f32 %v2372, %v2381
        %v2390 = vmul.f32 %v2373, %v2382
        %v2391 = vmul.f32 %v2374, %v2383
        %v2392 = vadd.f32 %v2358, %v2384
        %v2393 = vadd.f32 %v2359, %v2385
        %v2394 = vadd.f32 %v2360, %v2386
        %v2395 = vadd.f32 %v2361, %v2387
        %v2396 = vadd.f32 %v2362, %v2388
        %v2397 = vadd.f32 %v2363, %v2389
        %v2398 = vadd.f32 %v2364, %v2390
        %v2399 = vadd.f32 %v2365, %v2391
        %v2401 = vlaneseq
        %v2402 = vshrl.u32 %v2401, 7
        %v2403 = vsub.s32 0, %v2402
        %v2404 = vrot.slane %v723, %v2403
        %v2406 = vadd.f32 %v2392, %v2404
        %v2407 = vadd.f32 %v2393, %v2404
        %v2408 = vadd.f32 %v2394, %v2404
        %v2409 = vadd.f32 %v2395, %v2404
        %v2410 = vadd.f32 %v2396, %v2404
        %v2411 = vadd.f32 %v2397, %v2404
        %v2412 = vadd.f32 %v2398, %v2404
        %v2413 = vadd.f32 %v2399, %v2404
        %v2414 = vmul.f32 %v2406, 0.5
        %v2415 = vmul.f32 %v2407, 0.5
        %v2416 = vmul.f32 %v2408, 0.5
        %v2417 = vmul.f32 %v2409, 0.5
        %v2418 = vmul.f32 %v2410, 0.5
        %v2419 = vmul.f32 %v2411, 0.5
        %v2420 = vmul.f32 %v2412, 0.5
        %v2421 = vmul.f32 %v2413, 0.5
        %v2422 = vmul.f32 %v2406, 0.70710677
        %v2423 = vmul.f32 %v2407, 0.70710677
        %v2424 = vmul.f32 %v2408, 0.70710677
        %v2425 = vmul.f32 %v2409, 0.70710677
        %v2426 = vmul.f32 %v2410, 0.70710677
        %v2427 = vmul.f32 %v2411, 0.70710677
        %v2428 = vmul.f32 %v2412, 0.70710677
        %v2429 = vmul.f32 %v2413, 0.70710677
        %vm2430 = vcmp.ge.f32.partialorder %v2422, 0.0
        %vm2431 = vcmp.ge.f32.partialorder %v2423, 0.0
        %vm2432 = vcmp.ge.f32.partialorder %v2424, 0.0
        %vm2433 = vcmp.ge.f32.partialorder %v2425, 0.0
        %vm2434 = vcmp.ge.f32.partialorder %v2426, 0.0
        %vm2435 = vcmp.ge.f32.partialorder %v2427, 0.0
        %vm2436 = vcmp.ge.f32.partialorder %v2428, 0.0
        %vm2437 = vcmp.ge.f32.partialorder %v2429, 0.0
        %v2438 = vsel %vm2430, 1.0, -1.0
        %v2439 = vsel %vm2431, 1.0, -1.0
        %v2440 = vsel %vm2432, 1.0, -1.0
        %v2441 = vsel %vm2433, 1.0, -1.0
        %v2442 = vsel %vm2434, 1.0, -1.0
        %v2443 = vsel %vm2435, 1.0, -1.0
        %v2444 = vsel %vm2436, 1.0, -1.0
        %v2445 = vsel %vm2437, 1.0, -1.0
        %v2446 = vand.u32 2147483647, %v2422
        %v2447 = vand.u32 2147483647, %v2423
        %v2448 = vand.u32 2147483647, %v2424
        %v2449 = vand.u32 2147483647, %v2425
        %v2450 = vand.u32 2147483647, %v2426
        %v2451 = vand.u32 2147483647, %v2427
        %v2452 = vand.u32 2147483647, %v2428
        %v2453 = vand.u32 2147483647, %v2429
        %v2454 = vmul.f32 %v2446, 0.3275911
        %v2455 = vmul.f32 %v2447, 0.3275911
        %v2456 = vmul.f32 %v2448, 0.3275911
        %v2457 = vmul.f32 %v2449, 0.3275911
        %v2458 = vmul.f32 %v2450, 0.3275911
        %v2459 = vmul.f32 %v2451, 0.3275911
        %v2460 = vmul.f32 %v2452, 0.3275911
        %v2461 = vmul.f32 %v2453, 0.3275911
        %v2462 = vadd.f32 %v2454, 1.0
        %v2463 = vadd.f32 %v2455, 1.0
        %v2464 = vadd.f32 %v2456, 1.0
        %v2465 = vadd.f32 %v2457, 1.0
        %v2466 = vadd.f32 %v2458, 1.0
        %v2467 = vadd.f32 %v2459, 1.0
        %v2468 = vadd.f32 %v2460, 1.0
        %v2469 = vadd.f32 %v2461, 1.0
        %v2470 = vrcp.pop %v2462
        %v2471 = vmul.f32 1.0, %v2470
        %v2472 = vrcp.pop %v2463
        %v2473 = vmul.f32 1.0, %v2472
        %v2474 = vrcp.pop %v2464
        %v2475 = vmul.f32 1.0, %v2474
        %v2476 = vrcp.pop %v2465
        %v2477 = vmul.f32 1.0, %v2476
        %v2478 = vrcp.pop %v2466
        %v2479 = vmul.f32 1.0, %v2478
        %v2480 = vrcp.pop %v2467
        %v2481 = vmul.f32 1.0, %v2480
        %v2482 = vrcp.pop %v2468
        %v2483 = vmul.f32 1.0, %v2482
        %v2484 = vrcp.pop %v2469
        %v2485 = vmul.f32 1.0, %v2484
        %v2486 = vmul.f32 %v2471, 1.0614054
        %v2487 = vmul.f32 %v2473, 1.0614054
        %v2488 = vmul.f32 %v2475, 1.0614054
        %v2489 = vmul.f32 %v2477, 1.0614054
        %v2490 = vmul.f32 %v2479, 1.0614054
        %v2491 = vmul.f32 %v2481, 1.0614054
        %v2492 = vmul.f32 %v2483, 1.0614054
        %v2493 = vmul.f32 %v2485, 1.0614054
        %v2494 = vadd.f32 %v2486, -1.4531521
        %v2495 = vadd.f32 %v2487, -1.4531521
        %v2496 = vadd.f32 %v2488, -1.4531521
        %v2497 = vadd.f32 %v2489, -1.4531521
        %v2498 = vadd.f32 %v2490, -1.4531521
        %v2499 = vadd.f32 %v2491, -1.4531521
        %v2500 = vadd.f32 %v2492, -1.4531521
        %v2501 = vadd.f32 %v2493, -1.4531521
        %v2502 = vmul.f32 %v2471, %v2494
        %v2503 = vmul.f32 %v2473, %v2495
        %v2504 = vmul.f32 %v2475, %v2496
        %v2505 = vmul.f32 %v2477, %v2497
        %v2506 = vmul.f32 %v2479, %v2498
        %v2507 = vmul.f32 %v2481, %v2499
        %v2508 = vmul.f32 %v2483, %v2500
        %v2509 = vmul.f32 %v2485, %v2501
        %v2510 = vadd.f32 %v2502, 1.4214138
        %v2511 = vadd.f32 %v2503, 1.4214138
        %v2512 = vadd.f32 %v2504, 1.4214138
        %v2513 = vadd.f32 %v2505, 1.4214138
        %v2514 = vadd.f32 %v2506, 1.4214138
        %v2515 = vadd.f32 %v2507, 1.4214138
        %v2516 = vadd.f32 %v2508, 1.4214138
        %v2517 = vadd.f32 %v2509, 1.4214138
        %v2518 = vmul.f32 %v2471, %v2510
        %v2519 = vmul.f32 %v2473, %v2511
        %v2520 = vmul.f32 %v2475, %v2512
        %v2521 = vmul.f32 %v2477, %v2513
        %v2522 = vmul.f32 %v2479, %v2514
        %v2523 = vmul.f32 %v2481, %v2515
        %v2524 = vmul.f32 %v2483, %v2516
        %v2525 = vmul.f32 %v2485, %v2517
        %v2526 = vadd.f32 %v2518, -0.28449672
        %v2527 = vadd.f32 %v2519, -0.28449672
        %v2528 = vadd.f32 %v2520, -0.28449672
        %v2529 = vadd.f32 %v2521, -0.28449672
        %v2530 = vadd.f32 %v2522, -0.28449672
        %v2531 = vadd.f32 %v2523, -0.28449672
        %v2532 = vadd.f32 %v2524, -0.28449672
        %v2533 = vadd.f32 %v2525, -0.28449672
        %v2534 = vmul.f32 %v2471, %v2526
        %v2535 = vmul.f32 %v2473, %v2527
        %v2536 = vmul.f32 %v2475, %v2528
        %v2537 = vmul.f32 %v2477, %v2529
        %v2538 = vmul.f32 %v2479, %v2530
        %v2539 = vmul.f32 %v2481, %v2531
        %v2540 = vmul.f32 %v2483, %v2532
        %v2541 = vmul.f32 %v2485, %v2533
        %v2542 = vadd.f32 %v2534, 0.2548296
        %v2543 = vadd.f32 %v2535, 0.2548296
        %v2544 = vadd.f32 %v2536, 0.2548296
        %v2545 = vadd.f32 %v2537, 0.2548296
        %v2546 = vadd.f32 %v2538, 0.2548296
        %v2547 = vadd.f32 %v2539, 0.2548296
        %v2548 = vadd.f32 %v2540, 0.2548296
        %v2549 = vadd.f32 %v2541, 0.2548296
        %v2550 = vmul.f32 %v2471, %v2542
        %v2551 = vmul.f32 %v2473, %v2543
        %v2552 = vmul.f32 %v2475, %v2544
        %v2553 = vmul.f32 %v2477, %v2545
        %v2554 = vmul.f32 %v2479, %v2546
        %v2555 = vmul.f32 %v2481, %v2547
        %v2556 = vmul.f32 %v2483, %v2548
        %v2557 = vmul.f32 %v2485, %v2549
        %v2558 = vsub.f32 0.0, %v2446
        %v2559 = vsub.f32 0.0, %v2447
        %v2560 = vsub.f32 0.0, %v2448
        %v2561 = vsub.f32 0.0, %v2449
        %v2562 = vsub.f32 0.0, %v2450
        %v2563 = vsub.f32 0.0, %v2451
        %v2564 = vsub.f32 0.0, %v2452
        %v2565 = vsub.f32 0.0, %v2453
        %v2566 = vmul.f32 %v2558, %v2446
        %v2567 = vmul.f32 %v2559, %v2447
        %v2568 = vmul.f32 %v2560, %v2448
        %v2569 = vmul.f32 %v2561, %v2449
        %v2570 = vmul.f32 %v2562, %v2450
        %v2571 = vmul.f32 %v2563, %v2451
        %v2572 = vmul.f32 %v2564, %v2452
        %v2573 = vmul.f32 %v2565, %v2453
        %v2574 = vmul.f32 %v2566, 1.442695
        %v2575 = vpow.pop %v2574
        %v2576 = vmul.f32 %v2567, 1.442695
        %v2577 = vpow.pop %v2576
        %v2578 = vmul.f32 %v2568, 1.442695
        %v2579 = vpow.pop %v2578
        %v2580 = vmul.f32 %v2569, 1.442695
        %v2581 = vpow.pop %v2580
        %v2582 = vmul.f32 %v2570, 1.442695
        %v2583 = vpow.pop %v2582
        %v2584 = vmul.f32 %v2571, 1.442695
        %v2585 = vpow.pop %v2584
        %v2586 = vmul.f32 %v2572, 1.442695
        %v2587 = vpow.pop %v2586
        %v2588 = vmul.f32 %v2573, 1.442695
        %v2589 = vpow.pop %v2588
        %v2590 = vmul.f32 %v2550, %v2575
        %v2591 = vmul.f32 %v2551, %v2577
        %v2592 = vmul.f32 %v2552, %v2579
        %v2593 = vmul.f32 %v2553, %v2581
        %v2594 = vmul.f32 %v2554, %v2583
        %v2595 = vmul.f32 %v2555, %v2585
        %v2596 = vmul.f32 %v2556, %v2587
        %v2597 = vmul.f32 %v2557, %v2589
        %v2598 = vsub.f32 1.0, %v2590
        %v2599 = vsub.f32 1.0, %v2591
        %v2600 = vsub.f32 1.0, %v2592
        %v2601 = vsub.f32 1.0, %v2593
        %v2602 = vsub.f32 1.0, %v2594
        %v2603 = vsub.f32 1.0, %v2595
        %v2604 = vsub.f32 1.0, %v2596
        %v2605 = vsub.f32 1.0, %v2597
        %v2606 = vmul.f32 %v2438, %v2598
        %v2607 = vmul.f32 %v2439, %v2599
        %v2608 = vmul.f32 %v2440, %v2600
        %v2609 = vmul.f32 %v2441, %v2601
        %v2610 = vmul.f32 %v2442, %v2602
        %v2611 = vmul.f32 %v2443, %v2603
        %v2612 = vmul.f32 %v2444, %v2604
        %v2613 = vmul.f32 %v2445, %v2605
        %v2614 = vadd.f32 %v2606, 1.0
        %v2615 = vadd.f32 %v2607, 1.0
        %v2616 = vadd.f32 %v2608, 1.0
        %v2617 = vadd.f32 %v2609, 1.0
        %v2618 = vadd.f32 %v2610, 1.0
        %v2619 = vadd.f32 %v2611, 1.0
        %v2620 = vadd.f32 %v2612, 1.0
        %v2621 = vadd.f32 %v2613, 1.0
        %v2622 = vmul.f32 %v2414, %v2614
        %v2623 = vmul.f32 %v2415, %v2615
        %v2624 = vmul.f32 %v2416, %v2616
        %v2625 = vmul.f32 %v2417, %v2617
        %v2626 = vmul.f32 %v2418, %v2618
        %v2627 = vmul.f32 %v2419, %v2619
        %v2628 = vmul.f32 %v2420, %v2620
        %v2629 = vmul.f32 %v2421, %v2621
        %v2630 = vld [vmem:[%s4] sm:$0xff]
        %v2631 = vld [vmem:[%s4 + $0x8] sm:$0xff]
        %v2632 = vld [vmem:[%s4 + $0x10] sm:$0xff]
        %v2633 = vld [vmem:[%s4 + $0x18] sm:$0xff]
        %v2635 = vlaneseq
        %v2636 = vshrl.u32 %v2635, 7
        %v2637 = vsub.s32 0, %v2636
        %v2638 = vrot.slane %v724, %v2637
        %vm2640 = vcmask 261120
        %v2642 = vsel %vm2640, %v2622, 0
        %v2645 = vsel %vm2640, %v2623, 0
        %v2648 = vsel %vm2640, %v2624, 0
        %v2651 = vsel %vm2640, %v2625, 0
        %v2654 = vsel %vm2640, %v2626, 0
        %v2657 = vsel %vm2640, %v2627, 0
        %v2660 = vsel %vm2640, %v2628, 0
        %v2663 = vsel %vm2640, %v2629, 0
        %2665 = vmatprep.subr.mxu0 0.0
        %2666 = vmatpush1.msra.mxu0 %v2630
        %2667 = vmatprep.subr.mxu0 0.0
        %2668 = vmatpush1.msra.mxu0 %v2631
        %2669 = vmatprep.subr.mxu0 0.0
        %2670 = vmatpush1.msra.mxu0 %v2632
        %2671 = vmatprep.subr.mxu0 0.0
        %2672 = vmatpush1.msra.mxu0 %v2633
        %2673 = vmatprep.subr.mxu0 0.0
        %2674 = vmatpush1.msra.mxu0 0.0
        %2675 = vmatprep.subr.mxu0 0.0
        %2676 = vmatpush1.msra.mxu0 0.0
        %2677 = vmatprep.subr.mxu0 0.0
        %2678 = vmatpush1.msra.mxu0 0.0
        %2679 = vmatprep.subr.mxu0 0.0
        %2680 = vmatpush1.msra.mxu0 0.0
        %2681 = vmatprep.subr.mxu0 0.0
        %2682 = vmatpush1.msra.mxu0 0.0
        %2683 = vmatprep.subr.mxu0 0.0
        %2684 = vmatpush1.msra.mxu0 0.0
        %2685 = vmatprep.subr.mxu0 0.0
        %2686 = vmatpush1.msra.mxu0 0.0
        %2687 = vmatprep.subr.mxu0 0.0
        %2688 = vmatpush1.msra.mxu0 0.0
        %2689 = vmatprep.subr.mxu0 0.0
        %2690 = vmatpush1.msra.mxu0 0.0
        %2691 = vmatprep.subr.mxu0 0.0
        %2692 = vmatpush1.msra.mxu0 0.0
        %2693 = vmatprep.subr.mxu0 0.0
        %2694 = vmatpush1.msra.mxu0 0.0
        %2695 = vmatprep.subr.mxu0 0.0
        %2696 = vmatpush1.msra.mxu0 0.0
        %2697 = vmatprep.subr.mxu0 0.0
        %2698 = vmatpush1.msra.mxu0 0.0
        %2699 = vmatprep.subr.mxu0 0.0
        %2700 = vmatpush1.msra.mxu0 0.0
        %2701 = vmatprep.subr.mxu0 0.0
        %2702 = vmatpush1.msra.mxu0 0.0
        %2703 = vmatprep.subr.mxu0 0.0
        %2704 = vmatpush1.msra.mxu0 0.0
        %2705 = vmatprep.subr.mxu0 0.0
        %2706 = vmatpush1.msra.mxu0 0.0
        %2707 = vmatprep.subr.mxu0 0.0
        %2708 = vmatpush1.msra.mxu0 0.0
        %2709 = vmatprep.subr.mxu0 0.0
        %2710 = vmatpush1.msra.mxu0 0.0
        %2711 = vmatprep.subr.mxu0 0.0
        %2712 = vmatpush1.msra.mxu0 0.0
        %2713 = vmatprep.subr.mxu0 0.0
        %2714 = vmatpush1.msra.mxu0 0.0
        %2715 = vmatprep.subr.mxu0 0.0
        %2716 = vmatpush1.msra.mxu0 0.0
        %2717 = vmatprep.subr.mxu0 0.0
        %2718 = vmatpush1.msra.mxu0 0.0
        %2719 = vmatprep.subr.mxu0 0.0
        %2720 = vmatpush1.msra.mxu0 0.0
        %2721 = vmatprep.subr.mxu0 0.0
        %2722 = vmatpush1.msra.mxu0 0.0
        %2723 = vmatprep.subr.mxu0 0.0
        %2724 = vmatpush1.msra.mxu0 0.0
        %2725 = vmatprep.subr.mxu0 0.0
        %2726 = vmatpush1.msra.mxu0 0.0
        %2727 = vmatprep.subr.mxu0 0.0
        %2728 = vmatpush1.msra.mxu0 0.0
        %2729 = vmatprep.mubr.f32.mxu0 0.0
        %2730 = vmatmul.mubr.f32.gmra.mrb[0].mxu0 %v2642
        %v2731 = vpop.f32.mrb[0].mxu0
        %v2732 = vadd.f32 %v2638, %v2731
        %v2733 = vpop.f32.mrb[0].mxu0
        %2734 = vmatprep.mubr.f32.mxu0 0.0
        %2735 = vmatmul.mubr.f32.gmra.mrb[0].mxu0 %v2645
        %v2736 = vpop.f32.mrb[0].mxu0
        %v2737 = vadd.f32 %v2638, %v2736
        %v2738 = vpop.f32.mrb[0].mxu0
        %2739 = vmatprep.mubr.f32.mxu0 0.0
        %2740 = vmatmul.mubr.f32.gmra.mrb[0].mxu0 %v2648
        %v2741 = vpop.f32.mrb[0].mxu0
        %v2742 = vadd.f32 %v2638, %v2741
        %v2743 = vpop.f32.mrb[0].mxu0
        %2744 = vmatprep.mubr.f32.mxu0 0.0
        %2745 = vmatmul.mubr.f32.gmra.mrb[0].mxu0 %v2651
        %v2746 = vpop.f32.mrb[0].mxu0
        %v2747 = vadd.f32 %v2638, %v2746
        %v2748 = vpop.f32.mrb[0].mxu0
        %2749 = vmatprep.mubr.f32.mxu0 0.0
        %2750 = vmatmul.mubr.f32.gmra.mrb[0].mxu0 %v2654
        %v2751 = vpop.f32.mrb[0].mxu0
        %v2752 = vadd.f32 %v2638, %v2751
        %v2753 = vpop.f32.mrb[0].mxu0
        %2754 = vmatprep.mubr.f32.mxu0 0.0
        %2755 = vmatmul.mubr.f32.gmra.mrb[0].mxu0 %v2657
        %v2756 = vpop.f32.mrb[0].mxu0
        %v2757 = vadd.f32 %v2638, %v2756
        %v2758 = vpop.f32.mrb[0].mxu0
        %2759 = vmatprep.mubr.f32.mxu0 0.0
        %2760 = vmatmul.mubr.f32.gmra.mrb[0].mxu0 %v2660
        %v2761 = vpop.f32.mrb[0].mxu0
        %v2762 = vadd.f32 %v2638, %v2761
        %v2763 = vpop.f32.mrb[0].mxu0
        %2764 = vmatprep.mubr.f32.mxu0 0.0
        %2765 = vmatmul.mubr.f32.gmra.mrb[0].mxu0 %v2663
        %v2766 = vpop.f32.mrb[0].mxu0
        %v2767 = vadd.f32 %v2638, %v2766
        %v2768 = vpop.f32.mrb[0].mxu0
        %2769 = vdwg.mxu0
        %v2770 = vmul.f32 %v2732, 0.5
        %v2771 = vmul.f32 %v2737, 0.5
        %v2772 = vmul.f32 %v2742, 0.5
        %v2773 = vmul.f32 %v2747, 0.5
        %v2774 = vmul.f32 %v2752, 0.5
        %v2775 = vmul.f32 %v2757, 0.5
        %v2776 = vmul.f32 %v2762, 0.5
        %v2777 = vmul.f32 %v2767, 0.5
        %v2778 = vmul.f32 %v2732, 0.70710677
        %v2779 = vmul.f32 %v2737, 0.70710677
        %v2780 = vmul.f32 %v2742, 0.70710677
        %v2781 = vmul.f32 %v2747, 0.70710677
        %v2782 = vmul.f32 %v2752, 0.70710677
        %v2783 = vmul.f32 %v2757, 0.70710677
        %v2784 = vmul.f32 %v2762, 0.70710677
        %v2785 = vmul.f32 %v2767, 0.70710677
        %vm2786 = vcmp.ge.f32.partialorder %v2778, 0.0
        %vm2787 = vcmp.ge.f32.partialorder %v2779, 0.0
        %vm2788 = vcmp.ge.f32.partialorder %v2780, 0.0
        %vm2789 = vcmp.ge.f32.partialorder %v2781, 0.0
        %vm2790 = vcmp.ge.f32.partialorder %v2782, 0.0
        %vm2791 = vcmp.ge.f32.partialorder %v2783, 0.0
        %vm2792 = vcmp.ge.f32.partialorder %v2784, 0.0
        %vm2793 = vcmp.ge.f32.partialorder %v2785, 0.0
        %v2794 = vsel %vm2786, 1.0, -1.0
        %v2795 = vsel %vm2787, 1.0, -1.0
        %v2796 = vsel %vm2788, 1.0, -1.0
        %v2797 = vsel %vm2789, 1.0, -1.0
        %v2798 = vsel %vm2790, 1.0, -1.0
        %v2799 = vsel %vm2791, 1.0, -1.0
        %v2800 = vsel %vm2792, 1.0, -1.0
        %v2801 = vsel %vm2793, 1.0, -1.0
        %v2802 = vand.u32 2147483647, %v2778
        %v2803 = vand.u32 2147483647, %v2779
        %v2804 = vand.u32 2147483647, %v2780
        %v2805 = vand.u32 2147483647, %v2781
        %v2806 = vand.u32 2147483647, %v2782
        %v2807 = vand.u32 2147483647, %v2783
        %v2808 = vand.u32 2147483647, %v2784
        %v2809 = vand.u32 2147483647, %v2785
        %v2810 = vmul.f32 %v2802, 0.3275911
        %v2811 = vmul.f32 %v2803, 0.3275911
        %v2812 = vmul.f32 %v2804, 0.3275911
        %v2813 = vmul.f32 %v2805, 0.3275911
        %v2814 = vmul.f32 %v2806, 0.3275911
        %v2815 = vmul.f32 %v2807, 0.3275911
        %v2816 = vmul.f32 %v2808, 0.3275911
        %v2817 = vmul.f32 %v2809, 0.3275911
        %v2818 = vadd.f32 %v2810, 1.0
        %v2819 = vadd.f32 %v2811, 1.0
        %v2820 = vadd.f32 %v2812, 1.0
        %v2821 = vadd.f32 %v2813, 1.0
        %v2822 = vadd.f32 %v2814, 1.0
        %v2823 = vadd.f32 %v2815, 1.0
        %v2824 = vadd.f32 %v2816, 1.0
        %v2825 = vadd.f32 %v2817, 1.0
        %v2826 = vrcp.pop %v2818
        %v2827 = vmul.f32 1.0, %v2826
        %v2828 = vrcp.pop %v2819
        %v2829 = vmul.f32 1.0, %v2828
        %v2830 = vrcp.pop %v2820
        %v2831 = vmul.f32 1.0, %v2830
        %v2832 = vrcp.pop %v2821
        %v2833 = vmul.f32 1.0, %v2832
        %v2834 = vrcp.pop %v2822
        %v2835 = vmul.f32 1.0, %v2834
        %v2836 = vrcp.pop %v2823
        %v2837 = vmul.f32 1.0, %v2836
        %v2838 = vrcp.pop %v2824
        %v2839 = vmul.f32 1.0, %v2838
        %v2840 = vrcp.pop %v2825
        %v2841 = vmul.f32 1.0, %v2840
        %v2842 = vmul.f32 %v2827, 1.0614054
        %v2843 = vmul.f32 %v2829, 1.0614054
        %v2844 = vmul.f32 %v2831, 1.0614054
        %v2845 = vmul.f32 %v2833, 1.0614054
        %v2846 = vmul.f32 %v2835, 1.0614054
        %v2847 = vmul.f32 %v2837, 1.0614054
        %v2848 = vmul.f32 %v2839, 1.0614054
        %v2849 = vmul.f32 %v2841, 1.0614054
        %v2850 = vadd.f32 %v2842, -1.4531521
        %v2851 = vadd.f32 %v2843, -1.4531521
        %v2852 = vadd.f32 %v2844, -1.4531521
        %v2853 = vadd.f32 %v2845, -1.4531521
        %v2854 = vadd.f32 %v2846, -1.4531521
        %v2855 = vadd.f32 %v2847, -1.4531521
        %v2856 = vadd.f32 %v2848, -1.4531521
        %v2857 = vadd.f32 %v2849, -1.4531521
        %v2858 = vmul.f32 %v2827, %v2850
        %v2859 = vmul.f32 %v2829, %v2851
        %v2860 = vmul.f32 %v2831, %v2852
        %v2861 = vmul.f32 %v2833, %v2853
        %v2862 = vmul.f32 %v2835, %v2854
        %v2863 = vmul.f32 %v2837, %v2855
        %v2864 = vmul.f32 %v2839, %v2856
        %v2865 = vmul.f32 %v2841, %v2857
        %v2866 = vadd.f32 %v2858, 1.4214138
        %v2867 = vadd.f32 %v2859, 1.4214138
        %v2868 = vadd.f32 %v2860, 1.4214138
        %v2869 = vadd.f32 %v2861, 1.4214138
        %v2870 = vadd.f32 %v2862, 1.4214138
        %v2871 = vadd.f32 %v2863, 1.4214138
        %v2872 = vadd.f32 %v2864, 1.4214138
        %v2873 = vadd.f32 %v2865, 1.4214138
        %v2874 = vmul.f32 %v2827, %v2866
        %v2875 = vmul.f32 %v2829, %v2867
        %v2876 = vmul.f32 %v2831, %v2868
        %v2877 = vmul.f32 %v2833, %v2869
        %v2878 = vmul.f32 %v2835, %v2870
        %v2879 = vmul.f32 %v2837, %v2871
        %v2880 = vmul.f32 %v2839, %v2872
        %v2881 = vmul.f32 %v2841, %v2873
        %v2882 = vadd.f32 %v2874, -0.28449672
        %v2883 = vadd.f32 %v2875, -0.28449672
        %v2884 = vadd.f32 %v2876, -0.28449672
        %v2885 = vadd.f32 %v2877, -0.28449672
        %v2886 = vadd.f32 %v2878, -0.28449672
        %v2887 = vadd.f32 %v2879, -0.28449672
        %v2888 = vadd.f32 %v2880, -0.28449672
        %v2889 = vadd.f32 %v2881, -0.28449672
        %v2890 = vmul.f32 %v2827, %v2882
        %v2891 = vmul.f32 %v2829, %v2883
        %v2892 = vmul.f32 %v2831, %v2884
        %v2893 = vmul.f32 %v2833, %v2885
        %v2894 = vmul.f32 %v2835, %v2886
        %v2895 = vmul.f32 %v2837, %v2887
        %v2896 = vmul.f32 %v2839, %v2888
        %v2897 = vmul.f32 %v2841, %v2889
        %v2898 = vadd.f32 %v2890, 0.2548296
        %v2899 = vadd.f32 %v2891, 0.2548296
        %v2900 = vadd.f32 %v2892, 0.2548296
        %v2901 = vadd.f32 %v2893, 0.2548296
        %v2902 = vadd.f32 %v2894, 0.2548296
        %v2903 = vadd.f32 %v2895, 0.2548296
        %v2904 = vadd.f32 %v2896, 0.2548296
        %v2905 = vadd.f32 %v2897, 0.2548296
        %v2906 = vmul.f32 %v2827, %v2898
        %v2907 = vmul.f32 %v2829, %v2899
        %v2908 = vmul.f32 %v2831, %v2900
        %v2909 = vmul.f32 %v2833, %v2901
        %v2910 = vmul.f32 %v2835, %v2902
        %v2911 = vmul.f32 %v2837, %v2903
        %v2912 = vmul.f32 %v2839, %v2904
        %v2913 = vmul.f32 %v2841, %v2905
        %v2914 = vsub.f32 0.0, %v2802
        %v2915 = vsub.f32 0.0, %v2803
        %v2916 = vsub.f32 0.0, %v2804
        %v2917 = vsub.f32 0.0, %v2805
        %v2918 = vsub.f32 0.0, %v2806
        %v2919 = vsub.f32 0.0, %v2807
        %v2920 = vsub.f32 0.0, %v2808
        %v2921 = vsub.f32 0.0, %v2809
        %v2922 = vmul.f32 %v2914, %v2802
        %v2923 = vmul.f32 %v2915, %v2803
        %v2924 = vmul.f32 %v2916, %v2804
        %v2925 = vmul.f32 %v2917, %v2805
        %v2926 = vmul.f32 %v2918, %v2806
        %v2927 = vmul.f32 %v2919, %v2807
        %v2928 = vmul.f32 %v2920, %v2808
        %v2929 = vmul.f32 %v2921, %v2809
        %v2930 = vmul.f32 %v2922, 1.442695
        %v2931 = vpow.pop %v2930
        %v2932 = vmul.f32 %v2923, 1.442695
        %v2933 = vpow.pop %v2932
        %v2934 = vmul.f32 %v2924, 1.442695
        %v2935 = vpow.pop %v2934
        %v2936 = vmul.f32 %v2925, 1.442695
        %v2937 = vpow.pop %v2936
        %v2938 = vmul.f32 %v2926, 1.442695
        %v2939 = vpow.pop %v2938
        %v2940 = vmul.f32 %v2927, 1.442695
        %v2941 = vpow.pop %v2940
        %v2942 = vmul.f32 %v2928, 1.442695
        %v2943 = vpow.pop %v2942
        %v2944 = vmul.f32 %v2929, 1.442695
        %v2945 = vpow.pop %v2944
        %v2946 = vmul.f32 %v2906, %v2931
        %v2947 = vmul.f32 %v2907, %v2933
        %v2948 = vmul.f32 %v2908, %v2935
        %v2949 = vmul.f32 %v2909, %v2937
        %v2950 = vmul.f32 %v2910, %v2939
        %v2951 = vmul.f32 %v2911, %v2941
        %v2952 = vmul.f32 %v2912, %v2943
        %v2953 = vmul.f32 %v2913, %v2945
        %v2954 = vsub.f32 1.0, %v2946
        %v2955 = vsub.f32 1.0, %v2947
        %v2956 = vsub.f32 1.0, %v2948
        %v2957 = vsub.f32 1.0, %v2949
        %v2958 = vsub.f32 1.0, %v2950
        %v2959 = vsub.f32 1.0, %v2951
        %v2960 = vsub.f32 1.0, %v2952
        %v2961 = vsub.f32 1.0, %v2953
        %v2962 = vmul.f32 %v2794, %v2954
        %v2963 = vmul.f32 %v2795, %v2955
        %v2964 = vmul.f32 %v2796, %v2956
        %v2965 = vmul.f32 %v2797, %v2957
        %v2966 = vmul.f32 %v2798, %v2958
        %v2967 = vmul.f32 %v2799, %v2959
        %v2968 = vmul.f32 %v2800, %v2960
        %v2969 = vmul.f32 %v2801, %v2961
        %v2970 = vadd.f32 %v2962, 1.0
        %v2971 = vadd.f32 %v2963, 1.0
        %v2972 = vadd.f32 %v2964, 1.0
        %v2973 = vadd.f32 %v2965, 1.0
        %v2974 = vadd.f32 %v2966, 1.0
        %v2975 = vadd.f32 %v2967, 1.0
        %v2976 = vadd.f32 %v2968, 1.0
        %v2977 = vadd.f32 %v2969, 1.0
        %v2978 = vmul.f32 %v2770, %v2970
        %v2979 = vmul.f32 %v2771, %v2971
        %v2980 = vmul.f32 %v2772, %v2972
        %v2981 = vmul.f32 %v2773, %v2973
        %v2982 = vmul.f32 %v2774, %v2974
        %v2983 = vmul.f32 %v2775, %v2975
        %v2984 = vmul.f32 %v2776, %v2976
        %v2985 = vmul.f32 %v2777, %v2977
        %v2986 = vld [vmem:[%s6] sm:$0xff]
        %v2988 = vsel %vm2640, %v2986, 0
        %v2991 = vsel %vm2640, %v2978, 0
        %v2994 = vsel %vm2640, %v2979, 0
        %v2997 = vsel %vm2640, %v2980, 0
        %v3000 = vsel %vm2640, %v2981, 0
        %v3003 = vsel %vm2640, %v2982, 0
        %v3006 = vsel %vm2640, %v2983, 0
        %v3009 = vsel %vm2640, %v2984, 0
        %v3012 = vsel %vm2640, %v2985, 0
        %3014 = vmatprep.subr.mxu0 0.0
        %3015 = vmatpush1.xpose.msra.mxu0 %v2991
        %3016 = vmatprep.subr.mxu0 0.0
        %3017 = vmatpush1.xpose.msra.mxu0 %v2994
        %3018 = vmatprep.subr.mxu0 0.0
        %3019 = vmatpush1.xpose.msra.mxu0 %v2997
        %3020 = vmatprep.subr.mxu0 0.0
        %3021 = vmatpush1.xpose.msra.mxu0 %v3000
        %3022 = vmatprep.subr.mxu0 0.0
        %3023 = vmatpush1.xpose.msra.mxu0 %v3003
        %3024 = vmatprep.subr.mxu0 0.0
        %3025 = vmatpush1.xpose.msra.mxu0 %v3006
        %3026 = vmatprep.subr.mxu0 0.0
        %3027 = vmatpush1.xpose.msra.mxu0 %v3009
        %3028 = vmatprep.subr.mxu0 0.0
        %3029 = vmatpush1.xpose.msra.mxu0 %v3012
        %3030 = vmatprep.subr.mxu0 0.0
        %3031 = vmatpush1.xpose.msra.mxu0 0.0
        %3032 = vmatprep.subr.mxu0 0.0
        %3033 = vmatpush1.xpose.msra.mxu0 0.0
        %3034 = vmatprep.subr.mxu0 0.0
        %3035 = vmatpush1.xpose.msra.mxu0 0.0
        %3036 = vmatprep.subr.mxu0 0.0
        %3037 = vmatpush1.xpose.msra.mxu0 0.0
        %3038 = vmatprep.subr.mxu0 0.0
        %3039 = vmatpush1.xpose.msra.mxu0 0.0
        %3040 = vmatprep.subr.mxu0 0.0
        %3041 = vmatpush1.xpose.msra.mxu0 0.0
        %3042 = vmatprep.subr.mxu0 0.0
        %3043 = vmatpush1.xpose.msra.mxu0 0.0
        %3044 = vmatprep.subr.mxu0 0.0
        %3045 = vmatpush1.xpose.msra.mxu0 0.0
        %3046 = vmatprep.subr.mxu0 0.0
        %3047 = vmatpush1.xpose.msra.mxu0 0.0
        %3048 = vmatprep.subr.mxu0 0.0
        %3049 = vmatpush1.xpose.msra.mxu0 0.0
        %3050 = vmatprep.subr.mxu0 0.0
        %3051 = vmatpush1.xpose.msra.mxu0 0.0
        %3052 = vmatprep.subr.mxu0 0.0
        %3053 = vmatpush1.xpose.msra.mxu0 0.0
        %3054 = vmatprep.subr.mxu0 0.0
        %3055 = vmatpush1.xpose.msra.mxu0 0.0
        %3056 = vmatprep.subr.mxu0 0.0
        %3057 = vmatpush1.xpose.msra.mxu0 0.0
        %3058 = vmatprep.subr.mxu0 0.0
        %3059 = vmatpush1.xpose.msra.mxu0 0.0
        %3060 = vmatprep.subr.mxu0 0.0
        %3061 = vmatpush1.xpose.msra.mxu0 0.0
        %3062 = vmatprep.subr.mxu0 0.0
        %3063 = vmatpush1.xpose.msra.mxu0 0.0
        %3064 = vmatprep.subr.mxu0 0.0
        %3065 = vmatpush1.xpose.msra.mxu0 0.0
        %3066 = vmatprep.subr.mxu0 0.0
        %3067 = vmatpush1.xpose.msra.mxu0 0.0
        %3068 = vmatprep.subr.mxu0 0.0
        %3069 = vmatpush1.xpose.msra.mxu0 0.0
        %3070 = vmatprep.subr.mxu0 0.0
        %3071 = vmatpush1.xpose.msra.mxu0 0.0
        %3072 = vmatprep.subr.mxu0 0.0
        %3073 = vmatpush1.xpose.msra.mxu0 0.0
        %3074 = vmatprep.subr.mxu0 0.0
        %3075 = vmatpush1.xpose.msra.mxu0 0.0
        %3076 = vmatprep.subr.mxu0 0.0
        %3077 = vmatpush1.xpose.msra.mxu0 0.0
        %3078 = vmatprep.mubr.f32.mxu0 0.0
        %3079 = vmatmul.mubr.f32.gmra.mrb[0].mxu0 %v2988
        %v3080 = vpop.f32.mrb[0].mxu0
        %v3081 = vadd.f32 0.0, %v3080
        %v3082 = vpop.f32.mrb[0].mxu0
        %3083 = vdwg.mxu0
        %vm3084 = vcmask 523264
        %v3085 = vsel %vm3084, %v3081, -inf
        %3086 = vmax.xlane.f32.xlu0 %v3085
        %v3087 = vpop.xlane.xlu0 %3086
        %v3088 = vsub.f32 %v3081, %v3087
        %v3089 = vmul.f32 %v3088, 1.442695
        %v3090 = vpow.pop %v3089
        %v3091 = vsel %vm3084, %v3090, 0.0
        %3092 = vadd.xlane.f32.xlu0 %v3091
        %v3093 = vpop.xlane.xlu0 %3092
        %v3094 = vrcp.pop %v3093
        %v3095 = vmul.f32 %v3090, %v3094
        %3096 = vst.msk [vmem:[%s699] sm:$0xff] %vm3084, %v3095
        %v3098 = vsel %vm3084, %v3095, 0
        %3100 = vmatprep.subr.mxu0 0.0
        %3101 = vmatpush1.msra.mxu0 %v715
        %3102 = vmatprep.subr.mxu0 0.0
        %3103 = vmatpush1.msra.mxu0 %v716
        %3104 = vmatprep.subr.mxu0 0.0
        %3105 = vmatpush1.msra.mxu0 %v717
        %3106 = vmatprep.subr.mxu0 0.0
        %3107 = vmatpush1.msra.mxu0 %v718
        %3108 = vmatprep.subr.mxu0 0.0
        %3109 = vmatpush1.msra.mxu0 %v719
        %3110 = vmatprep.subr.mxu0 0.0
        %3111 = vmatpush1.msra.mxu0 %v720
        %3112 = vmatprep.subr.mxu0 0.0
        %3113 = vmatpush1.msra.mxu0 %v721
        %3114 = vmatprep.subr.mxu0 0.0
        %3115 = vmatpush1.msra.mxu0 %v722
        %3116 = vmatprep.subr.mxu0 0.0
        %3117 = vmatpush1.msra.mxu0 0.0
        %3118 = vmatprep.subr.mxu0 0.0
        %3119 = vmatpush1.msra.mxu0 0.0
        %3120 = vmatprep.subr.mxu0 0.0
        %3121 = vmatpush1.msra.mxu0 0.0
        %3122 = vmatprep.subr.mxu0 0.0
        %3123 = vmatpush1.msra.mxu0 0.0
        %3124 = vmatprep.subr.mxu0 0.0
        %3125 = vmatpush1.msra.mxu0 0.0
        %3126 = vmatprep.subr.mxu0 0.0
        %3127 = vmatpush1.msra.mxu0 0.0
        %3128 = vmatprep.subr.mxu0 0.0
        %3129 = vmatpush1.msra.mxu0 0.0
        %3130 = vmatprep.subr.mxu0 0.0
        %3131 = vmatpush1.msra.mxu0 0.0
        %3132 = vmatprep.subr.mxu0 0.0
        %3133 = vmatpush1.msra.mxu0 0.0
        %3134 = vmatprep.subr.mxu0 0.0
        %3135 = vmatpush1.msra.mxu0 0.0
        %3136 = vmatprep.subr.mxu0 0.0
        %3137 = vmatpush1.msra.mxu0 0.0
        %3138 = vmatprep.subr.mxu0 0.0
        %3139 = vmatpush1.msra.mxu0 0.0
        %3140 = vmatprep.subr.mxu0 0.0
        %3141 = vmatpush1.msra.mxu0 0.0
        %3142 = vmatprep.subr.mxu0 0.0
        %3143 = vmatpush1.msra.mxu0 0.0
        %3144 = vmatprep.subr.mxu0 0.0
        %3145 = vmatpush1.msra.mxu0 0.0
        %3146 = vmatprep.subr.mxu0 0.0
        %3147 = vmatpush1.msra.mxu0 0.0
        %3148 = vmatprep.subr.mxu0 0.0
        %3149 = vmatpush1.msra.mxu0 0.0
        %3150 = vmatprep.subr.mxu0 0.0
        %3151 = vmatpush1.msra.mxu0 0.0
        %3152 = vmatprep.subr.mxu0 0.0
        %3153 = vmatpush1.msra.mxu0 0.0
        %3154 = vmatprep.subr.mxu0 0.0
        %3155 = vmatpush1.msra.mxu0 0.0
        %3156 = vmatprep.subr.mxu0 0.0
        %3157 = vmatpush1.msra.mxu0 0.0
        %3158 = vmatprep.subr.mxu0 0.0
        %3159 = vmatpush1.msra.mxu0 0.0
        %3160 = vmatprep.subr.mxu0 0.0
        %3161 = vmatpush1.msra.mxu0 0.0
        %3162 = vmatprep.subr.mxu0 0.0
        %3163 = vmatpush1.msra.mxu0 0.0
        %3164 = vmatprep.mubr.f32.mxu0 0.0
        %3165 = vmatmul.mubr.f32.gmra.mrb[0].mxu0 %v3098
        %v3166 = vpop.f32.mrb[0].mxu0
        %v3167 = vadd.f32 %v725, %v3166
        %v3168 = vpop.f32.mrb[0].mxu0
        %3169 = vdwg.mxu0
        %v3170 = vsel %vm2640, %v3167, 0.0
        %3171 = vadd.xlane.f32.xlu0 %v3170
        %v3172 = vpop.xlane.xlu0 %3171
        %v3173 = vrcp.pop 32.0
        %v3174 = vmul.f32 %v3172, %v3173
        %v3175 = vsub.f32 %v3167, %v3174
        %v3176 = vmul.f32 %v3175, %v3175
        %v3177 = vsel %vm2640, %v3176, 0.0
        %3178 = vadd.xlane.f32.xlu0 %v3177
        %v3179 = vpop.xlane.xlu0 %3178
        %v3180 = vmul.f32 %v3179, %v3173
        %v3181 = vadd.f32 %v3180, 1e-05
        %v3182 = vrsqrt.pop %v3181
        %v3183 = vmul.f32 %v3175, %v3182
        %v3185 = vlaneseq
        %v3186 = vshrl.u32 %v3185, 7
        %v3187 = vsub.s32 0, %v3186
        %v3188 = vrot.slane %v726, %v3187
        %v3190 = vmul.f32 %v3183, %v3188
        %v3192 = vlaneseq
        %v3193 = vshrl.u32 %v3192, 7
        %v3194 = vsub.s32 0, %v3193
        %v3195 = vrot.slane %v727, %v3194
        %v3197 = vadd.f32 %v3190, %v3195
        %v3198 = vld [vmem:[%s10] sm:$0xff]
        %v3199 = vld [vmem:[%s10 + $0x8] sm:$0xff]
        %v3200 = vld [vmem:[%s10 + $0x10] sm:$0xff]
        %v3201 = vld [vmem:[%s10 + $0x18] sm:$0xff]
        %v3203 = vlaneseq
        %v3204 = vshrl.u32 %v3203, 7
        %v3205 = vsub.s32 0, %v3204
        %v3206 = vrot.slane %v728, %v3205
        %v3209 = vsel %vm2640, %v715, 0
        %v3212 = vsel %vm2640, %v716, 0
        %v3215 = vsel %vm2640, %v717, 0
        %v3218 = vsel %vm2640, %v718, 0
        %v3221 = vsel %vm2640, %v719, 0
        %v3224 = vsel %vm2640, %v720, 0
        %v3227 = vsel %vm2640, %v721, 0
        %v3230 = vsel %vm2640, %v722, 0
        %3232 = vmatprep.subr.mxu0 0.0
        %3233 = vmatpush1.msra.mxu0 %v3198
        %3234 = vmatprep.subr.mxu0 0.0
        %3235 = vmatpush1.msra.mxu0 %v3199
        %3236 = vmatprep.subr.mxu0 0.0
        %3237 = vmatpush1.msra.mxu0 %v3200
        %3238 = vmatprep.subr.mxu0 0.0
        %3239 = vmatpush1.msra.mxu0 %v3201
        %3240 = vmatprep.subr.mxu0 0.0
        %3241 = vmatpush1.msra.mxu0 0.0
        %3242 = vmatprep.subr.mxu0 0.0
        %3243 = vmatpush1.msra.mxu0 0.0
        %3244 = vmatprep.subr.mxu0 0.0
        %3245 = vmatpush1.msra.mxu0 0.0
        %3246 = vmatprep.subr.mxu0 0.0
        %3247 = vmatpush1.msra.mxu0 0.0
        %3248 = vmatprep.subr.mxu0 0.0
        %3249 = vmatpush1.msra.mxu0 0.0
        %3250 = vmatprep.subr.mxu0 0.0
        %3251 = vmatpush1.msra.mxu0 0.0
        %3252 = vmatprep.subr.mxu0 0.0
        %3253 = vmatpush1.msra.mxu0 0.0
        %3254 = vmatprep.subr.mxu0 0.0
        %3255 = vmatpush1.msra.mxu0 0.0
        %3256 = vmatprep.subr.mxu0 0.0
        %3257 = vmatpush1.msra.mxu0 0.0
        %3258 = vmatprep.subr.mxu0 0.0
        %3259 = vmatpush1.msra.mxu0 0.0
        %3260 = vmatprep.subr.mxu0 0.0
        %3261 = vmatpush1.msra.mxu0 0.0
        %3262 = vmatprep.subr.mxu0 0.0
        %3263 = vmatpush1.msra.mxu0 0.0
        %3264 = vmatprep.subr.mxu0 0.0
        %3265 = vmatpush1.msra.mxu0 0.0
        %3266 = vmatprep.subr.mxu0 0.0
        %3267 = vmatpush1.msra.mxu0 0.0
        %3268 = vmatprep.subr.mxu0 0.0
        %3269 = vmatpush1.msra.mxu0 0.0
        %3270 = vmatprep.subr.mxu0 0.0
        %3271 = vmatpush1.msra.mxu0 0.0
        %3272 = vmatprep.subr.mxu0 0.0
        %3273 = vmatpush1.msra.mxu0 0.0
        %3274 = vmatprep.subr.mxu0 0.0
        %3275 = vmatpush1.msra.mxu0 0.0
        %3276 = vmatprep.subr.mxu0 0.0
        %3277 = vmatpush1.msra.mxu0 0.0
        %3278 = vmatprep.subr.mxu0 0.0
        %3279 = vmatpush1.msra.mxu0 0.0
        %3280 = vmatprep.subr.mxu0 0.0
        %3281 = vmatpush1.msra.mxu0 0.0
        %3282 = vmatprep.subr.mxu0 0.0
        %3283 = vmatpush1.msra.mxu0 0.0
        %3284 = vmatprep.subr.mxu0 0.0
        %3285 = vmatpush1.msra.mxu0 0.0
        %3286 = vmatprep.subr.mxu0 0.0
        %3287 = vmatpush1.msra.mxu0 0.0
        %3288 = vmatprep.subr.mxu0 0.0
        %3289 = vmatpush1.msra.mxu0 0.0
        %3290 = vmatprep.subr.mxu0 0.0
        %3291 = vmatpush1.msra.mxu0 0.0
        %3292 = vmatprep.subr.mxu0 0.0
        %3293 = vmatpush1.msra.mxu0 0.0
        %3294 = vmatprep.subr.mxu0 0.0
        %3295 = vmatpush1.msra.mxu0 0.0
        %3296 = vmatprep.mubr.f32.mxu0 0.0
        %3297 = vmatmul.mubr.f32.gmra.mrb[0].mxu0 %v3209
        %v3298 = vpop.f32.mrb[0].mxu0
        %v3299 = vadd.f32 %v3206, %v3298
        %v3300 = vpop.f32.mrb[0].mxu0
        %3301 = vmatprep.mubr.f32.mxu0 0.0
        %3302 = vmatmul.mubr.f32.gmra.mrb[0].mxu0 %v3212
        %v3303 = vpop.f32.mrb[0].mxu0
        %v3304 = vadd.f32 %v3206, %v3303
        %v3305 = vpop.f32.mrb[0].mxu0
        %3306 = vmatprep.mubr.f32.mxu0 0.0
        %3307 = vmatmul.mubr.f32.gmra.mrb[0].mxu0 %v3215
        %v3308 = vpop.f32.mrb[0].mxu0
        %v3309 = vadd.f32 %v3206, %v3308
        %v3310 = vpop.f32.mrb[0].mxu0
        %3311 = vmatprep.mubr.f32.mxu0 0.0
        %3312 = vmatmul.mubr.f32.gmra.mrb[0].mxu0 %v3218
        %v3313 = vpop.f32.mrb[0].mxu0
        %v3314 = vadd.f32 %v3206, %v3313
        %v3315 = vpop.f32.mrb[0].mxu0
        %3316 = vmatprep.mubr.f32.mxu0 0.0
        %3317 = vmatmul.mubr.f32.gmra.mrb[0].mxu0 %v3221
        %v3318 = vpop.f32.mrb[0].mxu0
        %v3319 = vadd.f32 %v3206, %v3318
        %v3320 = vpop.f32.mrb[0].mxu0
        %3321 = vmatprep.mubr.f32.mxu0 0.0
        %3322 = vmatmul.mubr.f32.gmra.mrb[0].mxu0 %v3224
        %v3323 = vpop.f32.mrb[0].mxu0
        %v3324 = vadd.f32 %v3206, %v3323
        %v3325 = vpop.f32.mrb[0].mxu0
        %3326 = vmatprep.mubr.f32.mxu0 0.0
        %3327 = vmatmul.mubr.f32.gmra.mrb[0].mxu0 %v3227
        %v3328 = vpop.f32.mrb[0].mxu0
        %v3329 = vadd.f32 %v3206, %v3328
        %v3330 = vpop.f32.mrb[0].mxu0
        %3331 = vmatprep.mubr.f32.mxu0 0.0
        %3332 = vmatmul.mubr.f32.gmra.mrb[0].mxu0 %v3230
        %v3333 = vpop.f32.mrb[0].mxu0
        %v3334 = vadd.f32 %v3206, %v3333
        %v3335 = vpop.f32.mrb[0].mxu0
        %3336 = vdwg.mxu0
        %v3337 = vmul.f32 %v3299, 0.35355338
        %v3338 = vmul.f32 %v3304, 0.35355338
        %v3339 = vmul.f32 %v3309, 0.35355338
        %v3340 = vmul.f32 %v3314, 0.35355338
        %v3341 = vmul.f32 %v3319, 0.35355338
        %v3342 = vmul.f32 %v3324, 0.35355338
        %v3343 = vmul.f32 %v3329, 0.35355338
        %v3344 = vmul.f32 %v3334, 0.35355338
        %v3345 = vld [vmem:[%s12] sm:$0xff]
        %v3346 = vld [vmem:[%s12 + $0x8] sm:$0xff]
        %v3347 = vld [vmem:[%s12 + $0x10] sm:$0xff]
        %v3348 = vld [vmem:[%s12 + $0x18] sm:$0xff]
        %v3350 = vlaneseq
        %v3351 = vshrl.u32 %v3350, 7
        %v3352 = vsub.s32 0, %v3351
        %v3353 = vrot.slane %v729, %v3352
        %v3356 = vsel %vm2640, %v3197, 0
        %3358 = vmatprep.subr.mxu0 0.0
        %3359 = vmatpush1.msra.mxu0 %v3345
        %3360 = vmatprep.subr.mxu0 0.0
        %3361 = vmatpush1.msra.mxu0 %v3346
        %3362 = vmatprep.subr.mxu0 0.0
        %3363 = vmatpush1.msra.mxu0 %v3347
        %3364 = vmatprep.subr.mxu0 0.0
        %3365 = vmatpush1.msra.mxu0 %v3348
        %3366 = vmatprep.subr.mxu0 0.0
        %3367 = vmatpush1.msra.mxu0 0.0
        %3368 = vmatprep.subr.mxu0 0.0
        %3369 = vmatpush1.msra.mxu0 0.0
        %3370 = vmatprep.subr.mxu0 0.0
        %3371 = vmatpush1.msra.mxu0 0.0
        %3372 = vmatprep.subr.mxu0 0.0
        %3373 = vmatpush1.msra.mxu0 0.0
        %3374 = vmatprep.subr.mxu0 0.0
        %3375 = vmatpush1.msra.mxu0 0.0
        %3376 = vmatprep.subr.mxu0 0.0
        %3377 = vmatpush1.msra.mxu0 0.0
        %3378 = vmatprep.subr.mxu0 0.0
        %3379 = vmatpush1.msra.mxu0 0.0
        %3380 = vmatprep.subr.mxu0 0.0
        %3381 = vmatpush1.msra.mxu0 0.0
        %3382 = vmatprep.subr.mxu0 0.0
        %3383 = vmatpush1.msra.mxu0 0.0
        %3384 = vmatprep.subr.mxu0 0.0
        %3385 = vmatpush1.msra.mxu0 0.0
        %3386 = vmatprep.subr.mxu0 0.0
        %3387 = vmatpush1.msra.mxu0 0.0
        %3388 = vmatprep.subr.mxu0 0.0
        %3389 = vmatpush1.msra.mxu0 0.0
        %3390 = vmatprep.subr.mxu0 0.0
        %3391 = vmatpush1.msra.mxu0 0.0
        %3392 = vmatprep.subr.mxu0 0.0
        %3393 = vmatpush1.msra.mxu0 0.0
        %3394 = vmatprep.subr.mxu0 0.0
        %3395 = vmatpush1.msra.mxu0 0.0
        %3396 = vmatprep.subr.mxu0 0.0
        %3397 = vmatpush1.msra.mxu0 0.0
        %3398 = vmatprep.subr.mxu0 0.0
        %3399 = vmatpush1.msra.mxu0 0.0
        %3400 = vmatprep.subr.mxu0 0.0
        %3401 = vmatpush1.msra.mxu0 0.0
        %3402 = vmatprep.subr.mxu0 0.0
        %3403 = vmatpush1.msra.mxu0 0.0
        %3404 = vmatprep.subr.mxu0 0.0
        %3405 = vmatpush1.msra.mxu0 0.0
        %3406 = vmatprep.subr.mxu0 0.0
        %3407 = vmatpush1.msra.mxu0 0.0
        %3408 = vmatprep.subr.mxu0 0.0
        %3409 = vmatpush1.msra.mxu0 0.0
        %3410 = vmatprep.subr.mxu0 0.0
        %3411 = vmatpush1.msra.mxu0 0.0
        %3412 = vmatprep.subr.mxu0 0.0
        %3413 = vmatpush1.msra.mxu0 0.0
        %3414 = vmatprep.subr.mxu0 0.0
        %3415 = vmatpush1.msra.mxu0 0.0
        %3416 = vmatprep.subr.mxu0 0.0
        %3417 = vmatpush1.msra.mxu0 0.0
        %3418 = vmatprep.subr.mxu0 0.0
        %3419 = vmatpush1.msra.mxu0 0.0
        %3420 = vmatprep.subr.mxu0 0.0
        %3421 = vmatpush1.msra.mxu0 0.0
        %3422 = vmatprep.mubr.f32.mxu0 0.0
        %3423 = vmatmul.mubr.f32.gmra.mrb[0].mxu0 %v3356
        %v3424 = vpop.f32.mrb[0].mxu0
        %v3425 = vadd.f32 %v3353, %v3424
        %v3426 = vpop.f32.mrb[0].mxu0
        %3427 = vdwg.mxu0
        %v3428 = vld [vmem:[%s14] sm:$0xff]
        %v3429 = vld [vmem:[%s14 + $0x8] sm:$0xff]
        %v3430 = vld [vmem:[%s14 + $0x10] sm:$0xff]
        %v3431 = vld [vmem:[%s14 + $0x18] sm:$0xff]
        %v3433 = vlaneseq
        %v3434 = vshrl.u32 %v3433, 7
        %v3435 = vsub.s32 0, %v3434
        %v3436 = vrot.slane %v730, %v3435
        %3438 = vmatprep.subr.mxu0 0.0
        %3439 = vmatpush1.msra.mxu0 %v3428
        %3440 = vmatprep.subr.mxu0 0.0
        %3441 = vmatpush1.msra.mxu0 %v3429
        %3442 = vmatprep.subr.mxu0 0.0
        %3443 = vmatpush1.msra.mxu0 %v3430
        %3444 = vmatprep.subr.mxu0 0.0
        %3445 = vmatpush1.msra.mxu0 %v3431
        %3446 = vmatprep.subr.mxu0 0.0
        %3447 = vmatpush1.msra.mxu0 0.0
        %3448 = vmatprep.subr.mxu0 0.0
        %3449 = vmatpush1.msra.mxu0 0.0
        %3450 = vmatprep.subr.mxu0 0.0
        %3451 = vmatpush1.msra.mxu0 0.0
        %3452 = vmatprep.subr.mxu0 0.0
        %3453 = vmatpush1.msra.mxu0 0.0
        %3454 = vmatprep.subr.mxu0 0.0
        %3455 = vmatpush1.msra.mxu0 0.0
        %3456 = vmatprep.subr.mxu0 0.0
        %3457 = vmatpush1.msra.mxu0 0.0
        %3458 = vmatprep.subr.mxu0 0.0
        %3459 = vmatpush1.msra.mxu0 0.0
        %3460 = vmatprep.subr.mxu0 0.0
        %3461 = vmatpush1.msra.mxu0 0.0
        %3462 = vmatprep.subr.mxu0 0.0
        %3463 = vmatpush1.msra.mxu0 0.0
        %3464 = vmatprep.subr.mxu0 0.0
        %3465 = vmatpush1.msra.mxu0 0.0
        %3466 = vmatprep.subr.mxu0 0.0
        %3467 = vmatpush1.msra.mxu0 0.0
        %3468 = vmatprep.subr.mxu0 0.0
        %3469 = vmatpush1.msra.mxu0 0.0
        %3470 = vmatprep.subr.mxu0 0.0
        %3471 = vmatpush1.msra.mxu0 0.0
        %3472 = vmatprep.subr.mxu0 0.0
        %3473 = vmatpush1.msra.mxu0 0.0
        %3474 = vmatprep.subr.mxu0 0.0
        %3475 = vmatpush1.msra.mxu0 0.0
        %3476 = vmatprep.subr.mxu0 0.0
        %3477 = vmatpush1.msra.mxu0 0.0
        %3478 = vmatprep.subr.mxu0 0.0
        %3479 = vmatpush1.msra.mxu0 0.0
        %3480 = vmatprep.subr.mxu0 0.0
        %3481 = vmatpush1.msra.mxu0 0.0
        %3482 = vmatprep.subr.mxu0 0.0
        %3483 = vmatpush1.msra.mxu0 0.0
        %3484 = vmatprep.subr.mxu0 0.0
        %3485 = vmatpush1.msra.mxu0 0.0
        %3486 = vmatprep.subr.mxu0 0.0
        %3487 = vmatpush1.msra.mxu0 0.0
        %3488 = vmatprep.subr.mxu0 0.0
        %3489 = vmatpush1.msra.mxu0 0.0
        %3490 = vmatprep.subr.mxu0 0.0
        %3491 = vmatpush1.msra.mxu0 0.0
        %3492 = vmatprep.subr.mxu0 0.0
        %3493 = vmatpush1.msra.mxu0 0.0
        %3494 = vmatprep.subr.mxu0 0.0
        %3495 = vmatpush1.msra.mxu0 0.0
        %3496 = vmatprep.subr.mxu0 0.0
        %3497 = vmatpush1.msra.mxu0 0.0
        %3498 = vmatprep.subr.mxu0 0.0
        %3499 = vmatpush1.msra.mxu0 0.0
        %3500 = vmatprep.subr.mxu0 0.0
        %3501 = vmatpush1.msra.mxu0 0.0
        %3502 = vmatprep.mubr.f32.mxu0 0.0
        %3503 = vmatmul.mubr.f32.gmra.mrb[0].mxu0 %v3356
        %v3504 = vpop.f32.mrb[0].mxu0
        %v3505 = vadd.f32 %v3436, %v3504
        %v3506 = vpop.f32.mrb[0].mxu0
        %3507 = vdwg.mxu0
        %vm3508 = vcmask 64512
        %v3510 = vsel %vm3508, %v732, 0
        %v3513 = vsel %vm3508, %v733, 0
        %v3516 = vsel %vm3508, %v734, 0
        %v3519 = vsel %vm3508, %v735, 0
        %3521 = vmatprep.subr.mxu0 0.0
        %3522 = vmatpush1.msra.mxu0 %v3425
        %3523 = vmatprep.subr.mxu0 0.0
        %3524 = vmatpush1.msra.mxu0 0.0
        %3525 = vmatprep.subr.mxu0 0.0
        %3526 = vmatpush1.msra.mxu0 0.0
        %3527 = vmatprep.subr.mxu0 0.0
        %3528 = vmatpush1.msra.mxu0 0.0
        %3529 = vmatprep.subr.mxu0 0.0
        %3530 = vmatpush1.msra.mxu0 0.0
        %3531 = vmatprep.subr.mxu0 0.0
        %3532 = vmatpush1.msra.mxu0 0.0
        %3533 = vmatprep.subr.mxu0 0.0
        %3534 = vmatpush1.msra.mxu0 0.0
        %3535 = vmatprep.subr.mxu0 0.0
        %3536 = vmatpush1.msra.mxu0 0.0
        %3537 = vmatprep.subr.mxu0 0.0
        %3538 = vmatpush1.msra.mxu0 0.0
        %3539 = vmatprep.subr.mxu0 0.0
        %3540 = vmatpush1.msra.mxu0 0.0
        %3541 = vmatprep.subr.mxu0 0.0
        %3542 = vmatpush1.msra.mxu0 0.0
        %3543 = vmatprep.subr.mxu0 0.0
        %3544 = vmatpush1.msra.mxu0 0.0
        %3545 = vmatprep.subr.mxu0 0.0
        %3546 = vmatpush1.msra.mxu0 0.0
        %3547 = vmatprep.subr.mxu0 0.0
        %3548 = vmatpush1.msra.mxu0 0.0
        %3549 = vmatprep.subr.mxu0 0.0
        %3550 = vmatpush1.msra.mxu0 0.0
        %3551 = vmatprep.subr.mxu0 0.0
        %3552 = vmatpush1.msra.mxu0 0.0
        %3553 = vmatprep.subr.mxu0 0.0
        %3554 = vmatpush1.msra.mxu0 0.0
        %3555 = vmatprep.subr.mxu0 0.0
        %3556 = vmatpush1.msra.mxu0 0.0
        %3557 = vmatprep.subr.mxu0 0.0
        %3558 = vmatpush1.msra.mxu0 0.0
        %3559 = vmatprep.subr.mxu0 0.0
        %3560 = vmatpush1.msra.mxu0 0.0
        %3561 = vmatprep.subr.mxu0 0.0
        %3562 = vmatpush1.msra.mxu0 0.0
        %3563 = vmatprep.subr.mxu0 0.0
        %3564 = vmatpush1.msra.mxu0 0.0
        %3565 = vmatprep.subr.mxu0 0.0
        %3566 = vmatpush1.msra.mxu0 0.0
        %3567 = vmatprep.subr.mxu0 0.0
        %3568 = vmatpush1.msra.mxu0 0.0
        %3569 = vmatprep.subr.mxu0 0.0
        %3570 = vmatpush1.msra.mxu0 0.0
        %3571 = vmatprep.subr.mxu0 0.0
        %3572 = vmatpush1.msra.mxu0 0.0
        %3573 = vmatprep.subr.mxu0 0.0
        %3574 = vmatpush1.msra.mxu0 0.0
        %3575 = vmatprep.subr.mxu0 0.0
        %3576 = vmatpush1.msra.mxu0 0.0
        %3577 = vmatprep.subr.mxu0 0.0
        %3578 = vmatpush1.msra.mxu0 0.0
        %3579 = vmatprep.subr.mxu0 0.0
        %3580 = vmatpush1.msra.mxu0 0.0
        %3581 = vmatprep.subr.mxu0 0.0
        %3582 = vmatpush1.msra.mxu0 0.0
        %3583 = vmatprep.subr.mxu0 0.0
        %3584 = vmatpush1.msra.mxu0 0.0
        %3585 = vmatprep.mubr.f32.mxu0 0.0
        %3586 = vmatmul.mubr.f32.gmra.mrb[0].mxu0 %v3510
        %v3587 = vpop.f32.mrb[0].mxu0
        %v3588 = vadd.f32 0.0, %v3587
        %v3589 = vpop.f32.mrb[0].mxu0
        %3590 = vmatprep.mubr.f32.mxu0 0.0
        %3591 = vmatmul.mubr.f32.gmra.mrb[0].mxu0 %v3513
        %v3592 = vpop.f32.mrb[0].mxu0
        %v3593 = vadd.f32 0.0, %v3592
        %v3594 = vpop.f32.mrb[0].mxu0
        %3595 = vmatprep.mubr.f32.mxu0 0.0
        %3596 = vmatmul.mubr.f32.gmra.mrb[0].mxu0 %v3516
        %v3597 = vpop.f32.mrb[0].mxu0
        %v3598 = vadd.f32 0.0, %v3597
        %v3599 = vpop.f32.mrb[0].mxu0
        %3600 = vmatprep.mubr.f32.mxu0 0.0
        %3601 = vmatmul.mubr.f32.gmra.mrb[0].mxu0 %v3519
        %v3602 = vpop.f32.mrb[0].mxu0
        %v3603 = vadd.f32 0.0, %v3602
        %v3604 = vpop.f32.mrb[0].mxu0
        %3605 = vdwg.mxu0
        %v3606 = vmul.f32 %v3588, %v736
        %v3607 = vmul.f32 %v3593, %v737
        %v3608 = vmul.f32 %v3598, %v738
        %v3609 = vmul.f32 %v3603, %v739
        %3610 = vmatprep.subr.mxu0 0.0
        %3611 = vmatpush1.msra.mxu0 %v3505
        %3612 = vmatprep.subr.mxu0 0.0
        %3613 = vmatpush1.msra.mxu0 0.0
        %3614 = vmatprep.subr.mxu0 0.0
        %3615 = vmatpush1.msra.mxu0 0.0
        %3616 = vmatprep.subr.mxu0 0.0
        %3617 = vmatpush1.msra.mxu0 0.0
        %3618 = vmatprep.subr.mxu0 0.0
        %3619 = vmatpush1.msra.mxu0 0.0
        %3620 = vmatprep.subr.mxu0 0.0
        %3621 = vmatpush1.msra.mxu0 0.0
        %3622 = vmatprep.subr.mxu0 0.0
        %3623 = vmatpush1.msra.mxu0 0.0
        %3624 = vmatprep.subr.mxu0 0.0
        %3625 = vmatpush1.msra.mxu0 0.0
        %3626 = vmatprep.subr.mxu0 0.0
        %3627 = vmatpush1.msra.mxu0 0.0
        %3628 = vmatprep.subr.mxu0 0.0
        %3629 = vmatpush1.msra.mxu0 0.0
        %3630 = vmatprep.subr.mxu0 0.0
        %3631 = vmatpush1.msra.mxu0 0.0
        %3632 = vmatprep.subr.mxu0 0.0
        %3633 = vmatpush1.msra.mxu0 0.0
        %3634 = vmatprep.subr.mxu0 0.0
        %3635 = vmatpush1.msra.mxu0 0.0
        %3636 = vmatprep.subr.mxu0 0.0
        %3637 = vmatpush1.msra.mxu0 0.0
        %3638 = vmatprep.subr.mxu0 0.0
        %3639 = vmatpush1.msra.mxu0 0.0
        %3640 = vmatprep.subr.mxu0 0.0
        %3641 = vmatpush1.msra.mxu0 0.0
        %3642 = vmatprep.subr.mxu0 0.0
        %3643 = vmatpush1.msra.mxu0 0.0
        %3644 = vmatprep.subr.mxu0 0.0
        %3645 = vmatpush1.msra.mxu0 0.0
        %3646 = vmatprep.subr.mxu0 0.0
        %3647 = vmatpush1.msra.mxu0 0.0
        %3648 = vmatprep.subr.mxu0 0.0
        %3649 = vmatpush1.msra.mxu0 0.0
        %3650 = vmatprep.subr.mxu0 0.0
        %3651 = vmatpush1.msra.mxu0 0.0
        %3652 = vmatprep.subr.mxu0 0.0
        %3653 = vmatpush1.msra.mxu0 0.0
        %3654 = vmatprep.subr.mxu0 0.0
        %3655 = vmatpush1.msra.mxu0 0.0
        %3656 = vmatprep.subr.mxu0 0.0
        %3657 = vmatpush1.msra.mxu0 0.0
        %3658 = vmatprep.subr.mxu0 0.0
        %3659 = vmatpush1.msra.mxu0 0.0
        %3660 = vmatprep.subr.mxu0 0.0
        %3661 = vmatpush1.msra.mxu0 0.0
        %3662 = vmatprep.subr.mxu0 0.0
        %3663 = vmatpush1.msra.mxu0 0.0
        %3664 = vmatprep.subr.mxu0 0.0
        %3665 = vmatpush1.msra.mxu0 0.0
        %3666 = vmatprep.subr.mxu0 0.0
        %3667 = vmatpush1.msra.mxu0 0.0
        %3668 = vmatprep.subr.mxu0 0.0
        %3669 = vmatpush1.msra.mxu0 0.0
        %3670 = vmatprep.subr.mxu0 0.0
        %3671 = vmatpush1.msra.mxu0 0.0
        %3672 = vmatprep.subr.mxu0 0.0
        %3673 = vmatpush1.msra.mxu0 0.0
        %3674 = vmatprep.mubr.f32.mxu0 0.0
        %3675 = vmatmul.mubr.f32.gmra.mrb[0].mxu0 %v3510
        %v3676 = vpop.f32.mrb[0].mxu0
        %v3677 = vadd.f32 0.0, %v3676
        %v3678 = vpop.f32.mrb[0].mxu0
        %3679 = vmatprep.mubr.f32.mxu0 0.0
        %3680 = vmatmul.mubr.f32.gmra.mrb[0].mxu0 %v3513
        %v3681 = vpop.f32.mrb[0].mxu0
        %v3682 = vadd.f32 0.0, %v3681
        %v3683 = vpop.f32.mrb[0].mxu0
        %3684 = vmatprep.mubr.f32.mxu0 0.0
        %3685 = vmatmul.mubr.f32.gmra.mrb[0].mxu0 %v3516
        %v3686 = vpop.f32.mrb[0].mxu0
        %v3687 = vadd.f32 0.0, %v3686
        %v3688 = vpop.f32.mrb[0].mxu0
        %3689 = vmatprep.mubr.f32.mxu0 0.0
        %3690 = vmatmul.mubr.f32.gmra.mrb[0].mxu0 %v3519
        %v3691 = vpop.f32.mrb[0].mxu0
        %v3692 = vadd.f32 0.0, %v3691
        %v3693 = vpop.f32.mrb[0].mxu0
        %3694 = vdwg.mxu0
        %v3695 = vmul.f32 %v3677, %v736
        %v3696 = vmul.f32 %v3682, %v737
        %v3697 = vmul.f32 %v3687, %v738
        %v3698 = vmul.f32 %v3692, %v739
        %v3700 = vsel %vm2640, %v3337, 0
        %v3703 = vsel %vm2640, %v3338, 0
        %v3706 = vsel %vm2640, %v3339, 0
        %v3709 = vsel %vm2640, %v3340, 0
        %v3712 = vsel %vm2640, %v3341, 0
        %v3715 = vsel %vm2640, %v3342, 0
        %v3718 = vsel %vm2640, %v3343, 0
        %v3721 = vsel %vm2640, %v3344, 0
        %v3724 = vsel %vm2640, %v3606, 0
        %v3727 = vsel %vm2640, %v3607, 0
        %v3730 = vsel %vm2640, %v3608, 0
        %v3733 = vsel %vm2640, %v3609, 0
        %3735 = vmatprep.subr.mxu0 0.0
        %3736 = vmatpush1.xpose.msra.mxu0 %v3724
        %3737 = vmatprep.subr.mxu0 0.0
        %3738 = vmatpush1.xpose.msra.mxu0 %v3727
        %3739 = vmatprep.subr.mxu0 0.0
        %3740 = vmatpush1.xpose.msra.mxu0 %v3730
        %3741 = vmatprep.subr.mxu0 0.0
        %3742 = vmatpush1.xpose.msra.mxu0 %v3733
        %3743 = vmatprep.subr.mxu0 0.0
        %3744 = vmatpush1.xpose.msra.mxu0 0.0
        %3745 = vmatprep.subr.mxu0 0.0
        %3746 = vmatpush1.xpose.msra.mxu0 0.0
        %3747 = vmatprep.subr.mxu0 0.0
        %3748 = vmatpush1.xpose.msra.mxu0 0.0
        %3749 = vmatprep.subr.mxu0 0.0
        %3750 = vmatpush1.xpose.msra.mxu0 0.0
        %3751 = vmatprep.subr.mxu0 0.0
        %3752 = vmatpush1.xpose.msra.mxu0 0.0
        %3753 = vmatprep.subr.mxu0 0.0
        %3754 = vmatpush1.xpose.msra.mxu0 0.0
        %3755 = vmatprep.subr.mxu0 0.0
        %3756 = vmatpush1.xpose.msra.mxu0 0.0
        %3757 = vmatprep.subr.mxu0 0.0
        %3758 = vmatpush1.xpose.msra.mxu0 0.0
        %3759 = vmatprep.subr.mxu0 0.0
        %3760 = vmatpush1.xpose.msra.mxu0 0.0
        %3761 = vmatprep.subr.mxu0 0.0
        %3762 = vmatpush1.xpose.msra.mxu0 0.0
        %3763 = vmatprep.subr.mxu0 0.0
        %3764 = vmatpush1.xpose.msra.mxu0 0.0
        %3765 = vmatprep.subr.mxu0 0.0
        %3766 = vmatpush1.xpose.msra.mxu0 0.0
        %3767 = vmatprep.subr.mxu0 0.0
        %3768 = vmatpush1.xpose.msra.mxu0 0.0
        %3769 = vmatprep.subr.mxu0 0.0
        %3770 = vmatpush1.xpose.msra.mxu0 0.0
        %3771 = vmatprep.subr.mxu0 0.0
        %3772 = vmatpush1.xpose.msra.mxu0 0.0
        %3773 = vmatprep.subr.mxu0 0.0
        %3774 = vmatpush1.xpose.msra.mxu0 0.0
        %3775 = vmatprep.subr.mxu0 0.0
        %3776 = vmatpush1.xpose.msra.mxu0 0.0
        %3777 = vmatprep.subr.mxu0 0.0
        %3778 = vmatpush1.xpose.msra.mxu0 0.0
        %3779 = vmatprep.subr.mxu0 0.0
        %3780 = vmatpush1.xpose.msra.mxu0 0.0
        %3781 = vmatprep.subr.mxu0 0.0
        %3782 = vmatpush1.xpose.msra.mxu0 0.0
        %3783 = vmatprep.subr.mxu0 0.0
        %3784 = vmatpush1.xpose.msra.mxu0 0.0
        %3785 = vmatprep.subr.mxu0 0.0
        %3786 = vmatpush1.xpose.msra.mxu0 0.0
        %3787 = vmatprep.subr.mxu0 0.0
        %3788 = vmatpush1.xpose.msra.mxu0 0.0
        %3789 = vmatprep.subr.mxu0 0.0
        %3790 = vmatpush1.xpose.msra.mxu0 0.0
        %3791 = vmatprep.subr.mxu0 0.0
        %3792 = vmatpush1.xpose.msra.mxu0 0.0
        %3793 = vmatprep.subr.mxu0 0.0
        %3794 = vmatpush1.xpose.msra.mxu0 0.0
        %3795 = vmatprep.subr.mxu0 0.0
        %3796 = vmatpush1.xpose.msra.mxu0 0.0
        %3797 = vmatprep.subr.mxu0 0.0
        %3798 = vmatpush1.xpose.msra.mxu0 0.0
        %3799 = vmatprep.mubr.f32.mxu0 0.0
        %3800 = vmatmul.mubr.f32.gmra.mrb[0].mxu0 %v3700
        %v3801 = vpop.f32.mrb[0].mxu0
        %v3802 = vadd.f32 0.0, %v3801
        %v3803 = vpop.f32.mrb[0].mxu0
        %3804 = vmatprep.mubr.f32.mxu0 0.0
        %3805 = vmatmul.mubr.f32.gmra.mrb[0].mxu0 %v3703
        %v3806 = vpop.f32.mrb[0].mxu0
        %v3807 = vadd.f32 0.0, %v3806
        %v3808 = vpop.f32.mrb[0].mxu0
        %3809 = vmatprep.mubr.f32.mxu0 0.0
        %3810 = vmatmul.mubr.f32.gmra.mrb[0].mxu0 %v3706
        %v3811 = vpop.f32.mrb[0].mxu0
        %v3812 = vadd.f32 0.0, %v3811
        %v3813 = vpop.f32.mrb[0].mxu0
        %3814 = vmatprep.mubr.f32.mxu0 0.0
        %3815 = vmatmul.mubr.f32.gmra.mrb[0].mxu0 %v3709
        %v3816 = vpop.f32.mrb[0].mxu0
        %v3817 = vadd.f32 0.0, %v3816
        %v3818 = vpop.f32.mrb[0].mxu0
        %3819 = vmatprep.mubr.f32.mxu0 0.0
        %3820 = vmatmul.mubr.f32.gmra.mrb[0].mxu0 %v3712
        %v3821 = vpop.f32.mrb[0].mxu0
        %v3822 = vadd.f32 0.0, %v3821
        %v3823 = vpop.f32.mrb[0].mxu0
        %3824 = vmatprep.mubr.f32.mxu0 0.0
        %3825 = vmatmul.mubr.f32.gmra.mrb[0].mxu0 %v3715
        %v3826 = vpop.f32.mrb[0].mxu0
        %v3827 = vadd.f32 0.0, %v3826
        %v3828 = vpop.f32.mrb[0].mxu0
        %3829 = vmatprep.mubr.f32.mxu0 0.0
        %3830 = vmatmul.mubr.f32.gmra.mrb[0].mxu0 %v3718
        %v3831 = vpop.f32.mrb[0].mxu0
        %v3832 = vadd.f32 0.0, %v3831
        %v3833 = vpop.f32.mrb[0].mxu0
        %3834 = vmatprep.mubr.f32.mxu0 0.0
        %3835 = vmatmul.mubr.f32.gmra.mrb[0].mxu0 %v3721
        %v3836 = vpop.f32.mrb[0].mxu0
        %v3837 = vadd.f32 0.0, %v3836
        %v3838 = vpop.f32.mrb[0].mxu0
        %3839 = vdwg.mxu0
        %v3840 = vsel %vm2640, %v3802, -inf
        %3841 = vmax.xlane.f32.xlu0 %v3840
        %v3842 = vpop.xlane.xlu0 %3841
        %v3843 = vsel %vm2640, %v3807, -inf
        %3844 = vmax.xlane.f32.xlu0 %v3843
        %v3845 = vpop.xlane.xlu0 %3844
        %v3846 = vsel %vm2640, %v3812, -inf
        %3847 = vmax.xlane.f32.xlu0 %v3846
        %v3848 = vpop.xlane.xlu0 %3847
        %v3849 = vsel %vm2640, %v3817, -inf
        %3850 = vmax.xlane.f32.xlu0 %v3849
        %v3851 = vpop.xlane.xlu0 %3850
        %v3852 = vsel %vm2640, %v3822, -inf
        %3853 = vmax.xlane.f32.xlu0 %v3852
        %v3854 = vpop.xlane.xlu0 %3853
        %v3855 = vsel %vm2640, %v3827, -inf
        %3856 = vmax.xlane.f32.xlu0 %v3855
        %v3857 = vpop.xlane.xlu0 %3856
        %v3858 = vsel %vm2640, %v3832, -inf
        %3859 = vmax.xlane.f32.xlu0 %v3858
        %v3860 = vpop.xlane.xlu0 %3859
        %v3861 = vsel %vm2640, %v3837, -inf
        %3862 = vmax.xlane.f32.xlu0 %v3861
        %v3863 = vpop.xlane.xlu0 %3862
        %v3864 = vsub.f32 %v3802, %v3842
        %v3865 = vsub.f32 %v3807, %v3845
        %v3866 = vsub.f32 %v3812, %v3848
        %v3867 = vsub.f32 %v3817, %v3851
        %v3868 = vsub.f32 %v3822, %v3854
        %v3869 = vsub.f32 %v3827, %v3857
        %v3870 = vsub.f32 %v3832, %v3860
        %v3871 = vsub.f32 %v3837, %v3863
        %v3872 = vmul.f32 %v3864, 1.442695
        %v3873 = vpow.pop %v3872
        %v3874 = vmul.f32 %v3865, 1.442695
        %v3875 = vpow.pop %v3874
        %v3876 = vmul.f32 %v3866, 1.442695
        %v3877 = vpow.pop %v3876
        %v3878 = vmul.f32 %v3867, 1.442695
        %v3879 = vpow.pop %v3878
        %v3880 = vmul.f32 %v3868, 1.442695
        %v3881 = vpow.pop %v3880
        %v3882 = vmul.f32 %v3869, 1.442695
        %v3883 = vpow.pop %v3882
        %v3884 = vmul.f32 %v3870, 1.442695
        %v3885 = vpow.pop %v3884
        %v3886 = vmul.f32 %v3871, 1.442695
        %v3887 = vpow.pop %v3886
        %v3889 = vsel %vm2640, %v3873, 0
        %v3892 = vsel %vm2640, %v3875, 0
        %v3895 = vsel %vm2640, %v3877, 0
        %v3898 = vsel %vm2640, %v3879, 0
        %v3901 = vsel %vm2640, %v3881, 0
        %v3904 = vsel %vm2640, %v3883, 0
        %v3907 = vsel %vm2640, %v3885, 0
        %v3910 = vsel %vm2640, %v3887, 0
        %3912 = vmatprep.subr.mxu0 0.0
        %3913 = vmatpush1.msra.mxu0 %v740
        %3914 = vmatprep.subr.mxu0 0.0
        %3915 = vmatpush1.msra.mxu0 %v741
        %3916 = vmatprep.subr.mxu0 0.0
        %3917 = vmatpush1.msra.mxu0 %v742
        %3918 = vmatprep.subr.mxu0 0.0
        %3919 = vmatpush1.msra.mxu0 %v743
        %3920 = vmatprep.subr.mxu0 0.0
        %3921 = vmatpush1.msra.mxu0 0.0
        %3922 = vmatprep.subr.mxu0 0.0
        %3923 = vmatpush1.msra.mxu0 0.0
        %3924 = vmatprep.subr.mxu0 0.0
        %3925 = vmatpush1.msra.mxu0 0.0
        %3926 = vmatprep.subr.mxu0 0.0
        %3927 = vmatpush1.msra.mxu0 0.0
        %3928 = vmatprep.subr.mxu0 0.0
        %3929 = vmatpush1.msra.mxu0 0.0
        %3930 = vmatprep.subr.mxu0 0.0
        %3931 = vmatpush1.msra.mxu0 0.0
        %3932 = vmatprep.subr.mxu0 0.0
        %3933 = vmatpush1.msra.mxu0 0.0
        %3934 = vmatprep.subr.mxu0 0.0
        %3935 = vmatpush1.msra.mxu0 0.0
        %3936 = vmatprep.subr.mxu0 0.0
        %3937 = vmatpush1.msra.mxu0 0.0
        %3938 = vmatprep.subr.mxu0 0.0
        %3939 = vmatpush1.msra.mxu0 0.0
        %3940 = vmatprep.subr.mxu0 0.0
        %3941 = vmatpush1.msra.mxu0 0.0
        %3942 = vmatprep.subr.mxu0 0.0
        %3943 = vmatpush1.msra.mxu0 0.0
        %3944 = vmatprep.subr.mxu0 0.0
        %3945 = vmatpush1.msra.mxu0 0.0
        %3946 = vmatprep.subr.mxu0 0.0
        %3947 = vmatpush1.msra.mxu0 0.0
        %3948 = vmatprep.subr.mxu0 0.0
        %3949 = vmatpush1.msra.mxu0 0.0
        %3950 = vmatprep.subr.mxu0 0.0
        %3951 = vmatpush1.msra.mxu0 0.0
        %3952 = vmatprep.subr.mxu0 0.0
        %3953 = vmatpush1.msra.mxu0 0.0
        %3954 = vmatprep.subr.mxu0 0.0
        %3955 = vmatpush1.msra.mxu0 0.0
        %3956 = vmatprep.subr.mxu0 0.0
        %3957 = vmatpush1.msra.mxu0 0.0
        %3958 = vmatprep.subr.mxu0 0.0
        %3959 = vmatpush1.msra.mxu0 0.0
        %3960 = vmatprep.subr.mxu0 0.0
        %3961 = vmatpush1.msra.mxu0 0.0
        %3962 = vmatprep.subr.mxu0 0.0
        %3963 = vmatpush1.msra.mxu0 0.0
        %3964 = vmatprep.subr.mxu0 0.0
        %3965 = vmatpush1.msra.mxu0 0.0
        %3966 = vmatprep.subr.mxu0 0.0
        %3967 = vmatpush1.msra.mxu0 0.0
        %3968 = vmatprep.subr.mxu0 0.0
        %3969 = vmatpush1.msra.mxu0 0.0
        %3970 = vmatprep.subr.mxu0 0.0
        %3971 = vmatpush1.msra.mxu0 0.0
        %3972 = vmatprep.subr.mxu0 0.0
        %3973 = vmatpush1.msra.mxu0 0.0
        %3974 = vmatprep.subr.mxu0 0.0
        %3975 = vmatpush1.msra.mxu0 0.0
        %3976 = vmatprep.mubr.f32.mxu0 0.0
        %3977 = vmatmul.mubr.f32.gmra.mrb[0].mxu0 %v3889
        %v3978 = vpop.f32.mrb[0].mxu0
        %v3979 = vadd.f32 0.0, %v3978
        %v3980 = vpop.f32.mrb[0].mxu0
        %3981 = vmatprep.mubr.f32.mxu0 0.0
        %3982 = vmatmul.mubr.f32.gmra.mrb[0].mxu0 %v3892
        %v3983 = vpop.f32.mrb[0].mxu0
        %v3984 = vadd.f32 0.0, %v3983
        %v3985 = vpop.f32.mrb[0].mxu0
        %3986 = vmatprep.mubr.f32.mxu0 0.0
        %3987 = vmatmul.mubr.f32.gmra.mrb[0].mxu0 %v3895
        %v3988 = vpop.f32.mrb[0].mxu0
        %v3989 = vadd.f32 0.0, %v3988
        %v3990 = vpop.f32.mrb[0].mxu0
        %3991 = vmatprep.mubr.f32.mxu0 0.0
        %3992 = vmatmul.mubr.f32.gmra.mrb[0].mxu0 %v3898
        %v3993 = vpop.f32.mrb[0].mxu0
        %v3994 = vadd.f32 0.0, %v3993
        %v3995 = vpop.f32.mrb[0].mxu0
        %3996 = vmatprep.mubr.f32.mxu0 0.0
        %3997 = vmatmul.mubr.f32.gmra.mrb[0].mxu0 %v3901
        %v3998 = vpop.f32.mrb[0].mxu0
        %v3999 = vadd.f32 0.0, %v3998
        %v4000 = vpop.f32.mrb[0].mxu0
        %4001 = vmatprep.mubr.f32.mxu0 0.0
        %4002 = vmatmul.mubr.f32.gmra.mrb[0].mxu0 %v3904
        %v4003 = vpop.f32.mrb[0].mxu0
        %v4004 = vadd.f32 0.0, %v4003
        %v4005 = vpop.f32.mrb[0].mxu0
        %4006 = vmatprep.mubr.f32.mxu0 0.0
        %4007 = vmatmul.mubr.f32.gmra.mrb[0].mxu0 %v3907
        %v4008 = vpop.f32.mrb[0].mxu0
        %v4009 = vadd.f32 0.0, %v4008
        %v4010 = vpop.f32.mrb[0].mxu0
        %4011 = vmatprep.mubr.f32.mxu0 0.0
        %4012 = vmatmul.mubr.f32.gmra.mrb[0].mxu0 %v3910
        %v4013 = vpop.f32.mrb[0].mxu0
        %v4014 = vadd.f32 0.0, %v4013
        %v4015 = vpop.f32.mrb[0].mxu0
        %4016 = vdwg.mxu0
        %v4017 = vrcp.pop %v3979
        %v4018 = vrcp.pop %v3984
        %v4019 = vrcp.pop %v3989
        %v4020 = vrcp.pop %v3994
        %v4021 = vrcp.pop %v3999
        %v4022 = vrcp.pop %v4004
        %v4023 = vrcp.pop %v4009
        %v4024 = vrcp.pop %v4014
        %v4025 = vmul.f32 %v3873, %v4017
        %v4026 = vmul.f32 %v3875, %v4018
        %v4027 = vmul.f32 %v3877, %v4019
        %v4028 = vmul.f32 %v3879, %v4020
        %v4029 = vmul.f32 %v3881, %v4021
        %v4030 = vmul.f32 %v3883, %v4022
        %v4031 = vmul.f32 %v3885, %v4023
        %v4032 = vmul.f32 %v3887, %v4024
        %v4034 = vsel %vm2640, %v4025, 0
        %v4037 = vsel %vm2640, %v4026, 0
        %v4040 = vsel %vm2640, %v4027, 0
        %v4043 = vsel %vm2640, %v4028, 0
        %v4046 = vsel %vm2640, %v4029, 0
        %v4049 = vsel %vm2640, %v4030, 0
        %v4052 = vsel %vm2640, %v4031, 0
        %v4055 = vsel %vm2640, %v4032, 0
        %4057 = vmatprep.subr.mxu0 0.0
        %4058 = vmatpush1.msra.mxu0 %v3695
        %4059 = vmatprep.subr.mxu0 0.0
        %4060 = vmatpush1.msra.mxu0 %v3696
        %4061 = vmatprep.subr.mxu0 0.0
        %4062 = vmatpush1.msra.mxu0 %v3697
        %4063 = vmatprep.subr.mxu0 0.0
        %4064 = vmatpush1.msra.mxu0 %v3698
        %4065 = vmatprep.subr.mxu0 0.0
        %4066 = vmatpush1.msra.mxu0 0.0
        %4067 = vmatprep.subr.mxu0 0.0
        %4068 = vmatpush1.msra.mxu0 0.0
        %4069 = vmatprep.subr.mxu0 0.0
        %4070 = vmatpush1.msra.mxu0 0.0
        %4071 = vmatprep.subr.mxu0 0.0
        %4072 = vmatpush1.msra.mxu0 0.0
        %4073 = vmatprep.subr.mxu0 0.0
        %4074 = vmatpush1.msra.mxu0 0.0
        %4075 = vmatprep.subr.mxu0 0.0
        %4076 = vmatpush1.msra.mxu0 0.0
        %4077 = vmatprep.subr.mxu0 0.0
        %4078 = vmatpush1.msra.mxu0 0.0
        %4079 = vmatprep.subr.mxu0 0.0
        %4080 = vmatpush1.msra.mxu0 0.0
        %4081 = vmatprep.subr.mxu0 0.0
        %4082 = vmatpush1.msra.mxu0 0.0
        %4083 = vmatprep.subr.mxu0 0.0
        %4084 = vmatpush1.msra.mxu0 0.0
        %4085 = vmatprep.subr.mxu0 0.0
        %4086 = vmatpush1.msra.mxu0 0.0
        %4087 = vmatprep.subr.mxu0 0.0
        %4088 = vmatpush1.msra.mxu0 0.0
        %4089 = vmatprep.subr.mxu0 0.0
        %4090 = vmatpush1.msra.mxu0 0.0
        %4091 = vmatprep.subr.mxu0 0.0
        %4092 = vmatpush1.msra.mxu0 0.0
        %4093 = vmatprep.subr.mxu0 0.0
        %4094 = vmatpush1.msra.mxu0 0.0
        %4095 = vmatprep.subr.mxu0 0.0
        %4096 = vmatpush1.msra.mxu0 0.0
        %4097 = vmatprep.subr.mxu0 0.0
        %4098 = vmatpush1.msra.mxu0 0.0
        %4099 = vmatprep.subr.mxu0 0.0
        %4100 = vmatpush1.msra.mxu0 0.0
        %4101 = vmatprep.subr.mxu0 0.0
        %4102 = vmatpush1.msra.mxu0 0.0
        %4103 = vmatprep.subr.mxu0 0.0
        %4104 = vmatpush1.msra.mxu0 0.0
        %4105 = vmatprep.subr.mxu0 0.0
        %4106 = vmatpush1.msra.mxu0 0.0
        %4107 = vmatprep.subr.mxu0 0.0
        %4108 = vmatpush1.msra.mxu0 0.0
        %4109 = vmatprep.subr.mxu0 0.0
        %4110 = vmatpush1.msra.mxu0 0.0
        %4111 = vmatprep.subr.mxu0 0.0
        %4112 = vmatpush1.msra.mxu0 0.0
        %4113 = vmatprep.subr.mxu0 0.0
        %4114 = vmatpush1.msra.mxu0 0.0
        %4115 = vmatprep.subr.mxu0 0.0
        %4116 = vmatpush1.msra.mxu0 0.0
        %4117 = vmatprep.subr.mxu0 0.0
        %4118 = vmatpush1.msra.mxu0 0.0
        %4119 = vmatprep.subr.mxu0 0.0
        %4120 = vmatpush1.msra.mxu0 0.0
        %4121 = vmatprep.mubr.f32.mxu0 0.0
        %4122 = vmatmul.mubr.f32.gmra.mrb[0].mxu0 %v4034
        %v4123 = vpop.f32.mrb[0].mxu0
        %v4124 = vadd.f32 0.0, %v4123
        %v4125 = vpop.f32.mrb[0].mxu0
        %4126 = vmatprep.mubr.f32.mxu0 0.0
        %4127 = vmatmul.mubr.f32.gmra.mrb[0].mxu0 %v4037
        %v4128 = vpop.f32.mrb[0].mxu0
        %v4129 = vadd.f32 0.0, %v4128
        %v4130 = vpop.f32.mrb[0].mxu0
        %4131 = vmatprep.mubr.f32.mxu0 0.0
        %4132 = vmatmul.mubr.f32.gmra.mrb[0].mxu0 %v4040
        %v4133 = vpop.f32.mrb[0].mxu0
        %v4134 = vadd.f32 0.0, %v4133
        %v4135 = vpop.f32.mrb[0].mxu0
        %4136 = vmatprep.mubr.f32.mxu0 0.0
        %4137 = vmatmul.mubr.f32.gmra.mrb[0].mxu0 %v4043
        %v4138 = vpop.f32.mrb[0].mxu0
        %v4139 = vadd.f32 0.0, %v4138
        %v4140 = vpop.f32.mrb[0].mxu0
        %4141 = vmatprep.mubr.f32.mxu0 0.0
        %4142 = vmatmul.mubr.f32.gmra.mrb[0].mxu0 %v4046
        %v4143 = vpop.f32.mrb[0].mxu0
        %v4144 = vadd.f32 0.0, %v4143
        %v4145 = vpop.f32.mrb[0].mxu0
        %4146 = vmatprep.mubr.f32.mxu0 0.0
        %4147 = vmatmul.mubr.f32.gmra.mrb[0].mxu0 %v4049
        %v4148 = vpop.f32.mrb[0].mxu0
        %v4149 = vadd.f32 0.0, %v4148
        %v4150 = vpop.f32.mrb[0].mxu0
        %4151 = vmatprep.mubr.f32.mxu0 0.0
        %4152 = vmatmul.mubr.f32.gmra.mrb[0].mxu0 %v4052
        %v4153 = vpop.f32.mrb[0].mxu0
        %v4154 = vadd.f32 0.0, %v4153
        %v4155 = vpop.f32.mrb[0].mxu0
        %4156 = vmatprep.mubr.f32.mxu0 0.0
        %4157 = vmatmul.mubr.f32.gmra.mrb[0].mxu0 %v4055
        %v4158 = vpop.f32.mrb[0].mxu0
        %v4159 = vadd.f32 0.0, %v4158
        %v4160 = vpop.f32.mrb[0].mxu0
        %4161 = vdwg.mxu0
        %v4162 = vld [vmem:[%s16] sm:$0xff]
        %v4163 = vld [vmem:[%s16 + $0x8] sm:$0xff]
        %v4164 = vld [vmem:[%s16 + $0x10] sm:$0xff]
        %v4165 = vld [vmem:[%s16 + $0x18] sm:$0xff]
        %v4167 = vlaneseq
        %v4168 = vshrl.u32 %v4167, 7
        %v4169 = vsub.s32 0, %v4168
        %v4170 = vrot.slane %v731, %v4169
        %v4173 = vsel %vm2640, %v4124, 0
        %v4176 = vsel %vm2640, %v4129, 0
        %v4179 = vsel %vm2640, %v4134, 0
        %v4182 = vsel %vm2640, %v4139, 0
        %v4185 = vsel %vm2640, %v4144, 0
        %v4188 = vsel %vm2640, %v4149, 0
        %v4191 = vsel %vm2640, %v4154, 0
        %v4194 = vsel %vm2640, %v4159, 0
        %4196 = vmatprep.subr.mxu0 0.0
        %4197 = vmatpush1.msra.mxu0 %v4162
        %4198 = vmatprep.subr.mxu0 0.0
        %4199 = vmatpush1.msra.mxu0 %v4163
        %4200 = vmatprep.subr.mxu0 0.0
        %4201 = vmatpush1.msra.mxu0 %v4164
        %4202 = vmatprep.subr.mxu0 0.0
        %4203 = vmatpush1.msra.mxu0 %v4165
        %4204 = vmatprep.subr.mxu0 0.0
        %4205 = vmatpush1.msra.mxu0 0.0
        %4206 = vmatprep.subr.mxu0 0.0
        %4207 = vmatpush1.msra.mxu0 0.0
        %4208 = vmatprep.subr.mxu0 0.0
        %4209 = vmatpush1.msra.mxu0 0.0
        %4210 = vmatprep.subr.mxu0 0.0
        %4211 = vmatpush1.msra.mxu0 0.0
        %4212 = vmatprep.subr.mxu0 0.0
        %4213 = vmatpush1.msra.mxu0 0.0
        %4214 = vmatprep.subr.mxu0 0.0
        %4215 = vmatpush1.msra.mxu0 0.0
        %4216 = vmatprep.subr.mxu0 0.0
        %4217 = vmatpush1.msra.mxu0 0.0
        %4218 = vmatprep.subr.mxu0 0.0
        %4219 = vmatpush1.msra.mxu0 0.0
        %4220 = vmatprep.subr.mxu0 0.0
        %4221 = vmatpush1.msra.mxu0 0.0
        %4222 = vmatprep.subr.mxu0 0.0
        %4223 = vmatpush1.msra.mxu0 0.0
        %4224 = vmatprep.subr.mxu0 0.0
        %4225 = vmatpush1.msra.mxu0 0.0
        %4226 = vmatprep.subr.mxu0 0.0
        %4227 = vmatpush1.msra.mxu0 0.0
        %4228 = vmatprep.subr.mxu0 0.0
        %4229 = vmatpush1.msra.mxu0 0.0
        %4230 = vmatprep.subr.mxu0 0.0
        %4231 = vmatpush1.msra.mxu0 0.0
        %4232 = vmatprep.subr.mxu0 0.0
        %4233 = vmatpush1.msra.mxu0 0.0
        %4234 = vmatprep.subr.mxu0 0.0
        %4235 = vmatpush1.msra.mxu0 0.0
        %4236 = vmatprep.subr.mxu0 0.0
        %4237 = vmatpush1.msra.mxu0 0.0
        %4238 = vmatprep.subr.mxu0 0.0
        %4239 = vmatpush1.msra.mxu0 0.0
        %4240 = vmatprep.subr.mxu0 0.0
        %4241 = vmatpush1.msra.mxu0 0.0
        %4242 = vmatprep.subr.mxu0 0.0
        %4243 = vmatpush1.msra.mxu0 0.0
        %4244 = vmatprep.subr.mxu0 0.0
        %4245 = vmatpush1.msra.mxu0 0.0
        %4246 = vmatprep.subr.mxu0 0.0
        %4247 = vmatpush1.msra.mxu0 0.0
        %4248 = vmatprep.subr.mxu0 0.0
        %4249 = vmatpush1.msra.mxu0 0.0
        %4250 = vmatprep.subr.mxu0 0.0
        %4251 = vmatpush1.msra.mxu0 0.0
        %4252 = vmatprep.subr.mxu0 0.0
        %4253 = vmatpush1.msra.mxu0 0.0
        %4254 = vmatprep.subr.mxu0 0.0
        %4255 = vmatpush1.msra.mxu0 0.0
        %4256 = vmatprep.subr.mxu0 0.0
        %4257 = vmatpush1.msra.mxu0 0.0
        %4258 = vmatprep.subr.mxu0 0.0
        %4259 = vmatpush1.msra.mxu0 0.0
        %4260 = vmatprep.mubr.f32.mxu0 0.0
        %4261 = vmatmul.mubr.f32.gmra.mrb[0].mxu0 %v4173
        %v4262 = vpop.f32.mrb[0].mxu0
        %v4263 = vadd.f32 %v4170, %v4262
        %v4264 = vpop.f32.mrb[0].mxu0
        %4265 = vmatprep.mubr.f32.mxu0 0.0
        %4266 = vmatmul.mubr.f32.gmra.mrb[0].mxu0 %v4176
        %v4267 = vpop.f32.mrb[0].mxu0
        %v4268 = vadd.f32 %v4170, %v4267
        %v4269 = vpop.f32.mrb[0].mxu0
        %4270 = vmatprep.mubr.f32.mxu0 0.0
        %4271 = vmatmul.mubr.f32.gmra.mrb[0].mxu0 %v4179
        %v4272 = vpop.f32.mrb[0].mxu0
        %v4273 = vadd.f32 %v4170, %v4272
        %v4274 = vpop.f32.mrb[0].mxu0
        %4275 = vmatprep.mubr.f32.mxu0 0.0
        %4276 = vmatmul.mubr.f32.gmra.mrb[0].mxu0 %v4182
        %v4277 = vpop.f32.mrb[0].mxu0
        %v4278 = vadd.f32 %v4170, %v4277
        %v4279 = vpop.f32.mrb[0].mxu0
        %4280 = vmatprep.mubr.f32.mxu0 0.0
        %4281 = vmatmul.mubr.f32.gmra.mrb[0].mxu0 %v4185
        %v4282 = vpop.f32.mrb[0].mxu0
        %v4283 = vadd.f32 %v4170, %v4282
        %v4284 = vpop.f32.mrb[0].mxu0
        %4285 = vmatprep.mubr.f32.mxu0 0.0
        %4286 = vmatmul.mubr.f32.gmra.mrb[0].mxu0 %v4188
        %v4287 = vpop.f32.mrb[0].mxu0
        %v4288 = vadd.f32 %v4170, %v4287
        %v4289 = vpop.f32.mrb[0].mxu0
        %4290 = vmatprep.mubr.f32.mxu0 0.0
        %4291 = vmatmul.mubr.f32.gmra.mrb[0].mxu0 %v4191
        %v4292 = vpop.f32.mrb[0].mxu0
        %v4293 = vadd.f32 %v4170, %v4292
        %v4294 = vpop.f32.mrb[0].mxu0
        %4295 = vmatprep.mubr.f32.mxu0 0.0
        %4296 = vmatmul.mubr.f32.gmra.mrb[0].mxu0 %v4194
        %v4297 = vpop.f32.mrb[0].mxu0
        %v4298 = vadd.f32 %v4170, %v4297
        %v4299 = vpop.f32.mrb[0].mxu0
        %4300 = vdwg.mxu0
        %4301 = vst.msk [vmem:[%s714] sm:$0xff] %vm2640, %v4263
        %4302 = vst.msk [vmem:[%s714 + $0x8] sm:$0xff] %vm2640, %v4268
        %4303 = vst.msk [vmem:[%s714 + $0x10] sm:$0xff] %vm2640, %v4273
        %4304 = vst.msk [vmem:[%s714 + $0x18] sm:$0xff] %vm2640, %v4278
        %4305 = vst.msk [vmem:[%s714 + $0x20] sm:$0xff] %vm2640, %v4283
        %4306 = vst.msk [vmem:[%s714 + $0x28] sm:$0xff] %vm2640, %v4288
        %4307 = vst.msk [vmem:[%s714 + $0x30] sm:$0xff] %vm2640, %v4293
        %4308 = vst.msk [vmem:[%s714 + $0x38] sm:$0xff] %vm2640, %v4298
        %p4309 = scmp.lt.s32.totalorder %s37, 1
        %s4310 = scalar_select %p4309, %s37, 1
        %s4311 = smul.addr %s4310, 8
        %s4312 = smul.addr %s4311, 8
        %s4313 = scalar_lea.vmem %s21, %s4312
        %s4314 = sand.u32 %s522, 1
        %s4315 = scalar_lea.sflag [#allocation3], %s4314
        %s4316 = sand.u32 %s522, 1
        %s4317 = smul.addr %s4316, 8
        %s4318 = scalar_lea.vmem [#allocation2], %s4317
        // Predicated region
        $region105: #{paca_layer_forward.1} parent=103 // pred_check
          %p4319 = pneg %p506
        $region106: #{paca_layer_forward.1} parent=103 // pred_check_branch
          %4321 = sbr.rel (%p4319) target = $region108
        $region107: #{paca_layer_forward.1} parent=103 // pred_region
          _
        $region108: #{paca_layer_forward.1} parent=103 // pred_fallthru
          _
        // Predicated region
        $region109: #{paca_layer_forward.1} parent=103 // pred_check
          %p4322 = pneg %p532
        $region110: #{paca_layer_forward.1} parent=103 // pred_check_branch
          %4324 = sbr.rel (%p4322) target = $region112
        $region111: #{paca_layer_forward.1} parent=103 // pred_region
          %s4326 = ssub.s32 128, 128
          %4327 = vsyncadd %s4315, %s4326
          %s4328 = smul.addr %s37, 128
          %s4329 = scalar_lea.hbm %s22, %s4328
          %s4331 = sshll.u32 %s4318, 4
          %s4332 = int_to_ptr.vmem [resolvable:$true] %s4331
          %4334 = dma.vmem_to_hbm [thread:$0]  %s4332, 128, %s4329, %s4315
        $region112: #{paca_layer_forward.1} parent=103 // pred_fallthru
          _
      $region104: #{paca_layer_forward.1} parent=5 // pred_fallthru
        _
      %p4335 = scmp.le.s32.totalorder 2, %s32
      // Predicated region
      $region113: #{paca_layer_forward.1} parent=5 // pred_check
        %p4336 = pneg %p4335
      $region114: #{paca_layer_forward.1} parent=5 // pred_check_branch
        %4338 = sbr.rel (%p4336) target = $region116
      $region115: #{paca_layer_forward.1} parent=5 // pred_region
        %s4339 = ssub.s32 %s32, 2
        // Predicated region
        $region117: #{paca_layer_forward.1} parent=115 // pred_check
          %p4340 = pneg %p512
        $region118: #{paca_layer_forward.1} parent=115 // pred_check_branch
          %4342 = sbr.rel (%p4340) target = $region120
        $region119: #{paca_layer_forward.1} parent=115 // pred_region
          %p4343 = scmp.lt.s32.totalorder %s38, 1
          %s4344 = scalar_select %p4343, %s38, 1
          %s4345 = smul.addr %s4344, 8
          %s4346 = smul.addr %s4345, 8
          %s4347 = scalar_lea.vmem %s21, %s4346
        $region120: #{paca_layer_forward.1} parent=115 // pred_fallthru
          _
        // Predicated region
        $region121: #{paca_layer_forward.1} parent=115 // pred_check
          %p4348 = pneg %p538
        $region122: #{paca_layer_forward.1} parent=115 // pred_check_branch
          %4350 = sbr.rel (%p4348) target = $region124
        $region123: #{paca_layer_forward.1} parent=115 // pred_region
          %s4351 = sand.u32 %s523, 1
          %s4352 = scalar_lea.sflag [#allocation3], %s4351
          %s4353 = sand.u32 %s523, 1
          %s4354 = smul.addr %s4353, 8
          %s4355 = scalar_lea.vmem [#allocation2], %s4354
          %4356 = dma.done %s4352, 128
        $region124: #{paca_layer_forward.1} parent=115 // pred_fallthru
          _
      $region116: #{paca_layer_forward.1} parent=5 // pred_fallthru
        _
    $region6: #{paca_layer_forward.1} parent=1 // loop_footer
      %s36 = sadd.s32 1, %s32
    $region7: #{paca_layer_forward.1} parent=1 // loop_footer_branch
      %31 = sbr.rel target = $region3
    $region8: #{paca_layer_forward.1} parent=1 // loop_exit
      _
    %4357 = vsyncpa [#allocation3], 1
    %s4358 = scalar_lea.sflag [#allocation3], 1
    %4359 = vsyncpa %s4358, 1

</llo_original>
